<compile_context>
chip_gen: v7x
topology: tpu7x:2x2x1
jax: 0.10.0
libtpu: 0.0.40
codegen_flags: <defaults>
</compile_context>

<pallas_src>
import math

import jax
import jax.numpy as jnp
from jax.experimental import pallas as pl
from jax.experimental.pallas import tpu as pltpu

FEATURES = 256
N_LAYERS = 8
LRELU_SLOPE = 0.2
PIXELNORM_EPS = 1e-8
EQLR_SCALE = math.sqrt(2.0 / FEATURES)  # He constant, fan_in = 256
TB = 128  # batch tile: fills 128-row MXU on v5e, good occupancy on v6e/v7x


def mapping_kernel(x_ref, wt_ref, b_ref, o_ref):
    # x_ref : (TB, 256)      f32   current batch tile
    # wt_ref: (8, 256, 256)  bf16  per-layer weights, (in, out), EqualLR-scaled
    # b_ref : (8, 1, 256)    f32   per-layer biases
    # o_ref : (TB, 256)      f32
    x = x_ref[...].astype(jnp.float32)

    # PixelNorm over the feature axis (PyTorch dim=1 for a (N, C) input).
    denom = jax.lax.rsqrt(jnp.mean(x * x, axis=1, keepdims=True) + PIXELNORM_EPS)
    x = x * denom

    for l in range(N_LAYERS):  # static unroll over the 8 EqualLRLinear layers
        w = wt_ref[l]          # (256, 256) bf16, EqualLR scale already folded in
        b = b_ref[l]           # (1, 256)   f32
        # bf16 x bf16 -> f32 accumulation on the MXU.
        x = jnp.dot(x.astype(jnp.bfloat16), w,
                    preferred_element_type=jnp.float32) + b
        x = jnp.where(x >= 0, x, LRELU_SLOPE * x)  # LeakyReLU(0.2), f32 VPU

    o_ref[...] = x.astype(o_ref.dtype)


def prepare_mapping_params(weights, biases):
    """One-time preprocessing: (out,in) f32 -> (in,out) bf16 with EqualLR folded."""
    w_t = (jnp.transpose(weights, (0, 2, 1)) * EQLR_SCALE).astype(jnp.bfloat16)
    b = biases.reshape(N_LAYERS, 1, FEATURES).astype(jnp.float32)
    return w_t, b


def mapping_network(x, w_t, b):
    """x: (B, 256) f32; w_t: (8, 256, 256) bf16 (in,out); b: (8, 1, 256) f32."""
    B, F = x.shape
    assert F == FEATURES

    # Pad batch to a multiple of the tile; padded rows are zeros (harmless:
    # rsqrt(eps) * 0 = 0, then 0 @ W + b) and are sliced off below.
    B_pad = ((B + TB - 1) // TB) * TB
    if B_pad != B:
        x = jnp.pad(x, ((0, B_pad - B), (0, 0)))

    grid = (B_pad // TB,)
    out = pl.pallas_call(
        mapping_kernel,
        out_shape=jax.ShapeDtypeStruct((B_pad, FEATURES), jnp.float32),
        grid_spec=pltpu.PrefetchScalarGridSpec(
            num_scalar_prefetch=0,
            grid=grid,
            in_specs=[
                pl.BlockSpec((TB, FEATURES), lambda i: (i, 0)),
                pl.BlockSpec((N_LAYERS, FEATURES, FEATURES), lambda i: (0, 0, 0)),
                pl.BlockSpec((N_LAYERS, 1, FEATURES), lambda i: (0, 0, 0)),
            ],
            out_specs=pl.BlockSpec((TB, FEATURES), lambda i: (i, 0)),
        ),
        compiler_params=pltpu.CompilerParams(
            dimension_semantics=("parallel",),  # batch axis shards across TCs on v7x
        ),
    )(x, w_t, b)
    return out[:B]


def mapping_network_ref(x, weights, biases):
    """Pure-JAX reference with the same bf16-matmul / f32-accumulate numerics."""
    x = x * jax.lax.rsqrt(jnp.mean(x * x, axis=1, keepdims=True) + PIXELNORM_EPS)
    for l in range(N_LAYERS):
        w = (weights[l].T * EQLR_SCALE).astype(jnp.bfloat16)  # (in, out)
        x = jnp.dot(x.astype(jnp.bfloat16), w,
                    preferred_element_type=jnp.float32) + biases[l]
        x = jnp.where(x >= 0, x, LRELU_SLOPE * x)
    return x


if __name__ == "__main__":
    key = jax.random.PRNGKey(0)
    k_x, k_w = jax.random.split(key)

    B = 256  # 2 grid steps at TB=128 (keeps both v7x TensorCores busy)
    x = jax.random.normal(k_x, (B, FEATURES), dtype=jnp.float32)

    # Deterministic synthetic parameters (EqualLR init: weight ~ N(0,1), bias = 0).
    weights = jax.random.normal(k_w, (N_LAYERS, FEATURES, FEATURES), dtype=jnp.float32)
    biases = jnp.zeros((N_LAYERS, FEATURES), dtype=jnp.float32)

    # One-time parameter preprocessing (outside the per-call hot path).
    w_t, b = prepare_mapping_params(weights, biases)
    w_t, b = jax.block_until_ready((w_t, b))

    out = mapping_network(x, w_t, b)
    out = jax.block_until_ready(out)

    ref = mapping_network_ref(x, weights, biases)
    assert out.shape == (B, FEATURES)
    assert jnp.allclose(out, ref, atol=1e-3, rtol=1e-3), "kernel mismatch vs reference"

    print("KERNEL_OK")
</pallas_src>

<mosaic_0001>
module attributes {stable_mosaic.version = 11 : i64} {
  func.func @mapping_kernel(%arg0: i32, %arg1: memref<128x256xf32, #tpu.memory_space<vmem>>, %arg2: memref<8x256x256xbf16, #tpu.memory_space<vmem>>, %arg3: memref<8x1x256xf32, #tpu.memory_space<vmem>>, %arg4: memref<128x256xf32, #tpu.memory_space<vmem>>) attributes {dimension_semantics = [#tpu.dimension_semantics<parallel>], iteration_bounds = array<i64: 2>, scalar_prefetch = 0 : i64, scratch_operands = 0 : i64, tpu.core_type = #tpu.core_type<tc>, window_params = [{transform_indices = @transform_0, window_bounds = array<i64: 128, 256>}, {pipeline_mode = #tpu.pipeline_mode<synchronous>, transform_indices = @transform_1, window_bounds = array<i64: 8, 256, 256>}, {pipeline_mode = #tpu.pipeline_mode<synchronous>, transform_indices = @transform_2, window_bounds = array<i64: 8, 1, 256>}, {transform_indices = @transform_3, window_bounds = array<i64: 128, 256>}]} {
    %c0 = arith.constant 0 : index
    %c0_0 = arith.constant 0 : index
    %0 = vector.load %arg1[%c0, %c0_0] : memref<128x256xf32, #tpu.memory_space<vmem>>, vector<128x256xf32>
    %1 = arith.mulf %0, %0 : vector<128x256xf32>
    %cst = arith.constant dense<0.000000e+00> : vector<128xf32>
    %2 = vector.multi_reduction <add>, %1, %cst [1] : vector<128x256xf32> to vector<128xf32>
    %3 = vector.shape_cast %2 : vector<128xf32> to vector<128x1xf32>
    %cst_1 = arith.constant 2.560000e+02 : f32
    %4 = vector.broadcast %cst_1 : f32 to vector<128x1xf32>
    %5 = arith.divf %3, %4 : vector<128x1xf32>
    %cst_2 = arith.constant 9.99999993E-9 : f32
    %6 = vector.broadcast %cst_2 : f32 to vector<128x1xf32>
    %7 = arith.addf %5, %6 : vector<128x1xf32>
    %8 = math.rsqrt %7 : vector<128x1xf32>
    %9 = vector.broadcast %8 : vector<128x1xf32> to vector<128x256xf32>
    %10 = arith.mulf %0, %9 : vector<128x256xf32>
    %c0_3 = arith.constant 0 : index
    %c0_4 = arith.constant 0 : index
    %c0_5 = arith.constant 0 : index
    %11 = vector.load %arg2[%c0_3, %c0_4, %c0_5] : memref<8x256x256xbf16, #tpu.memory_space<vmem>>, vector<1x256x256xbf16>
    %12 = vector.shape_cast %11 : vector<1x256x256xbf16> to vector<256x256xbf16>
    %c0_6 = arith.constant 0 : index
    %c0_7 = arith.constant 0 : index
    %c0_8 = arith.constant 0 : index
    %13 = vector.load %arg3[%c0_6, %c0_7, %c0_8] : memref<8x1x256xf32, #tpu.memory_space<vmem>>, vector<1x1x256xf32>
    %14 = vector.shape_cast %13 : vector<1x1x256xf32> to vector<1x256xf32>
    %15 = arith.truncf %10 : vector<128x256xf32> to vector<128x256xbf16>
    %cst_9 = arith.constant dense<0.000000e+00> : vector<128x256xf32>
    %16 = tpu.matmul %15, %12, %cst_9 {dimension_numbers = #tpu.dot_dimension_numbers<[1], [0], [0], [1], [0, 0, 1, 1], [], []>} : vector<128x256xbf16>, vector<256x256xbf16>, vector<128x256xf32> -> vector<128x256xf32>
    %17 = vector.broadcast %14 : vector<1x256xf32> to vector<128x256xf32>
    %18 = arith.addf %16, %17 : vector<128x256xf32>
    %cst_10 = arith.constant 0.000000e+00 : f32
    %19 = vector.broadcast %cst_10 : f32 to vector<128x256xf32>
    %20 = arith.cmpf oge, %18, %19 : vector<128x256xf32>
    %cst_11 = arith.constant 2.000000e-01 : f32
    %21 = vector.broadcast %cst_11 : f32 to vector<128x256xf32>
    %22 = arith.mulf %21, %18 : vector<128x256xf32>
    %23 = arith.select %20, %18, %22 : vector<128x256xi1>, vector<128x256xf32>
    %c1 = arith.constant 1 : index
    %c0_12 = arith.constant 0 : index
    %c0_13 = arith.constant 0 : index
    %24 = vector.load %arg2[%c1, %c0_12, %c0_13] : memref<8x256x256xbf16, #tpu.memory_space<vmem>>, vector<1x256x256xbf16>
    %25 = vector.shape_cast %24 : vector<1x256x256xbf16> to vector<256x256xbf16>
    %c1_14 = arith.constant 1 : index
    %c0_15 = arith.constant 0 : index
    %c0_16 = arith.constant 0 : index
    %26 = vector.load %arg3[%c1_14, %c0_15, %c0_16] : memref<8x1x256xf32, #tpu.memory_space<vmem>>, vector<1x1x256xf32>
    %27 = vector.shape_cast %26 : vector<1x1x256xf32> to vector<1x256xf32>
    %28 = arith.truncf %23 : vector<128x256xf32> to vector<128x256xbf16>
    %cst_17 = arith.constant dense<0.000000e+00> : vector<128x256xf32>
    %29 = tpu.matmul %28, %25, %cst_17 {dimension_numbers = #tpu.dot_dimension_numbers<[1], [0], [0], [1], [0, 0, 1, 1], [], []>} : vector<128x256xbf16>, vector<256x256xbf16>, vector<128x256xf32> -> vector<128x256xf32>
    %30 = vector.broadcast %27 : vector<1x256xf32> to vector<128x256xf32>
    %31 = arith.addf %29, %30 : vector<128x256xf32>
    %cst_18 = arith.constant 0.000000e+00 : f32
    %32 = vector.broadcast %cst_18 : f32 to vector<128x256xf32>
    %33 = arith.cmpf oge, %31, %32 : vector<128x256xf32>
    %cst_19 = arith.constant 2.000000e-01 : f32
    %34 = vector.broadcast %cst_19 : f32 to vector<128x256xf32>
    %35 = arith.mulf %34, %31 : vector<128x256xf32>
    %36 = arith.select %33, %31, %35 : vector<128x256xi1>, vector<128x256xf32>
    %c2 = arith.constant 2 : index
    %c0_20 = arith.constant 0 : index
    %c0_21 = arith.constant 0 : index
    %37 = vector.load %arg2[%c2, %c0_20, %c0_21] : memref<8x256x256xbf16, #tpu.memory_space<vmem>>, vector<1x256x256xbf16>
    %38 = vector.shape_cast %37 : vector<1x256x256xbf16> to vector<256x256xbf16>
    %c2_22 = arith.constant 2 : index
    %c0_23 = arith.constant 0 : index
    %c0_24 = arith.constant 0 : index
    %39 = vector.load %arg3[%c2_22, %c0_23, %c0_24] : memref<8x1x256xf32, #tpu.memory_space<vmem>>, vector<1x1x256xf32>
    %40 = vector.shape_cast %39 : vector<1x1x256xf32> to vector<1x256xf32>
    %41 = arith.truncf %36 : vector<128x256xf32> to vector<128x256xbf16>
    %cst_25 = arith.constant dense<0.000000e+00> : vector<128x256xf32>
    %42 = tpu.matmul %41, %38, %cst_25 {dimension_numbers = #tpu.dot_dimension_numbers<[1], [0], [0], [1], [0, 0, 1, 1], [], []>} : vector<128x256xbf16>, vector<256x256xbf16>, vector<128x256xf32> -> vector<128x256xf32>
    %43 = vector.broadcast %40 : vector<1x256xf32> to vector<128x256xf32>
    %44 = arith.addf %42, %43 : vector<128x256xf32>
    %cst_26 = arith.constant 0.000000e+00 : f32
    %45 = vector.broadcast %cst_26 : f32 to vector<128x256xf32>
    %46 = arith.cmpf oge, %44, %45 : vector<128x256xf32>
    %cst_27 = arith.constant 2.000000e-01 : f32
    %47 = vector.broadcast %cst_27 : f32 to vector<128x256xf32>
    %48 = arith.mulf %47, %44 : vector<128x256xf32>
    %49 = arith.select %46, %44, %48 : vector<128x256xi1>, vector<128x256xf32>
    %c3 = arith.constant 3 : index
    %c0_28 = arith.constant 0 : index
    %c0_29 = arith.constant 0 : index
    %50 = vector.load %arg2[%c3, %c0_28, %c0_29] : memref<8x256x256xbf16, #tpu.memory_space<vmem>>, vector<1x256x256xbf16>
    %51 = vector.shape_cast %50 : vector<1x256x256xbf16> to vector<256x256xbf16>
    %c3_30 = arith.constant 3 : index
    %c0_31 = arith.constant 0 : index
    %c0_32 = arith.constant 0 : index
    %52 = vector.load %arg3[%c3_30, %c0_31, %c0_32] : memref<8x1x256xf32, #tpu.memory_space<vmem>>, vector<1x1x256xf32>
    %53 = vector.shape_cast %52 : vector<1x1x256xf32> to vector<1x256xf32>
    %54 = arith.truncf %49 : vector<128x256xf32> to vector<128x256xbf16>
    %cst_33 = arith.constant dense<0.000000e+00> : vector<128x256xf32>
    %55 = tpu.matmul %54, %51, %cst_33 {dimension_numbers = #tpu.dot_dimension_numbers<[1], [0], [0], [1], [0, 0, 1, 1], [], []>} : vector<128x256xbf16>, vector<256x256xbf16>, vector<128x256xf32> -> vector<128x256xf32>
    %56 = vector.broadcast %53 : vector<1x256xf32> to vector<128x256xf32>
    %57 = arith.addf %55, %56 : vector<128x256xf32>
    %cst_34 = arith.constant 0.000000e+00 : f32
    %58 = vector.broadcast %cst_34 : f32 to vector<128x256xf32>
    %59 = arith.cmpf oge, %57, %58 : vector<128x256xf32>
    %cst_35 = arith.constant 2.000000e-01 : f32
    %60 = vector.broadcast %cst_35 : f32 to vector<128x256xf32>
    %61 = arith.mulf %60, %57 : vector<128x256xf32>
    %62 = arith.select %59, %57, %61 : vector<128x256xi1>, vector<128x256xf32>
    %c4 = arith.constant 4 : index
    %c0_36 = arith.constant 0 : index
    %c0_37 = arith.constant 0 : index
    %63 = vector.load %arg2[%c4, %c0_36, %c0_37] : memref<8x256x256xbf16, #tpu.memory_space<vmem>>, vector<1x256x256xbf16>
    %64 = vector.shape_cast %63 : vector<1x256x256xbf16> to vector<256x256xbf16>
    %c4_38 = arith.constant 4 : index
    %c0_39 = arith.constant 0 : index
    %c0_40 = arith.constant 0 : index
    %65 = vector.load %arg3[%c4_38, %c0_39, %c0_40] : memref<8x1x256xf32, #tpu.memory_space<vmem>>, vector<1x1x256xf32>
    %66 = vector.shape_cast %65 : vector<1x1x256xf32> to vector<1x256xf32>
    %67 = arith.truncf %62 : vector<128x256xf32> to vector<128x256xbf16>
    %cst_41 = arith.constant dense<0.000000e+00> : vector<128x256xf32>
    %68 = tpu.matmul %67, %64, %cst_41 {dimension_numbers = #tpu.dot_dimension_numbers<[1], [0], [0], [1], [0, 0, 1, 1], [], []>} : vector<128x256xbf16>, vector<256x256xbf16>, vector<128x256xf32> -> vector<128x256xf32>
    %69 = vector.broadcast %66 : vector<1x256xf32> to vector<128x256xf32>
    %70 = arith.addf %68, %69 : vector<128x256xf32>
    %cst_42 = arith.constant 0.000000e+00 : f32
    %71 = vector.broadcast %cst_42 : f32 to vector<128x256xf32>
    %72 = arith.cmpf oge, %70, %71 : vector<128x256xf32>
    %cst_43 = arith.constant 2.000000e-01 : f32
    %73 = vector.broadcast %cst_43 : f32 to vector<128x256xf32>
    %74 = arith.mulf %73, %70 : vector<128x256xf32>
    %75 = arith.select %72, %70, %74 : vector<128x256xi1>, vector<128x256xf32>
    %c5 = arith.constant 5 : index
    %c0_44 = arith.constant 0 : index
    %c0_45 = arith.constant 0 : index
    %76 = vector.load %arg2[%c5, %c0_44, %c0_45] : memref<8x256x256xbf16, #tpu.memory_space<vmem>>, vector<1x256x256xbf16>
    %77 = vector.shape_cast %76 : vector<1x256x256xbf16> to vector<256x256xbf16>
    %c5_46 = arith.constant 5 : index
    %c0_47 = arith.constant 0 : index
    %c0_48 = arith.constant 0 : index
    %78 = vector.load %arg3[%c5_46, %c0_47, %c0_48] : memref<8x1x256xf32, #tpu.memory_space<vmem>>, vector<1x1x256xf32>
    %79 = vector.shape_cast %78 : vector<1x1x256xf32> to vector<1x256xf32>
    %80 = arith.truncf %75 : vector<128x256xf32> to vector<128x256xbf16>
    %cst_49 = arith.constant dense<0.000000e+00> : vector<128x256xf32>
    %81 = tpu.matmul %80, %77, %cst_49 {dimension_numbers = #tpu.dot_dimension_numbers<[1], [0], [0], [1], [0, 0, 1, 1], [], []>} : vector<128x256xbf16>, vector<256x256xbf16>, vector<128x256xf32> -> vector<128x256xf32>
    %82 = vector.broadcast %79 : vector<1x256xf32> to vector<128x256xf32>
    %83 = arith.addf %81, %82 : vector<128x256xf32>
    %cst_50 = arith.constant 0.000000e+00 : f32
    %84 = vector.broadcast %cst_50 : f32 to vector<128x256xf32>
    %85 = arith.cmpf oge, %83, %84 : vector<128x256xf32>
    %cst_51 = arith.constant 2.000000e-01 : f32
    %86 = vector.broadcast %cst_51 : f32 to vector<128x256xf32>
    %87 = arith.mulf %86, %83 : vector<128x256xf32>
    %88 = arith.select %85, %83, %87 : vector<128x256xi1>, vector<128x256xf32>
    %c6 = arith.constant 6 : index
    %c0_52 = arith.constant 0 : index
    %c0_53 = arith.constant 0 : index
    %89 = vector.load %arg2[%c6, %c0_52, %c0_53] : memref<8x256x256xbf16, #tpu.memory_space<vmem>>, vector<1x256x256xbf16>
    %90 = vector.shape_cast %89 : vector<1x256x256xbf16> to vector<256x256xbf16>
    %c6_54 = arith.constant 6 : index
    %c0_55 = arith.constant 0 : index
    %c0_56 = arith.constant 0 : index
    %91 = vector.load %arg3[%c6_54, %c0_55, %c0_56] : memref<8x1x256xf32, #tpu.memory_space<vmem>>, vector<1x1x256xf32>
    %92 = vector.shape_cast %91 : vector<1x1x256xf32> to vector<1x256xf32>
    %93 = arith.truncf %88 : vector<128x256xf32> to vector<128x256xbf16>
    %cst_57 = arith.constant dense<0.000000e+00> : vector<128x256xf32>
    %94 = tpu.matmul %93, %90, %cst_57 {dimension_numbers = #tpu.dot_dimension_numbers<[1], [0], [0], [1], [0, 0, 1, 1], [], []>} : vector<128x256xbf16>, vector<256x256xbf16>, vector<128x256xf32> -> vector<128x256xf32>
    %95 = vector.broadcast %92 : vector<1x256xf32> to vector<128x256xf32>
    %96 = arith.addf %94, %95 : vector<128x256xf32>
    %cst_58 = arith.constant 0.000000e+00 : f32
    %97 = vector.broadcast %cst_58 : f32 to vector<128x256xf32>
    %98 = arith.cmpf oge, %96, %97 : vector<128x256xf32>
    %cst_59 = arith.constant 2.000000e-01 : f32
    %99 = vector.broadcast %cst_59 : f32 to vector<128x256xf32>
    %100 = arith.mulf %99, %96 : vector<128x256xf32>
    %101 = arith.select %98, %96, %100 : vector<128x256xi1>, vector<128x256xf32>
    %c7 = arith.constant 7 : index
    %c0_60 = arith.constant 0 : index
    %c0_61 = arith.constant 0 : index
    %102 = vector.load %arg2[%c7, %c0_60, %c0_61] : memref<8x256x256xbf16, #tpu.memory_space<vmem>>, vector<1x256x256xbf16>
    %103 = vector.shape_cast %102 : vector<1x256x256xbf16> to vector<256x256xbf16>
    %c7_62 = arith.constant 7 : index
    %c0_63 = arith.constant 0 : index
    %c0_64 = arith.constant 0 : index
    %104 = vector.load %arg3[%c7_62, %c0_63, %c0_64] : memref<8x1x256xf32, #tpu.memory_space<vmem>>, vector<1x1x256xf32>
    %105 = vector.shape_cast %104 : vector<1x1x256xf32> to vector<1x256xf32>
    %106 = arith.truncf %101 : vector<128x256xf32> to vector<128x256xbf16>
    %cst_65 = arith.constant dense<0.000000e+00> : vector<128x256xf32>
    %107 = tpu.matmul %106, %103, %cst_65 {dimension_numbers = #tpu.dot_dimension_numbers<[1], [0], [0], [1], [0, 0, 1, 1], [], []>} : vector<128x256xbf16>, vector<256x256xbf16>, vector<128x256xf32> -> vector<128x256xf32>
    %108 = vector.broadcast %105 : vector<1x256xf32> to vector<128x256xf32>
    %109 = arith.addf %107, %108 : vector<128x256xf32>
    %cst_66 = arith.constant 0.000000e+00 : f32
    %110 = vector.broadcast %cst_66 : f32 to vector<128x256xf32>
    %111 = arith.cmpf oge, %109, %110 : vector<128x256xf32>
    %cst_67 = arith.constant 2.000000e-01 : f32
    %112 = vector.broadcast %cst_67 : f32 to vector<128x256xf32>
    %113 = arith.mulf %112, %109 : vector<128x256xf32>
    %114 = arith.select %111, %109, %113 : vector<128x256xi1>, vector<128x256xf32>
    %c0_68 = arith.constant 0 : index
    %c0_69 = arith.constant 0 : index
    %115 = vector.load %arg4[%c0_68, %c0_69] : memref<128x256xf32, #tpu.memory_space<vmem>>, vector<128x256xf32>
    tpu.vector_store %arg4[%c0_68, %c0_69], %114 {strides = array<i32>} : memref<128x256xf32, #tpu.memory_space<vmem>>, vector<128x256xf32>,
    return
  }
  func.func @transform_0(%arg0: i32) -> (i32, i32) {
    %c0_i32 = arith.constant 0 : i32
    %c0_i32_0 = arith.constant 0 : i32
    return %arg0, %c0_i32 : i32, i32
  }
  func.func @transform_1(%arg0: i32) -> (i32, i32, i32) {
    %c0_i32 = arith.constant 0 : i32
    %c0_i32_0 = arith.constant 0 : i32
    %c0_i32_1 = arith.constant 0 : i32
    %c0_i32_2 = arith.constant 0 : i32
    return %c0_i32, %c0_i32_0, %c0_i32_1 : i32, i32, i32
  }
  func.func @transform_2(%arg0: i32) -> (i32, i32, i32) {
    %c0_i32 = arith.constant 0 : i32
    %c0_i32_0 = arith.constant 0 : i32
    %c0_i32_1 = arith.constant 0 : i32
    %c0_i32_2 = arith.constant 0 : i32
    return %c0_i32, %c0_i32_0, %c0_i32_1 : i32, i32, i32
  }
  func.func @transform_3(%arg0: i32) -> (i32, i32) {
    %c0_i32 = arith.constant 0 : i32
    %c0_i32_0 = arith.constant 0 : i32
    return %arg0, %c0_i32 : i32, i32
  }
}

</mosaic_0001>

<llo_original>
// kernel: tpu_custom_call.1
$region0: #{tpu_custom_call.1}
  #allocation0 [shape = 'u32[]', space=smem, size = 0x4, offset = 0x4, fixed_abs, tag = 'smem constant byte address 0x4 - core index']
  #allocation1 [shape = 'u32[144,128]{1,0:T(1,128)}', space=vmem, size = 0x12000, scoped, tag = 'internal scratch']
  %s0 = inlined_call_operand.hbm [shape: f32[256,256], index: 0, kind: input, shape index: {}]
  %s1 = inlined_call_operand.hbm [shape: bf16[8,256,256], index: 1, kind: input, shape index: {}]
  %s2 = inlined_call_operand.hbm [shape: f32[8,1,256], index: 2, kind: input, shape index: {}]
  %s3 = inlined_call_operand.hbm [shape: f32[256,256], index: 3, kind: output, shape index: {}]
  %s4 = sld [smem:[#allocation0]]
  $region57: #{tpu_custom_call.1} parent=0
    _
  %s6 = ssub.s32 1, %s4
  %s7 = scalar_select 0, %s6, %s4
  $region1: #{tpu_custom_call.1} parent=0
    #allocation2 [shape = 'u8[262144]{0}', space=vmem, size = 0x40000, scoped, tag = 'input window, operand 0']
    #allocation3 [shape = 's32[2]{0}', space=sflag, size = 0x8, scoped, tag = 'scoped memory for tpu_custom_call.1']
    #allocation4 [shape = 's32[2]{0}', space=sflag, size = 0x8, scoped, tag = 'scoped memory for tpu_custom_call.1']
    #allocation5 [shape = 'u8[1048576]{0}', space=vmem, size = 0x100000, scoped, tag = 'input window, operand 1, single buffered']
    #allocation6 [shape = 's32[1]{0}', space=sflag, size = 0x4, scoped, tag = 'scoped memory for tpu_custom_call.1']
    #allocation7 [shape = 'u8[8192]{0}', space=vmem, size = 0x2000, scoped, tag = 'input window, operand 2, single buffered']
    #allocation8 [shape = 'u8[262144]{0}', space=vmem, size = 0x40000, scoped, tag = 'output window, operand 0']
    %8 = vsyncpa [#allocation3], 0
    %s9 = scalar_lea.sflag [#allocation3], 1
    %10 = vsyncpa %s9, 0
    %11 = vsyncpa [#allocation6], 0
    %12 = vsyncpa [#allocation4], 0
    %s13 = scalar_lea.sflag [#allocation4], 1
    %14 = vsyncpa %s13, 0
    loop: start=0, step=1, limit=4
    $region2: #{tpu_custom_call.1} parent=1 // loop_pre_header
      _
    $region3: #{tpu_custom_call.1} parent=1 // loop_header
      %s16 = sphi 0, %s20
      %p17 = scmp.ge.s32.totalorder %s16, 4
      %s26 = sphi 0, %s28
      %s29 = sphi 0, %s26
      %s30 = sphi 0, %s29
      %s46 = sphi 0, %s30
      %s50 = sphi 0, %s50
      %s52 = sphi 0, %s50
      %s53 = sphi 0, %s52
      %s67 = sphi 0, %s53
      %s71 = sphi 0, %s71
      %s73 = sphi 0, %s71
      %s74 = sphi 0, %s73
      %s88 = sphi 0, %s74
      %s94 = sphi 0, %s96
      %s97 = sphi 0, %s94
      %s98 = sphi 0, %s97
      %s114 = sphi 0, %s98
    $region4: #{tpu_custom_call.1} parent=1 // loop_header_branch
      %19 = sbr.rel (%p17) target = $region8
    $region5: #{tpu_custom_call.1} parent=1 // loop_body
      %s21 = ssub.s32 %s16, 1
      %s22 = ssub.s32 %s16, 2
      %s23 = sadd.s32 %s16, 1
      %s24 = ssub.s32 %s16, %s23
      %p25 = scmp.eq.s32.totalorder %s24, 0
      %s27 = sadd.s32 %s26, 1
      %s28 = scalar_select %p25, %s26, %s27
      %p31 = pneg %p25
      %p32 = scmp.eq.s32.totalorder %s16, 1
      %p33 = por %p31, %p32
      %p34 = scmp.ne.s32.totalorder %s26, %s29
      %p35 = scmp.eq.s32.totalorder %s16, 0
      %p36 = por %p34, %p35
      %p37 = scmp.ne.s32.totalorder %s26, %s29
      %p38 = scmp.eq.s32.totalorder %s21, 1
      %p39 = por %p37, %p38
      %p40 = scmp.ne.s32.totalorder %s29, %s30
      %p41 = scmp.eq.s32.totalorder %s21, 0
      %p42 = por %p40, %p41
      %p43 = scmp.ne.s32.totalorder %s29, %s30
      %p44 = scmp.eq.s32.totalorder %s22, 1
      %p45 = por %p43, %p44
      %p47 = scmp.ne.s32.totalorder %s30, %s46
      %p48 = scmp.eq.s32.totalorder %s22, 0
      %p49 = por %p47, %p48
      %s51 = sadd.s32 %s50, 1
      %p54 = scmp.eq.s32.totalorder %s16, 1
      %p55 = scmp.ne.s32.totalorder %s50, %s52
      %p56 = scmp.eq.s32.totalorder %s16, 0
      %p57 = por %p55, %p56
      %p58 = scmp.ne.s32.totalorder %s50, %s52
      %p59 = scmp.eq.s32.totalorder %s21, 1
      %p60 = por %p58, %p59
      %p61 = scmp.ne.s32.totalorder %s52, %s53
      %p62 = scmp.eq.s32.totalorder %s21, 0
      %p63 = por %p61, %p62
      %p64 = scmp.ne.s32.totalorder %s52, %s53
      %p65 = scmp.eq.s32.totalorder %s22, 1
      %p66 = por %p64, %p65
      %p68 = scmp.ne.s32.totalorder %s53, %s67
      %p69 = scmp.eq.s32.totalorder %s22, 0
      %p70 = por %p68, %p69
      %s72 = sadd.s32 %s71, 1
      %p75 = scmp.eq.s32.totalorder %s16, 1
      %p76 = scmp.ne.s32.totalorder %s71, %s73
      %p77 = scmp.eq.s32.totalorder %s16, 0
      %p78 = por %p76, %p77
      %p79 = scmp.ne.s32.totalorder %s71, %s73
      %p80 = scmp.eq.s32.totalorder %s21, 1
      %p81 = por %p79, %p80
      %p82 = scmp.ne.s32.totalorder %s73, %s74
      %p83 = scmp.eq.s32.totalorder %s21, 0
      %p84 = por %p82, %p83
      %p85 = scmp.ne.s32.totalorder %s73, %s74
      %p86 = scmp.eq.s32.totalorder %s22, 1
      %p87 = por %p85, %p86
      %p89 = scmp.ne.s32.totalorder %s74, %s88
      %p90 = scmp.eq.s32.totalorder %s22, 0
      %p91 = por %p89, %p90
      %s92 = ssub.s32 %s16, %s23
      %p93 = scmp.eq.s32.totalorder %s92, 0
      %s95 = sadd.s32 %s94, 1
      %s96 = scalar_select %p93, %s94, %s95
      %p99 = pneg %p93
      %p100 = scmp.eq.s32.totalorder %s16, 1
      %p101 = por %p99, %p100
      %p102 = scmp.ne.s32.totalorder %s94, %s97
      %p103 = scmp.eq.s32.totalorder %s16, 0
      %p104 = por %p102, %p103
      %p105 = scmp.ne.s32.totalorder %s94, %s97
      %p106 = scmp.eq.s32.totalorder %s21, 1
      %p107 = por %p105, %p106
      %p108 = scmp.ne.s32.totalorder %s97, %s98
      %p109 = scmp.eq.s32.totalorder %s21, 0
      %p110 = por %p108, %p109
      %p111 = scmp.ne.s32.totalorder %s97, %s98
      %p112 = scmp.eq.s32.totalorder %s22, 1
      %p113 = por %p111, %p112
      %p115 = scmp.ne.s32.totalorder %s98, %s114
      %p116 = scmp.eq.s32.totalorder %s22, 0
      %p117 = por %p115, %p116
      %p118 = scmp.le.s32.totalorder 1, %s16
      %p119 = scmp.lt.s32.totalorder %s16, 3
      %p120 = pnand %p118, %p119
      %p121 = pneg %p120
      // Predicated region
      $region9: #{tpu_custom_call.1} parent=5 // pred_check
        _
      $region10: #{tpu_custom_call.1} parent=5 // pred_check_branch
        %123 = sbr.rel (%p120) target = $region12
      $region11: #{tpu_custom_call.1} parent=5 // pred_region
        %s124 = ssub.s32 %s16, 1
        // Predicated region
        $region13: #{tpu_custom_call.1} parent=11 // pred_check
          %p125 = pneg %p63
        $region14: #{tpu_custom_call.1} parent=11 // pred_check_branch
          %127 = sbr.rel (%p125) target = $region16
        $region15: #{tpu_custom_call.1} parent=11 // pred_region
          %s129 = ssub.s32 32768, 32768
          %130 = vsyncadd [#allocation6], %s129
          %s131 = sshll.u32 [#allocation5], 4
          %s132 = int_to_ptr.vmem [resolvable:$true] %s131
          %137 = dma.hbm_to_vmem [thread:$0]  %s1, 32768, %s132, [#allocation6], 128, 128, 8
        $region16: #{tpu_custom_call.1} parent=11 // pred_fallthru
          _
        // Predicated region
        $region17: #{tpu_custom_call.1} parent=11 // pred_check
          %p138 = pneg %p84
        $region18: #{tpu_custom_call.1} parent=11 // pred_check_branch
          %140 = sbr.rel (%p138) target = $region20
        $region19: #{tpu_custom_call.1} parent=11 // pred_region
          %s142 = ssub.s32 256, 256
          %143 = vsyncadd [#allocation6], %s142
          %s144 = sshll.u32 [#allocation7], 4
          %s145 = int_to_ptr.vmem [resolvable:$true] %s144
          %150 = dma.hbm_to_vmem [thread:$0]  %s2, 256, %s145, [#allocation6], 32, 32, 2
        $region20: #{tpu_custom_call.1} parent=11 // pred_fallthru
          _
      $region12: #{tpu_custom_call.1} parent=5 // pred_fallthru
        _
      %p151 = scmp.lt.s32.totalorder %s16, 2
      // Predicated region
      $region21: #{tpu_custom_call.1} parent=5 // pred_check
        %p152 = pneg %p151
      $region22: #{tpu_custom_call.1} parent=5 // pred_check_branch
        %154 = sbr.rel (%p152) target = $region24
      $region23: #{tpu_custom_call.1} parent=5 // pred_region
        // Predicated region
        $region25: #{tpu_custom_call.1} parent=23 // pred_check
          %p155 = pneg %p36
        $region26: #{tpu_custom_call.1} parent=23 // pred_check_branch
          %157 = sbr.rel (%p155) target = $region28
        $region27: #{tpu_custom_call.1} parent=23 // pred_region
          %s158 = sand.u32 %s26, 1
          %s159 = scalar_lea.sflag [#allocation3], %s158
          %s160 = sand.u32 %s26, 1
          %s161 = smul.addr %s160, 256
          %s162 = scalar_lea.vmem [#allocation2], %s161
          %s163 = smul.u32 16, %s16
          %s165 = ssub.s32 4096, 4096
          %166 = vsyncadd %s159, %s165
          %s167 = smul.addr %s163, 2
          %s168 = smul.addr %s167, 128
          %s169 = scalar_lea.hbm %s0, %s168
          %s170 = sshll.u32 %s162, 4
          %s171 = int_to_ptr.vmem [resolvable:$true] %s170
          %176 = dma.hbm_to_vmem [thread:$0]  %s169, 4096, %s171, %s159, 256, 256, 16
        $region28: #{tpu_custom_call.1} parent=23 // pred_fallthru
          _
      $region24: #{tpu_custom_call.1} parent=5 // pred_fallthru
        _
      %p177 = scmp.le.s32.totalorder 1, %s16
      %p178 = scmp.lt.s32.totalorder %s16, 3
      %p179 = pnand %p177, %p178
      %p180 = pneg %p179
      // Predicated region
      $region29: #{tpu_custom_call.1} parent=5 // pred_check
        _
      $region30: #{tpu_custom_call.1} parent=5 // pred_check_branch
        %182 = sbr.rel (%p179) target = $region32
      $region31: #{tpu_custom_call.1} parent=5 // pred_region
        %s183 = ssub.s32 %s16, 1
        %s184 = sand.u32 %s29, 1
        %s185 = scalar_lea.sflag [#allocation3], %s184
        %s186 = sand.u32 %s29, 1
        %s187 = smul.addr %s186, 256
        %s188 = scalar_lea.vmem [#allocation2], %s187
        // Predicated region
        $region33: #{tpu_custom_call.1} parent=31 // pred_check
          %p189 = pneg %p42
        $region34: #{tpu_custom_call.1} parent=31 // pred_check_branch
          %191 = sbr.rel (%p189) target = $region36
        $region35: #{tpu_custom_call.1} parent=31 // pred_region
          %192 = dma.done %s185, 4096
        $region36: #{tpu_custom_call.1} parent=31 // pred_fallthru
          _
        // Predicated region
        $region37: #{tpu_custom_call.1} parent=31 // pred_check
          %p193 = pneg %p63
        $region38: #{tpu_custom_call.1} parent=31 // pred_check_branch
          %195 = sbr.rel (%p193) target = $region40
        $region39: #{tpu_custom_call.1} parent=31 // pred_region
          %196 = dma.done [#allocation6], 32768
        $region40: #{tpu_custom_call.1} parent=31 // pred_fallthru
          _
        // Predicated region
        $region41: #{tpu_custom_call.1} parent=31 // pred_check
          %p197 = pneg %p84
        $region42: #{tpu_custom_call.1} parent=31 // pred_check_branch
          %199 = sbr.rel (%p197) target = $region44
        $region43: #{tpu_custom_call.1} parent=31 // pred_region
          %200 = dma.done [#allocation6], 256
        $region44: #{tpu_custom_call.1} parent=31 // pred_fallthru
          _
        %s201 = sand.u32 %s29, 1
        %s202 = scalar_lea.sflag [#allocation3], %s201
        %s203 = sand.u32 %s29, 1
        %s204 = smul.addr %s203, 256
        %s205 = scalar_lea.vmem [#allocation2], %s204
        %p206 = pneg %p42
        %p207 = pneg %p39
        %p208 = pneg %p63
        %p209 = pneg %p60
        %p210 = pneg %p84
        %p211 = pneg %p81
        %p212 = pneg %p110
        %p213 = pneg %p107
        %s214 = sand.u32 %s97, 1
        %s215 = scalar_lea.sflag [#allocation4], %s214
        %s216 = sand.u32 %s97, 1
        %s217 = smul.addr %s216, 256
        %s218 = scalar_lea.vmem [#allocation8], %s217
        %s219 = smul.u32 16, %s21
        %s220 = smul.u32 16, %s21
        %v221 = vld [vmem:[%s188] sm:$0xff]
        %v222 = vld [vmem:[%s188 + $0x8] sm:$0xff]
        %v223 = vld [vmem:[%s188 + $0x10] sm:$0xff]
        %v224 = vld [vmem:[%s188 + $0x18] sm:$0xff]
        %v225 = vld [vmem:[%s188 + $0x20] sm:$0xff]
        %v226 = vld [vmem:[%s188 + $0x28] sm:$0xff]
        %v227 = vld [vmem:[%s188 + $0x30] sm:$0xff]
        %v228 = vld [vmem:[%s188 + $0x38] sm:$0xff]
        %v229 = vld [vmem:[%s188 + $0x40] sm:$0xff]
        %v230 = vld [vmem:[%s188 + $0x48] sm:$0xff]
        %v231 = vld [vmem:[%s188 + $0x50] sm:$0xff]
        %v232 = vld [vmem:[%s188 + $0x58] sm:$0xff]
        %v233 = vld [vmem:[%s188 + $0x60] sm:$0xff]
        %v234 = vld [vmem:[%s188 + $0x68] sm:$0xff]
        %v235 = vld [vmem:[%s188 + $0x70] sm:$0xff]
        %v236 = vld [vmem:[%s188 + $0x78] sm:$0xff]
        %v237 = vld [vmem:[%s188 + $0x80] sm:$0xff]
        %v238 = vld [vmem:[%s188 + $0x88] sm:$0xff]
        %v239 = vld [vmem:[%s188 + $0x90] sm:$0xff]
        %v240 = vld [vmem:[%s188 + $0x98] sm:$0xff]
        %v241 = vld [vmem:[%s188 + $0xa0] sm:$0xff]
        %v242 = vld [vmem:[%s188 + $0xa8] sm:$0xff]
        %v243 = vld [vmem:[%s188 + $0xb0] sm:$0xff]
        %v244 = vld [vmem:[%s188 + $0xb8] sm:$0xff]
        %v245 = vld [vmem:[%s188 + $0xc0] sm:$0xff]
        %v246 = vld [vmem:[%s188 + $0xc8] sm:$0xff]
        %v247 = vld [vmem:[%s188 + $0xd0] sm:$0xff]
        %v248 = vld [vmem:[%s188 + $0xd8] sm:$0xff]
        %v249 = vld [vmem:[%s188 + $0xe0] sm:$0xff]
        %v250 = vld [vmem:[%s188 + $0xe8] sm:$0xff]
        %v251 = vld [vmem:[%s188 + $0xf0] sm:$0xff]
        %v252 = vld [vmem:[%s188 + $0xf8] sm:$0xff]
        %v253 = vmul.f32 %v221, %v221
        %v254 = vmul.f32 %v222, %v222
        %v255 = vmul.f32 %v223, %v223
        %v256 = vmul.f32 %v224, %v224
        %v257 = vmul.f32 %v225, %v225
        %v258 = vmul.f32 %v226, %v226
        %v259 = vmul.f32 %v227, %v227
        %v260 = vmul.f32 %v228, %v228
        %v261 = vmul.f32 %v229, %v229
        %v262 = vmul.f32 %v230, %v230
        %v263 = vmul.f32 %v231, %v231
        %v264 = vmul.f32 %v232, %v232
        %v265 = vmul.f32 %v233, %v233
        %v266 = vmul.f32 %v234, %v234
        %v267 = vmul.f32 %v235, %v235
        %v268 = vmul.f32 %v236, %v236
        %v269 = vmul.f32 %v237, %v237
        %v270 = vmul.f32 %v238, %v238
        %v271 = vmul.f32 %v239, %v239
        %v272 = vmul.f32 %v240, %v240
        %v273 = vmul.f32 %v241, %v241
        %v274 = vmul.f32 %v242, %v242
        %v275 = vmul.f32 %v243, %v243
        %v276 = vmul.f32 %v244, %v244
        %v277 = vmul.f32 %v245, %v245
        %v278 = vmul.f32 %v246, %v246
        %v279 = vmul.f32 %v247, %v247
        %v280 = vmul.f32 %v248, %v248
        %v281 = vmul.f32 %v249, %v249
        %v282 = vmul.f32 %v250, %v250
        %v283 = vmul.f32 %v251, %v251
        %v284 = vmul.f32 %v252, %v252
        %v285 = vadd.f32 %v253, %v254
        %286 = vadd.xlane.f32.xlu0 %v285
        %v287 = vpop.xlane.xlu0 %286
        %v288 = vadd.f32 %v255, %v256
        %289 = vadd.xlane.f32.xlu0 %v288
        %v290 = vpop.xlane.xlu0 %289
        %v291 = vadd.f32 %v257, %v258
        %292 = vadd.xlane.f32.xlu0 %v291
        %v293 = vpop.xlane.xlu0 %292
        %v294 = vadd.f32 %v259, %v260
        %295 = vadd.xlane.f32.xlu0 %v294
        %v296 = vpop.xlane.xlu0 %295
        %v297 = vadd.f32 %v261, %v262
        %298 = vadd.xlane.f32.xlu0 %v297
        %v299 = vpop.xlane.xlu0 %298
        %v300 = vadd.f32 %v263, %v264
        %301 = vadd.xlane.f32.xlu0 %v300
        %v302 = vpop.xlane.xlu0 %301
        %v303 = vadd.f32 %v265, %v266
        %304 = vadd.xlane.f32.xlu0 %v303
        %v305 = vpop.xlane.xlu0 %304
        %v306 = vadd.f32 %v267, %v268
        %307 = vadd.xlane.f32.xlu0 %v306
        %v308 = vpop.xlane.xlu0 %307
        %v309 = vadd.f32 %v269, %v270
        %310 = vadd.xlane.f32.xlu0 %v309
        %v311 = vpop.xlane.xlu0 %310
        %v312 = vadd.f32 %v271, %v272
        %313 = vadd.xlane.f32.xlu0 %v312
        %v314 = vpop.xlane.xlu0 %313
        %v315 = vadd.f32 %v273, %v274
        %316 = vadd.xlane.f32.xlu0 %v315
        %v317 = vpop.xlane.xlu0 %316
        %v318 = vadd.f32 %v275, %v276
        %319 = vadd.xlane.f32.xlu0 %v318
        %v320 = vpop.xlane.xlu0 %319
        %v321 = vadd.f32 %v277, %v278
        %322 = vadd.xlane.f32.xlu0 %v321
        %v323 = vpop.xlane.xlu0 %322
        %v324 = vadd.f32 %v279, %v280
        %325 = vadd.xlane.f32.xlu0 %v324
        %v326 = vpop.xlane.xlu0 %325
        %v327 = vadd.f32 %v281, %v282
        %328 = vadd.xlane.f32.xlu0 %v327
        %v329 = vpop.xlane.xlu0 %328
        %v330 = vadd.f32 %v283, %v284
        %331 = vadd.xlane.f32.xlu0 %v330
        %v332 = vpop.xlane.xlu0 %331
        %v333 = vrcp.pop 256.0
        %v334 = vmul.f32 %v287, %v333
        %v335 = vmul.f32 %v290, %v333
        %v336 = vmul.f32 %v293, %v333
        %v337 = vmul.f32 %v296, %v333
        %v338 = vmul.f32 %v299, %v333
        %v339 = vmul.f32 %v302, %v333
        %v340 = vmul.f32 %v305, %v333
        %v341 = vmul.f32 %v308, %v333
        %v342 = vmul.f32 %v311, %v333
        %v343 = vmul.f32 %v314, %v333
        %v344 = vmul.f32 %v317, %v333
        %v345 = vmul.f32 %v320, %v333
        %v346 = vmul.f32 %v323, %v333
        %v347 = vmul.f32 %v326, %v333
        %v348 = vmul.f32 %v329, %v333
        %v349 = vmul.f32 %v332, %v333
        %v350 = vadd.f32 %v334, 1e-08
        %v351 = vadd.f32 %v335, 1e-08
        %v352 = vadd.f32 %v336, 1e-08
        %v353 = vadd.f32 %v337, 1e-08
        %v354 = vadd.f32 %v338, 1e-08
        %v355 = vadd.f32 %v339, 1e-08
        %v356 = vadd.f32 %v340, 1e-08
        %v357 = vadd.f32 %v341, 1e-08
        %v358 = vadd.f32 %v342, 1e-08
        %v359 = vadd.f32 %v343, 1e-08
        %v360 = vadd.f32 %v344, 1e-08
        %v361 = vadd.f32 %v345, 1e-08
        %v362 = vadd.f32 %v346, 1e-08
        %v363 = vadd.f32 %v347, 1e-08
        %v364 = vadd.f32 %v348, 1e-08
        %v365 = vadd.f32 %v349, 1e-08
        %v366 = vrsqrt.pop %v350
        %v367 = vrsqrt.pop %v351
        %v368 = vrsqrt.pop %v352
        %v369 = vrsqrt.pop %v353
        %v370 = vrsqrt.pop %v354
        %v371 = vrsqrt.pop %v355
        %v372 = vrsqrt.pop %v356
        %v373 = vrsqrt.pop %v357
        %v374 = vrsqrt.pop %v358
        %v375 = vrsqrt.pop %v359
        %v376 = vrsqrt.pop %v360
        %v377 = vrsqrt.pop %v361
        %v378 = vrsqrt.pop %v362
        %v379 = vrsqrt.pop %v363
        %v380 = vrsqrt.pop %v364
        %v381 = vrsqrt.pop %v365
        %v382 = vmul.f32 %v221, %v366
        %v383 = vmul.f32 %v222, %v366
        %v384 = vmul.f32 %v223, %v367
        %v385 = vmul.f32 %v224, %v367
        %v386 = vmul.f32 %v225, %v368
        %v387 = vmul.f32 %v226, %v368
        %v388 = vmul.f32 %v227, %v369
        %v389 = vmul.f32 %v228, %v369
        %v390 = vmul.f32 %v229, %v370
        %v391 = vmul.f32 %v230, %v370
        %v392 = vmul.f32 %v231, %v371
        %v393 = vmul.f32 %v232, %v371
        %v394 = vmul.f32 %v233, %v372
        %v395 = vmul.f32 %v234, %v372
        %v396 = vmul.f32 %v235, %v373
        %v397 = vmul.f32 %v236, %v373
        %v398 = vmul.f32 %v237, %v374
        %v399 = vmul.f32 %v238, %v374
        %v400 = vmul.f32 %v239, %v375
        %v401 = vmul.f32 %v240, %v375
        %v402 = vmul.f32 %v241, %v376
        %v403 = vmul.f32 %v242, %v376
        %v404 = vmul.f32 %v243, %v377
        %v405 = vmul.f32 %v244, %v377
        %v406 = vmul.f32 %v245, %v378
        %v407 = vmul.f32 %v246, %v378
        %v408 = vmul.f32 %v247, %v379
        %v409 = vmul.f32 %v248, %v379
        %v410 = vmul.f32 %v249, %v380
        %v411 = vmul.f32 %v250, %v380
        %v412 = vmul.f32 %v251, %v381
        %v413 = vmul.f32 %v252, %v381
        %v414 = vld [vmem:[#allocation5] sm:$0xff]
        %v415 = vld [vmem:[#allocation5 + $0x8] sm:$0xff]
        %v416 = vld [vmem:[#allocation5 + $0x10] sm:$0xff]
        %v417 = vld [vmem:[#allocation5 + $0x18] sm:$0xff]
        %v418 = vld [vmem:[#allocation5 + $0x20] sm:$0xff]
        %v419 = vld [vmem:[#allocation5 + $0x28] sm:$0xff]
        %v420 = vld [vmem:[#allocation5 + $0x30] sm:$0xff]
        %v421 = vld [vmem:[#allocation5 + $0x38] sm:$0xff]
        %v422 = vld [vmem:[#allocation5 + $0x40] sm:$0xff]
        %v423 = vld [vmem:[#allocation5 + $0x48] sm:$0xff]
        %v424 = vld [vmem:[#allocation5 + $0x50] sm:$0xff]
        %v425 = vld [vmem:[#allocation5 + $0x58] sm:$0xff]
        %v426 = vld [vmem:[#allocation5 + $0x60] sm:$0xff]
        %v427 = vld [vmem:[#allocation5 + $0x68] sm:$0xff]
        %v428 = vld [vmem:[#allocation5 + $0x70] sm:$0xff]
        %v429 = vld [vmem:[#allocation5 + $0x78] sm:$0xff]
        %v430 = vld [vmem:[#allocation5 + $0x80] sm:$0xff]
        %v431 = vld [vmem:[#allocation5 + $0x88] sm:$0xff]
        %v432 = vld [vmem:[#allocation5 + $0x90] sm:$0xff]
        %v433 = vld [vmem:[#allocation5 + $0x98] sm:$0xff]
        %v434 = vld [vmem:[#allocation5 + $0xa0] sm:$0xff]
        %v435 = vld [vmem:[#allocation5 + $0xa8] sm:$0xff]
        %v436 = vld [vmem:[#allocation5 + $0xb0] sm:$0xff]
        %v437 = vld [vmem:[#allocation5 + $0xb8] sm:$0xff]
        %v438 = vld [vmem:[#allocation5 + $0xc0] sm:$0xff]
        %v439 = vld [vmem:[#allocation5 + $0xc8] sm:$0xff]
        %v440 = vld [vmem:[#allocation5 + $0xd0] sm:$0xff]
        %v441 = vld [vmem:[#allocation5 + $0xd8] sm:$0xff]
        %v442 = vld [vmem:[#allocation5 + $0xe0] sm:$0xff]
        %v443 = vld [vmem:[#allocation5 + $0xe8] sm:$0xff]
        %v444 = vld [vmem:[#allocation5 + $0xf0] sm:$0xff]
        %v445 = vld [vmem:[#allocation5 + $0xf8] sm:$0xff]
        %v446 = vld [vmem:[#allocation7] sm:$0x3]
        %v447 = vpack.c.bf16 %v384, %v382
        %v448 = vpack.c.bf16 %v385, %v383
        %v449 = vpack.c.bf16 %v388, %v386
        %v450 = vpack.c.bf16 %v389, %v387
        %v451 = vpack.c.bf16 %v392, %v390
        %v452 = vpack.c.bf16 %v393, %v391
        %v453 = vpack.c.bf16 %v396, %v394
        %v454 = vpack.c.bf16 %v397, %v395
        %v455 = vpack.c.bf16 %v400, %v398
        %v456 = vpack.c.bf16 %v401, %v399
        %v457 = vpack.c.bf16 %v404, %v402
        %v458 = vpack.c.bf16 %v405, %v403
        %v459 = vpack.c.bf16 %v408, %v406
        %v460 = vpack.c.bf16 %v409, %v407
        %v461 = vpack.c.bf16 %v412, %v410
        %v462 = vpack.c.bf16 %v413, %v411
        %v464 = vlaneseq
        %v465 = vshrl.u32 %v464, 7
        %v466 = vsub.s32 0, %v465
        %v467 = vrot.slane %v446, %v466
        %v468 = vlaneseq
        %v469 = vshrl.u32 %v468, 7
        %v470 = vsub.s32 1, %v469
        %v471 = vrot.slane %v446, %v470
        %v506 = vunpack.c.l.b16 %v414
        %v507 = vunpack.c.h.b16 %v414
        %v508 = vunpack.c.l.b16 %v415
        %v509 = vunpack.c.h.b16 %v415
        %v510 = vunpack.c.l.b16 %v416
        %v511 = vunpack.c.h.b16 %v416
        %v512 = vunpack.c.l.b16 %v417
        %v513 = vunpack.c.h.b16 %v417
        %v514 = vunpack.c.l.b16 %v418
        %v515 = vunpack.c.h.b16 %v418
        %v516 = vunpack.c.l.b16 %v419
        %v517 = vunpack.c.h.b16 %v419
        %v518 = vunpack.c.l.b16 %v420
        %v519 = vunpack.c.h.b16 %v420
        %v520 = vunpack.c.l.b16 %v421
        %v521 = vunpack.c.h.b16 %v421
        %v522 = vunpack.c.l.b16 %v422
        %v523 = vunpack.c.h.b16 %v422
        %v524 = vunpack.c.l.b16 %v423
        %v525 = vunpack.c.h.b16 %v423
        %v526 = vunpack.c.l.b16 %v424
        %v527 = vunpack.c.h.b16 %v424
        %v528 = vunpack.c.l.b16 %v425
        %v529 = vunpack.c.h.b16 %v425
        %v530 = vunpack.c.l.b16 %v426
        %v531 = vunpack.c.h.b16 %v426
        %v532 = vunpack.c.l.b16 %v427
        %v533 = vunpack.c.h.b16 %v427
        %v534 = vunpack.c.l.b16 %v428
        %v535 = vunpack.c.h.b16 %v428
        %v536 = vunpack.c.l.b16 %v429
        %v537 = vunpack.c.h.b16 %v429
        %v538 = vunpack.c.l.b16 %v430
        %v539 = vunpack.c.h.b16 %v430
        %v540 = vunpack.c.l.b16 %v431
        %v541 = vunpack.c.h.b16 %v431
        %v542 = vunpack.c.l.b16 %v432
        %v543 = vunpack.c.h.b16 %v432
        %v544 = vunpack.c.l.b16 %v433
        %v545 = vunpack.c.h.b16 %v433
        %v546 = vunpack.c.l.b16 %v434
        %v547 = vunpack.c.h.b16 %v434
        %v548 = vunpack.c.l.b16 %v435
        %v549 = vunpack.c.h.b16 %v435
        %v550 = vunpack.c.l.b16 %v436
        %v551 = vunpack.c.h.b16 %v436
        %v552 = vunpack.c.l.b16 %v437
        %v553 = vunpack.c.h.b16 %v437
        %v554 = vunpack.c.l.b16 %v438
        %v555 = vunpack.c.h.b16 %v438
        %v556 = vunpack.c.l.b16 %v439
        %v557 = vunpack.c.h.b16 %v439
        %v558 = vunpack.c.l.b16 %v440
        %v559 = vunpack.c.h.b16 %v440
        %v560 = vunpack.c.l.b16 %v441
        %v561 = vunpack.c.h.b16 %v441
        %v562 = vunpack.c.l.b16 %v442
        %v563 = vunpack.c.h.b16 %v442
        %v564 = vunpack.c.l.b16 %v443
        %v565 = vunpack.c.h.b16 %v443
        %v566 = vunpack.c.l.b16 %v444
        %v567 = vunpack.c.h.b16 %v444
        %v568 = vunpack.c.l.b16 %v445
        %v569 = vunpack.c.h.b16 %v445
        %v570 = vpack.c.b16 %v508, %v506
        %v571 = vpack.c.b16 %v509, %v507
        %v572 = vpack.c.b16 %v512, %v510
        %v573 = vpack.c.b16 %v513, %v511
        %v574 = vpack.c.b16 %v516, %v514
        %v575 = vpack.c.b16 %v517, %v515
        %v576 = vpack.c.b16 %v520, %v518
        %v577 = vpack.c.b16 %v521, %v519
        %v578 = vpack.c.b16 %v524, %v522
        %v579 = vpack.c.b16 %v525, %v523
        %v580 = vpack.c.b16 %v528, %v526
        %v581 = vpack.c.b16 %v529, %v527
        %v582 = vpack.c.b16 %v532, %v530
        %v583 = vpack.c.b16 %v533, %v531
        %v584 = vpack.c.b16 %v536, %v534
        %v585 = vpack.c.b16 %v537, %v535
        %v586 = vpack.c.b16 %v540, %v538
        %v587 = vpack.c.b16 %v541, %v539
        %v588 = vpack.c.b16 %v544, %v542
        %v589 = vpack.c.b16 %v545, %v543
        %v590 = vpack.c.b16 %v548, %v546
        %v591 = vpack.c.b16 %v549, %v547
        %v592 = vpack.c.b16 %v552, %v550
        %v593 = vpack.c.b16 %v553, %v551
        %v594 = vpack.c.b16 %v556, %v554
        %v595 = vpack.c.b16 %v557, %v555
        %v596 = vpack.c.b16 %v560, %v558
        %v597 = vpack.c.b16 %v561, %v559
        %v598 = vpack.c.b16 %v564, %v562
        %v599 = vpack.c.b16 %v565, %v563
        %v600 = vpack.c.b16 %v568, %v566
        %v601 = vpack.c.b16 %v569, %v567
        %634 = vmatprep.subr.bf16.mxu0 %v571
        %635 = vmatpush1.bf16.msra.mxu0 %v570
        %636 = vmatprep.subr.bf16.mxu0 %v573
        %637 = vmatpush1.bf16.msra.mxu0 %v572
        %638 = vmatprep.subr.bf16.mxu0 %v575
        %639 = vmatpush1.bf16.msra.mxu0 %v574
        %640 = vmatprep.subr.bf16.mxu0 %v577
        %641 = vmatpush1.bf16.msra.mxu0 %v576
        %642 = vmatprep.subr.bf16.mxu0 %v579
        %643 = vmatpush1.bf16.msra.mxu0 %v578
        %644 = vmatprep.subr.bf16.mxu0 %v581
        %645 = vmatpush1.bf16.msra.mxu0 %v580
        %646 = vmatprep.subr.bf16.mxu0 %v583
        %647 = vmatpush1.bf16.msra.mxu0 %v582
        %648 = vmatprep.subr.bf16.mxu0 %v585
        %649 = vmatpush1.bf16.msra.mxu0 %v584
        %650 = vmatprep.subr.bf16.mxu0 %v587
        %651 = vmatpush1.bf16.msra.mxu0 %v586
        %652 = vmatprep.subr.bf16.mxu0 %v589
        %653 = vmatpush1.bf16.msra.mxu0 %v588
        %654 = vmatprep.subr.bf16.mxu0 %v591
        %655 = vmatpush1.bf16.msra.mxu0 %v590
        %656 = vmatprep.subr.bf16.mxu0 %v593
        %657 = vmatpush1.bf16.msra.mxu0 %v592
        %658 = vmatprep.subr.bf16.mxu0 %v595
        %659 = vmatpush1.bf16.msra.mxu0 %v594
        %660 = vmatprep.subr.bf16.mxu0 %v597
        %661 = vmatpush1.bf16.msra.mxu0 %v596
        %662 = vmatprep.subr.bf16.mxu0 %v599
        %663 = vmatpush1.bf16.msra.mxu0 %v598
        %664 = vmatprep.subr.bf16.mxu0 %v601
        %665 = vmatpush1.bf16.msra.mxu0 %v600
        %666 = vmatprep.mubr.bf16.mxu0 %v448
        %667 = vmatmul.mubr.bf16.gmra.mrb[0].mxu0 %v447
        %v668 = vpop.f32.mrb[0].mxu0
        %v669 = vadd.f32 %v467, %v668
        %v670 = vpop.f32.mrb[0].mxu0
        %v671 = vadd.f32 %v471, %v670
        %v672 = vpop.f32.mrb[0].mxu0
        %v673 = vadd.f32 %v467, %v672
        %v674 = vpop.f32.mrb[0].mxu0
        %v675 = vadd.f32 %v471, %v674
        %676 = vmatprep.mubr.bf16.mxu0 %v450
        %677 = vmatmul.mubr.bf16.gmra.mrb[0].mxu0 %v449
        %v678 = vpop.f32.mrb[0].mxu0
        %v679 = vadd.f32 %v467, %v678
        %v680 = vpop.f32.mrb[0].mxu0
        %v681 = vadd.f32 %v471, %v680
        %v682 = vpop.f32.mrb[0].mxu0
        %v683 = vadd.f32 %v467, %v682
        %v684 = vpop.f32.mrb[0].mxu0
        %v685 = vadd.f32 %v471, %v684
        %686 = vmatprep.mubr.bf16.mxu0 %v452
        %687 = vmatmul.mubr.bf16.gmra.mrb[0].mxu0 %v451
        %v688 = vpop.f32.mrb[0].mxu0
        %v689 = vadd.f32 %v467, %v688
        %v690 = vpop.f32.mrb[0].mxu0
        %v691 = vadd.f32 %v471, %v690
        %v692 = vpop.f32.mrb[0].mxu0
        %v693 = vadd.f32 %v467, %v692
        %v694 = vpop.f32.mrb[0].mxu0
        %v695 = vadd.f32 %v471, %v694
        %696 = vmatprep.mubr.bf16.mxu0 %v454
        %697 = vmatmul.mubr.bf16.gmra.mrb[0].mxu0 %v453
        %v698 = vpop.f32.mrb[0].mxu0
        %v699 = vadd.f32 %v467, %v698
        %v700 = vpop.f32.mrb[0].mxu0
        %v701 = vadd.f32 %v471, %v700
        %v702 = vpop.f32.mrb[0].mxu0
        %v703 = vadd.f32 %v467, %v702
        %v704 = vpop.f32.mrb[0].mxu0
        %v705 = vadd.f32 %v471, %v704
        %706 = vmatprep.mubr.bf16.mxu0 %v456
        %707 = vmatmul.mubr.bf16.gmra.mrb[0].mxu0 %v455
        %v708 = vpop.f32.mrb[0].mxu0
        %v709 = vadd.f32 %v467, %v708
        %v710 = vpop.f32.mrb[0].mxu0
        %v711 = vadd.f32 %v471, %v710
        %v712 = vpop.f32.mrb[0].mxu0
        %v713 = vadd.f32 %v467, %v712
        %v714 = vpop.f32.mrb[0].mxu0
        %v715 = vadd.f32 %v471, %v714
        %716 = vmatprep.mubr.bf16.mxu0 %v458
        %717 = vmatmul.mubr.bf16.gmra.mrb[0].mxu0 %v457
        %v718 = vpop.f32.mrb[0].mxu0
        %v719 = vadd.f32 %v467, %v718
        %v720 = vpop.f32.mrb[0].mxu0
        %v721 = vadd.f32 %v471, %v720
        %v722 = vpop.f32.mrb[0].mxu0
        %v723 = vadd.f32 %v467, %v722
        %v724 = vpop.f32.mrb[0].mxu0
        %v725 = vadd.f32 %v471, %v724
        %726 = vmatprep.mubr.bf16.mxu0 %v460
        %727 = vmatmul.mubr.bf16.gmra.mrb[0].mxu0 %v459
        %v728 = vpop.f32.mrb[0].mxu0
        %v729 = vadd.f32 %v467, %v728
        %v730 = vpop.f32.mrb[0].mxu0
        %v731 = vadd.f32 %v471, %v730
        %v732 = vpop.f32.mrb[0].mxu0
        %v733 = vadd.f32 %v467, %v732
        %v734 = vpop.f32.mrb[0].mxu0
        %v735 = vadd.f32 %v471, %v734
        %736 = vmatprep.mubr.bf16.mxu0 %v462
        %737 = vmatmul.mubr.bf16.gmra.mrb[0].mxu0 %v461
        %v738 = vpop.f32.mrb[0].mxu0
        %v739 = vadd.f32 %v467, %v738
        %v740 = vpop.f32.mrb[0].mxu0
        %v741 = vadd.f32 %v471, %v740
        %v742 = vpop.f32.mrb[0].mxu0
        %v743 = vadd.f32 %v467, %v742
        %v744 = vpop.f32.mrb[0].mxu0
        %v745 = vadd.f32 %v471, %v744
        %746 = vdwg.mxu0
        %vm747 = vcmp.ge.f32.partialorder %v669, 0.0
        %vm748 = vcmp.ge.f32.partialorder %v671, 0.0
        %vm749 = vcmp.ge.f32.partialorder %v673, 0.0
        %vm750 = vcmp.ge.f32.partialorder %v675, 0.0
        %vm751 = vcmp.ge.f32.partialorder %v679, 0.0
        %vm752 = vcmp.ge.f32.partialorder %v681, 0.0
        %vm753 = vcmp.ge.f32.partialorder %v683, 0.0
        %vm754 = vcmp.ge.f32.partialorder %v685, 0.0
        %vm755 = vcmp.ge.f32.partialorder %v689, 0.0
        %vm756 = vcmp.ge.f32.partialorder %v691, 0.0
        %vm757 = vcmp.ge.f32.partialorder %v693, 0.0
        %vm758 = vcmp.ge.f32.partialorder %v695, 0.0
        %vm759 = vcmp.ge.f32.partialorder %v699, 0.0
        %vm760 = vcmp.ge.f32.partialorder %v701, 0.0
        %vm761 = vcmp.ge.f32.partialorder %v703, 0.0
        %vm762 = vcmp.ge.f32.partialorder %v705, 0.0
        %vm763 = vcmp.ge.f32.partialorder %v709, 0.0
        %vm764 = vcmp.ge.f32.partialorder %v711, 0.0
        %vm765 = vcmp.ge.f32.partialorder %v713, 0.0
        %vm766 = vcmp.ge.f32.partialorder %v715, 0.0
        %vm767 = vcmp.ge.f32.partialorder %v719, 0.0
        %vm768 = vcmp.ge.f32.partialorder %v721, 0.0
        %vm769 = vcmp.ge.f32.partialorder %v723, 0.0
        %vm770 = vcmp.ge.f32.partialorder %v725, 0.0
        %vm771 = vcmp.ge.f32.partialorder %v729, 0.0
        %vm772 = vcmp.ge.f32.partialorder %v731, 0.0
        %vm773 = vcmp.ge.f32.partialorder %v733, 0.0
        %vm774 = vcmp.ge.f32.partialorder %v735, 0.0
        %vm775 = vcmp.ge.f32.partialorder %v739, 0.0
        %vm776 = vcmp.ge.f32.partialorder %v741, 0.0
        %vm777 = vcmp.ge.f32.partialorder %v743, 0.0
        %vm778 = vcmp.ge.f32.partialorder %v745, 0.0
        %v779 = vmul.f32 %v669, 0.2
        %v780 = vmul.f32 %v671, 0.2
        %v781 = vmul.f32 %v673, 0.2
        %v782 = vmul.f32 %v675, 0.2
        %v783 = vmul.f32 %v679, 0.2
        %v784 = vmul.f32 %v681, 0.2
        %v785 = vmul.f32 %v683, 0.2
        %v786 = vmul.f32 %v685, 0.2
        %v787 = vmul.f32 %v689, 0.2
        %v788 = vmul.f32 %v691, 0.2
        %v789 = vmul.f32 %v693, 0.2
        %v790 = vmul.f32 %v695, 0.2
        %v791 = vmul.f32 %v699, 0.2
        %v792 = vmul.f32 %v701, 0.2
        %v793 = vmul.f32 %v703, 0.2
        %v794 = vmul.f32 %v705, 0.2
        %v795 = vmul.f32 %v709, 0.2
        %v796 = vmul.f32 %v711, 0.2
        %v797 = vmul.f32 %v713, 0.2
        %v798 = vmul.f32 %v715, 0.2
        %v799 = vmul.f32 %v719, 0.2
        %v800 = vmul.f32 %v721, 0.2
        %v801 = vmul.f32 %v723, 0.2
        %v802 = vmul.f32 %v725, 0.2
        %v803 = vmul.f32 %v729, 0.2
        %v804 = vmul.f32 %v731, 0.2
        %v805 = vmul.f32 %v733, 0.2
        %v806 = vmul.f32 %v735, 0.2
        %v807 = vmul.f32 %v739, 0.2
        %v808 = vmul.f32 %v741, 0.2
        %v809 = vmul.f32 %v743, 0.2
        %v810 = vmul.f32 %v745, 0.2
        %v811 = vsel %vm747, %v669, %v779
        %v812 = vsel %vm748, %v671, %v780
        %v813 = vsel %vm749, %v673, %v781
        %v814 = vsel %vm750, %v675, %v782
        %v815 = vsel %vm751, %v679, %v783
        %v816 = vsel %vm752, %v681, %v784
        %v817 = vsel %vm753, %v683, %v785
        %v818 = vsel %vm754, %v685, %v786
        %v819 = vsel %vm755, %v689, %v787
        %v820 = vsel %vm756, %v691, %v788
        %v821 = vsel %vm757, %v693, %v789
        %v822 = vsel %vm758, %v695, %v790
        %v823 = vsel %vm759, %v699, %v791
        %v824 = vsel %vm760, %v701, %v792
        %v825 = vsel %vm761, %v703, %v793
        %v826 = vsel %vm762, %v705, %v794
        %v827 = vsel %vm763, %v709, %v795
        %v828 = vsel %vm764, %v711, %v796
        %v829 = vsel %vm765, %v713, %v797
        %v830 = vsel %vm766, %v715, %v798
        %v831 = vsel %vm767, %v719, %v799
        %v832 = vsel %vm768, %v721, %v800
        %v833 = vsel %vm769, %v723, %v801
        %v834 = vsel %vm770, %v725, %v802
        %v835 = vsel %vm771, %v729, %v803
        %v836 = vsel %vm772, %v731, %v804
        %v837 = vsel %vm773, %v733, %v805
        %v838 = vsel %vm774, %v735, %v806
        %v839 = vsel %vm775, %v739, %v807
        %v840 = vsel %vm776, %v741, %v808
        %v841 = vsel %vm777, %v743, %v809
        %v842 = vsel %vm778, %v745, %v810
        %s843 = scalar_lea.vmem [#allocation5], 256
        %v844 = vld [vmem:[%s843] sm:$0xff]
        %v845 = vld [vmem:[%s843 + $0x8] sm:$0xff]
        %v846 = vld [vmem:[%s843 + $0x10] sm:$0xff]
        %v847 = vld [vmem:[%s843 + $0x18] sm:$0xff]
        %v848 = vld [vmem:[%s843 + $0x20] sm:$0xff]
        %v849 = vld [vmem:[%s843 + $0x28] sm:$0xff]
        %v850 = vld [vmem:[%s843 + $0x30] sm:$0xff]
        %v851 = vld [vmem:[%s843 + $0x38] sm:$0xff]
        %v852 = vld [vmem:[%s843 + $0x40] sm:$0xff]
        %v853 = vld [vmem:[%s843 + $0x48] sm:$0xff]
        %v854 = vld [vmem:[%s843 + $0x50] sm:$0xff]
        %v855 = vld [vmem:[%s843 + $0x58] sm:$0xff]
        %v856 = vld [vmem:[%s843 + $0x60] sm:$0xff]
        %v857 = vld [vmem:[%s843 + $0x68] sm:$0xff]
        %v858 = vld [vmem:[%s843 + $0x70] sm:$0xff]
        %v859 = vld [vmem:[%s843 + $0x78] sm:$0xff]
        %v860 = vld [vmem:[%s843 + $0x80] sm:$0xff]
        %v861 = vld [vmem:[%s843 + $0x88] sm:$0xff]
        %v862 = vld [vmem:[%s843 + $0x90] sm:$0xff]
        %v863 = vld [vmem:[%s843 + $0x98] sm:$0xff]
        %v864 = vld [vmem:[%s843 + $0xa0] sm:$0xff]
        %v865 = vld [vmem:[%s843 + $0xa8] sm:$0xff]
        %v866 = vld [vmem:[%s843 + $0xb0] sm:$0xff]
        %v867 = vld [vmem:[%s843 + $0xb8] sm:$0xff]
        %v868 = vld [vmem:[%s843 + $0xc0] sm:$0xff]
        %v869 = vld [vmem:[%s843 + $0xc8] sm:$0xff]
        %v870 = vld [vmem:[%s843 + $0xd0] sm:$0xff]
        %v871 = vld [vmem:[%s843 + $0xd8] sm:$0xff]
        %v872 = vld [vmem:[%s843 + $0xe0] sm:$0xff]
        %v873 = vld [vmem:[%s843 + $0xe8] sm:$0xff]
        %v874 = vld [vmem:[%s843 + $0xf0] sm:$0xff]
        %v875 = vld [vmem:[%s843 + $0xf8] sm:$0xff]
        %s876 = scalar_lea.vmem [#allocation7], 2
        %v877 = vld [vmem:[%s876] sm:$0x3]
        %v878 = vpack.c.bf16 %v813, %v811
        %v879 = vpack.c.bf16 %v814, %v812
        %v880 = vpack.c.bf16 %v817, %v815
        %v881 = vpack.c.bf16 %v818, %v816
        %v882 = vpack.c.bf16 %v821, %v819
        %v883 = vpack.c.bf16 %v822, %v820
        %v884 = vpack.c.bf16 %v825, %v823
        %v885 = vpack.c.bf16 %v826, %v824
        %v886 = vpack.c.bf16 %v829, %v827
        %v887 = vpack.c.bf16 %v830, %v828
        %v888 = vpack.c.bf16 %v833, %v831
        %v889 = vpack.c.bf16 %v834, %v832
        %v890 = vpack.c.bf16 %v837, %v835
        %v891 = vpack.c.bf16 %v838, %v836
        %v892 = vpack.c.bf16 %v841, %v839
        %v893 = vpack.c.bf16 %v842, %v840
        %v895 = vlaneseq
        %v896 = vshrl.u32 %v895, 7
        %v897 = vsub.s32 0, %v896
        %v898 = vrot.slane %v877, %v897
        %v899 = vlaneseq
        %v900 = vshrl.u32 %v899, 7
        %v901 = vsub.s32 1, %v900
        %v902 = vrot.slane %v877, %v901
        %v937 = vunpack.c.l.b16 %v844
        %v938 = vunpack.c.h.b16 %v844
        %v939 = vunpack.c.l.b16 %v845
        %v940 = vunpack.c.h.b16 %v845
        %v941 = vunpack.c.l.b16 %v846
        %v942 = vunpack.c.h.b16 %v846
        %v943 = vunpack.c.l.b16 %v847
        %v944 = vunpack.c.h.b16 %v847
        %v945 = vunpack.c.l.b16 %v848
        %v946 = vunpack.c.h.b16 %v848
        %v947 = vunpack.c.l.b16 %v849
        %v948 = vunpack.c.h.b16 %v849
        %v949 = vunpack.c.l.b16 %v850
        %v950 = vunpack.c.h.b16 %v850
        %v951 = vunpack.c.l.b16 %v851
        %v952 = vunpack.c.h.b16 %v851
        %v953 = vunpack.c.l.b16 %v852
        %v954 = vunpack.c.h.b16 %v852
        %v955 = vunpack.c.l.b16 %v853
        %v956 = vunpack.c.h.b16 %v853
        %v957 = vunpack.c.l.b16 %v854
        %v958 = vunpack.c.h.b16 %v854
        %v959 = vunpack.c.l.b16 %v855
        %v960 = vunpack.c.h.b16 %v855
        %v961 = vunpack.c.l.b16 %v856
        %v962 = vunpack.c.h.b16 %v856
        %v963 = vunpack.c.l.b16 %v857
        %v964 = vunpack.c.h.b16 %v857
        %v965 = vunpack.c.l.b16 %v858
        %v966 = vunpack.c.h.b16 %v858
        %v967 = vunpack.c.l.b16 %v859
        %v968 = vunpack.c.h.b16 %v859
        %v969 = vunpack.c.l.b16 %v860
        %v970 = vunpack.c.h.b16 %v860
        %v971 = vunpack.c.l.b16 %v861
        %v972 = vunpack.c.h.b16 %v861
        %v973 = vunpack.c.l.b16 %v862
        %v974 = vunpack.c.h.b16 %v862
        %v975 = vunpack.c.l.b16 %v863
        %v976 = vunpack.c.h.b16 %v863
        %v977 = vunpack.c.l.b16 %v864
        %v978 = vunpack.c.h.b16 %v864
        %v979 = vunpack.c.l.b16 %v865
        %v980 = vunpack.c.h.b16 %v865
        %v981 = vunpack.c.l.b16 %v866
        %v982 = vunpack.c.h.b16 %v866
        %v983 = vunpack.c.l.b16 %v867
        %v984 = vunpack.c.h.b16 %v867
        %v985 = vunpack.c.l.b16 %v868
        %v986 = vunpack.c.h.b16 %v868
        %v987 = vunpack.c.l.b16 %v869
        %v988 = vunpack.c.h.b16 %v869
        %v989 = vunpack.c.l.b16 %v870
        %v990 = vunpack.c.h.b16 %v870
        %v991 = vunpack.c.l.b16 %v871
        %v992 = vunpack.c.h.b16 %v871
        %v993 = vunpack.c.l.b16 %v872
        %v994 = vunpack.c.h.b16 %v872
        %v995 = vunpack.c.l.b16 %v873
        %v996 = vunpack.c.h.b16 %v873
        %v997 = vunpack.c.l.b16 %v874
        %v998 = vunpack.c.h.b16 %v874
        %v999 = vunpack.c.l.b16 %v875
        %v1000 = vunpack.c.h.b16 %v875
        %v1001 = vpack.c.b16 %v939, %v937
        %v1002 = vpack.c.b16 %v940, %v938
        %v1003 = vpack.c.b16 %v943, %v941
        %v1004 = vpack.c.b16 %v944, %v942
        %v1005 = vpack.c.b16 %v947, %v945
        %v1006 = vpack.c.b16 %v948, %v946
        %v1007 = vpack.c.b16 %v951, %v949
        %v1008 = vpack.c.b16 %v952, %v950
        %v1009 = vpack.c.b16 %v955, %v953
        %v1010 = vpack.c.b16 %v956, %v954
        %v1011 = vpack.c.b16 %v959, %v957
        %v1012 = vpack.c.b16 %v960, %v958
        %v1013 = vpack.c.b16 %v963, %v961
        %v1014 = vpack.c.b16 %v964, %v962
        %v1015 = vpack.c.b16 %v967, %v965
        %v1016 = vpack.c.b16 %v968, %v966
        %v1017 = vpack.c.b16 %v971, %v969
        %v1018 = vpack.c.b16 %v972, %v970
        %v1019 = vpack.c.b16 %v975, %v973
        %v1020 = vpack.c.b16 %v976, %v974
        %v1021 = vpack.c.b16 %v979, %v977
        %v1022 = vpack.c.b16 %v980, %v978
        %v1023 = vpack.c.b16 %v983, %v981
        %v1024 = vpack.c.b16 %v984, %v982
        %v1025 = vpack.c.b16 %v987, %v985
        %v1026 = vpack.c.b16 %v988, %v986
        %v1027 = vpack.c.b16 %v991, %v989
        %v1028 = vpack.c.b16 %v992, %v990
        %v1029 = vpack.c.b16 %v995, %v993
        %v1030 = vpack.c.b16 %v996, %v994
        %v1031 = vpack.c.b16 %v999, %v997
        %v1032 = vpack.c.b16 %v1000, %v998
        %1065 = vmatprep.subr.bf16.mxu0 %v1002
        %1066 = vmatpush1.bf16.msra.mxu0 %v1001
        %1067 = vmatprep.subr.bf16.mxu0 %v1004
        %1068 = vmatpush1.bf16.msra.mxu0 %v1003
        %1069 = vmatprep.subr.bf16.mxu0 %v1006
        %1070 = vmatpush1.bf16.msra.mxu0 %v1005
        %1071 = vmatprep.subr.bf16.mxu0 %v1008
        %1072 = vmatpush1.bf16.msra.mxu0 %v1007
        %1073 = vmatprep.subr.bf16.mxu0 %v1010
        %1074 = vmatpush1.bf16.msra.mxu0 %v1009
        %1075 = vmatprep.subr.bf16.mxu0 %v1012
        %1076 = vmatpush1.bf16.msra.mxu0 %v1011
        %1077 = vmatprep.subr.bf16.mxu0 %v1014
        %1078 = vmatpush1.bf16.msra.mxu0 %v1013
        %1079 = vmatprep.subr.bf16.mxu0 %v1016
        %1080 = vmatpush1.bf16.msra.mxu0 %v1015
        %1081 = vmatprep.subr.bf16.mxu0 %v1018
        %1082 = vmatpush1.bf16.msra.mxu0 %v1017
        %1083 = vmatprep.subr.bf16.mxu0 %v1020
        %1084 = vmatpush1.bf16.msra.mxu0 %v1019
        %1085 = vmatprep.subr.bf16.mxu0 %v1022
        %1086 = vmatpush1.bf16.msra.mxu0 %v1021
        %1087 = vmatprep.subr.bf16.mxu0 %v1024
        %1088 = vmatpush1.bf16.msra.mxu0 %v1023
        %1089 = vmatprep.subr.bf16.mxu0 %v1026
        %1090 = vmatpush1.bf16.msra.mxu0 %v1025
        %1091 = vmatprep.subr.bf16.mxu0 %v1028
        %1092 = vmatpush1.bf16.msra.mxu0 %v1027
        %1093 = vmatprep.subr.bf16.mxu0 %v1030
        %1094 = vmatpush1.bf16.msra.mxu0 %v1029
        %1095 = vmatprep.subr.bf16.mxu0 %v1032
        %1096 = vmatpush1.bf16.msra.mxu0 %v1031
        %1097 = vmatprep.mubr.bf16.mxu0 %v879
        %1098 = vmatmul.mubr.bf16.gmra.mrb[0].mxu0 %v878
        %v1099 = vpop.f32.mrb[0].mxu0
        %v1100 = vadd.f32 %v898, %v1099
        %v1101 = vpop.f32.mrb[0].mxu0
        %v1102 = vadd.f32 %v902, %v1101
        %v1103 = vpop.f32.mrb[0].mxu0
        %v1104 = vadd.f32 %v898, %v1103
        %v1105 = vpop.f32.mrb[0].mxu0
        %v1106 = vadd.f32 %v902, %v1105
        %1107 = vmatprep.mubr.bf16.mxu0 %v881
        %1108 = vmatmul.mubr.bf16.gmra.mrb[0].mxu0 %v880
        %v1109 = vpop.f32.mrb[0].mxu0
        %v1110 = vadd.f32 %v898, %v1109
        %v1111 = vpop.f32.mrb[0].mxu0
        %v1112 = vadd.f32 %v902, %v1111
        %v1113 = vpop.f32.mrb[0].mxu0
        %v1114 = vadd.f32 %v898, %v1113
        %v1115 = vpop.f32.mrb[0].mxu0
        %v1116 = vadd.f32 %v902, %v1115
        %1117 = vmatprep.mubr.bf16.mxu0 %v883
        %1118 = vmatmul.mubr.bf16.gmra.mrb[0].mxu0 %v882
        %v1119 = vpop.f32.mrb[0].mxu0
        %v1120 = vadd.f32 %v898, %v1119
        %v1121 = vpop.f32.mrb[0].mxu0
        %v1122 = vadd.f32 %v902, %v1121
        %v1123 = vpop.f32.mrb[0].mxu0
        %v1124 = vadd.f32 %v898, %v1123
        %v1125 = vpop.f32.mrb[0].mxu0
        %v1126 = vadd.f32 %v902, %v1125
        %1127 = vmatprep.mubr.bf16.mxu0 %v885
        %1128 = vmatmul.mubr.bf16.gmra.mrb[0].mxu0 %v884
        %v1129 = vpop.f32.mrb[0].mxu0
        %v1130 = vadd.f32 %v898, %v1129
        %v1131 = vpop.f32.mrb[0].mxu0
        %v1132 = vadd.f32 %v902, %v1131
        %v1133 = vpop.f32.mrb[0].mxu0
        %v1134 = vadd.f32 %v898, %v1133
        %v1135 = vpop.f32.mrb[0].mxu0
        %v1136 = vadd.f32 %v902, %v1135
        %1137 = vmatprep.mubr.bf16.mxu0 %v887
        %1138 = vmatmul.mubr.bf16.gmra.mrb[0].mxu0 %v886
        %v1139 = vpop.f32.mrb[0].mxu0
        %v1140 = vadd.f32 %v898, %v1139
        %v1141 = vpop.f32.mrb[0].mxu0
        %v1142 = vadd.f32 %v902, %v1141
        %v1143 = vpop.f32.mrb[0].mxu0
        %v1144 = vadd.f32 %v898, %v1143
        %v1145 = vpop.f32.mrb[0].mxu0
        %v1146 = vadd.f32 %v902, %v1145
        %1147 = vmatprep.mubr.bf16.mxu0 %v889
        %1148 = vmatmul.mubr.bf16.gmra.mrb[0].mxu0 %v888
        %v1149 = vpop.f32.mrb[0].mxu0
        %v1150 = vadd.f32 %v898, %v1149
        %v1151 = vpop.f32.mrb[0].mxu0
        %v1152 = vadd.f32 %v902, %v1151
        %v1153 = vpop.f32.mrb[0].mxu0
        %v1154 = vadd.f32 %v898, %v1153
        %v1155 = vpop.f32.mrb[0].mxu0
        %v1156 = vadd.f32 %v902, %v1155
        %1157 = vmatprep.mubr.bf16.mxu0 %v891
        %1158 = vmatmul.mubr.bf16.gmra.mrb[0].mxu0 %v890
        %v1159 = vpop.f32.mrb[0].mxu0
        %v1160 = vadd.f32 %v898, %v1159
        %v1161 = vpop.f32.mrb[0].mxu0
        %v1162 = vadd.f32 %v902, %v1161
        %v1163 = vpop.f32.mrb[0].mxu0
        %v1164 = vadd.f32 %v898, %v1163
        %v1165 = vpop.f32.mrb[0].mxu0
        %v1166 = vadd.f32 %v902, %v1165
        %1167 = vmatprep.mubr.bf16.mxu0 %v893
        %1168 = vmatmul.mubr.bf16.gmra.mrb[0].mxu0 %v892
        %v1169 = vpop.f32.mrb[0].mxu0
        %v1170 = vadd.f32 %v898, %v1169
        %v1171 = vpop.f32.mrb[0].mxu0
        %v1172 = vadd.f32 %v902, %v1171
        %v1173 = vpop.f32.mrb[0].mxu0
        %v1174 = vadd.f32 %v898, %v1173
        %v1175 = vpop.f32.mrb[0].mxu0
        %v1176 = vadd.f32 %v902, %v1175
        %1177 = vdwg.mxu0
        %vm1178 = vcmp.ge.f32.partialorder %v1100, 0.0
        %vm1179 = vcmp.ge.f32.partialorder %v1102, 0.0
        %vm1180 = vcmp.ge.f32.partialorder %v1104, 0.0
        %vm1181 = vcmp.ge.f32.partialorder %v1106, 0.0
        %vm1182 = vcmp.ge.f32.partialorder %v1110, 0.0
        %vm1183 = vcmp.ge.f32.partialorder %v1112, 0.0
        %vm1184 = vcmp.ge.f32.partialorder %v1114, 0.0
        %vm1185 = vcmp.ge.f32.partialorder %v1116, 0.0
        %vm1186 = vcmp.ge.f32.partialorder %v1120, 0.0
        %vm1187 = vcmp.ge.f32.partialorder %v1122, 0.0
        %vm1188 = vcmp.ge.f32.partialorder %v1124, 0.0
        %vm1189 = vcmp.ge.f32.partialorder %v1126, 0.0
        %vm1190 = vcmp.ge.f32.partialorder %v1130, 0.0
        %vm1191 = vcmp.ge.f32.partialorder %v1132, 0.0
        %vm1192 = vcmp.ge.f32.partialorder %v1134, 0.0
        %vm1193 = vcmp.ge.f32.partialorder %v1136, 0.0
        %vm1194 = vcmp.ge.f32.partialorder %v1140, 0.0
        %vm1195 = vcmp.ge.f32.partialorder %v1142, 0.0
        %vm1196 = vcmp.ge.f32.partialorder %v1144, 0.0
        %vm1197 = vcmp.ge.f32.partialorder %v1146, 0.0
        %vm1198 = vcmp.ge.f32.partialorder %v1150, 0.0
        %vm1199 = vcmp.ge.f32.partialorder %v1152, 0.0
        %vm1200 = vcmp.ge.f32.partialorder %v1154, 0.0
        %vm1201 = vcmp.ge.f32.partialorder %v1156, 0.0
        %vm1202 = vcmp.ge.f32.partialorder %v1160, 0.0
        %vm1203 = vcmp.ge.f32.partialorder %v1162, 0.0
        %vm1204 = vcmp.ge.f32.partialorder %v1164, 0.0
        %vm1205 = vcmp.ge.f32.partialorder %v1166, 0.0
        %vm1206 = vcmp.ge.f32.partialorder %v1170, 0.0
        %vm1207 = vcmp.ge.f32.partialorder %v1172, 0.0
        %vm1208 = vcmp.ge.f32.partialorder %v1174, 0.0
        %vm1209 = vcmp.ge.f32.partialorder %v1176, 0.0
        %v1210 = vmul.f32 %v1100, 0.2
        %v1211 = vmul.f32 %v1102, 0.2
        %v1212 = vmul.f32 %v1104, 0.2
        %v1213 = vmul.f32 %v1106, 0.2
        %v1214 = vmul.f32 %v1110, 0.2
        %v1215 = vmul.f32 %v1112, 0.2
        %v1216 = vmul.f32 %v1114, 0.2
        %v1217 = vmul.f32 %v1116, 0.2
        %v1218 = vmul.f32 %v1120, 0.2
        %v1219 = vmul.f32 %v1122, 0.2
        %v1220 = vmul.f32 %v1124, 0.2
        %v1221 = vmul.f32 %v1126, 0.2
        %v1222 = vmul.f32 %v1130, 0.2
        %v1223 = vmul.f32 %v1132, 0.2
        %v1224 = vmul.f32 %v1134, 0.2
        %v1225 = vmul.f32 %v1136, 0.2
        %v1226 = vmul.f32 %v1140, 0.2
        %v1227 = vmul.f32 %v1142, 0.2
        %v1228 = vmul.f32 %v1144, 0.2
        %v1229 = vmul.f32 %v1146, 0.2
        %v1230 = vmul.f32 %v1150, 0.2
        %v1231 = vmul.f32 %v1152, 0.2
        %v1232 = vmul.f32 %v1154, 0.2
        %v1233 = vmul.f32 %v1156, 0.2
        %v1234 = vmul.f32 %v1160, 0.2
        %v1235 = vmul.f32 %v1162, 0.2
        %v1236 = vmul.f32 %v1164, 0.2
        %v1237 = vmul.f32 %v1166, 0.2
        %v1238 = vmul.f32 %v1170, 0.2
        %v1239 = vmul.f32 %v1172, 0.2
        %v1240 = vmul.f32 %v1174, 0.2
        %v1241 = vmul.f32 %v1176, 0.2
        %v1242 = vsel %vm1178, %v1100, %v1210
        %v1243 = vsel %vm1179, %v1102, %v1211
        %v1244 = vsel %vm1180, %v1104, %v1212
        %v1245 = vsel %vm1181, %v1106, %v1213
        %v1246 = vsel %vm1182, %v1110, %v1214
        %v1247 = vsel %vm1183, %v1112, %v1215
        %v1248 = vsel %vm1184, %v1114, %v1216
        %v1249 = vsel %vm1185, %v1116, %v1217
        %v1250 = vsel %vm1186, %v1120, %v1218
        %v1251 = vsel %vm1187, %v1122, %v1219
        %v1252 = vsel %vm1188, %v1124, %v1220
        %v1253 = vsel %vm1189, %v1126, %v1221
        %v1254 = vsel %vm1190, %v1130, %v1222
        %v1255 = vsel %vm1191, %v1132, %v1223
        %v1256 = vsel %vm1192, %v1134, %v1224
        %v1257 = vsel %vm1193, %v1136, %v1225
        %v1258 = vsel %vm1194, %v1140, %v1226
        %v1259 = vsel %vm1195, %v1142, %v1227
        %v1260 = vsel %vm1196, %v1144, %v1228
        %v1261 = vsel %vm1197, %v1146, %v1229
        %v1262 = vsel %vm1198, %v1150, %v1230
        %v1263 = vsel %vm1199, %v1152, %v1231
        %v1264 = vsel %vm1200, %v1154, %v1232
        %v1265 = vsel %vm1201, %v1156, %v1233
        %v1266 = vsel %vm1202, %v1160, %v1234
        %v1267 = vsel %vm1203, %v1162, %v1235
        %v1268 = vsel %vm1204, %v1164, %v1236
        %v1269 = vsel %vm1205, %v1166, %v1237
        %v1270 = vsel %vm1206, %v1170, %v1238
        %v1271 = vsel %vm1207, %v1172, %v1239
        %v1272 = vsel %vm1208, %v1174, %v1240
        %v1273 = vsel %vm1209, %v1176, %v1241
        %s1274 = scalar_lea.vmem [#allocation5], 512
        %v1275 = vld [vmem:[%s1274] sm:$0xff]
        %v1276 = vld [vmem:[%s1274 + $0x8] sm:$0xff]
        %v1277 = vld [vmem:[%s1274 + $0x10] sm:$0xff]
        %v1278 = vld [vmem:[%s1274 + $0x18] sm:$0xff]
        %v1279 = vld [vmem:[%s1274 + $0x20] sm:$0xff]
        %v1280 = vld [vmem:[%s1274 + $0x28] sm:$0xff]
        %v1281 = vld [vmem:[%s1274 + $0x30] sm:$0xff]
        %v1282 = vld [vmem:[%s1274 + $0x38] sm:$0xff]
        %v1283 = vld [vmem:[%s1274 + $0x40] sm:$0xff]
        %v1284 = vld [vmem:[%s1274 + $0x48] sm:$0xff]
        %v1285 = vld [vmem:[%s1274 + $0x50] sm:$0xff]
        %v1286 = vld [vmem:[%s1274 + $0x58] sm:$0xff]
        %v1287 = vld [vmem:[%s1274 + $0x60] sm:$0xff]
        %v1288 = vld [vmem:[%s1274 + $0x68] sm:$0xff]
        %v1289 = vld [vmem:[%s1274 + $0x70] sm:$0xff]
        %v1290 = vld [vmem:[%s1274 + $0x78] sm:$0xff]
        %v1291 = vld [vmem:[%s1274 + $0x80] sm:$0xff]
        %v1292 = vld [vmem:[%s1274 + $0x88] sm:$0xff]
        %v1293 = vld [vmem:[%s1274 + $0x90] sm:$0xff]
        %v1294 = vld [vmem:[%s1274 + $0x98] sm:$0xff]
        %v1295 = vld [vmem:[%s1274 + $0xa0] sm:$0xff]
        %v1296 = vld [vmem:[%s1274 + $0xa8] sm:$0xff]
        %v1297 = vld [vmem:[%s1274 + $0xb0] sm:$0xff]
        %v1298 = vld [vmem:[%s1274 + $0xb8] sm:$0xff]
        %v1299 = vld [vmem:[%s1274 + $0xc0] sm:$0xff]
        %v1300 = vld [vmem:[%s1274 + $0xc8] sm:$0xff]
        %v1301 = vld [vmem:[%s1274 + $0xd0] sm:$0xff]
        %v1302 = vld [vmem:[%s1274 + $0xd8] sm:$0xff]
        %v1303 = vld [vmem:[%s1274 + $0xe0] sm:$0xff]
        %v1304 = vld [vmem:[%s1274 + $0xe8] sm:$0xff]
        %v1305 = vld [vmem:[%s1274 + $0xf0] sm:$0xff]
        %v1306 = vld [vmem:[%s1274 + $0xf8] sm:$0xff]
        %s1307 = scalar_lea.vmem [#allocation7], 4
        %v1308 = vld [vmem:[%s1307] sm:$0x3]
        %v1309 = vpack.c.bf16 %v1244, %v1242
        %v1310 = vpack.c.bf16 %v1245, %v1243
        %v1311 = vpack.c.bf16 %v1248, %v1246
        %v1312 = vpack.c.bf16 %v1249, %v1247
        %v1313 = vpack.c.bf16 %v1252, %v1250
        %v1314 = vpack.c.bf16 %v1253, %v1251
        %v1315 = vpack.c.bf16 %v1256, %v1254
        %v1316 = vpack.c.bf16 %v1257, %v1255
        %v1317 = vpack.c.bf16 %v1260, %v1258
        %v1318 = vpack.c.bf16 %v1261, %v1259
        %v1319 = vpack.c.bf16 %v1264, %v1262
        %v1320 = vpack.c.bf16 %v1265, %v1263
        %v1321 = vpack.c.bf16 %v1268, %v1266
        %v1322 = vpack.c.bf16 %v1269, %v1267
        %v1323 = vpack.c.bf16 %v1272, %v1270
        %v1324 = vpack.c.bf16 %v1273, %v1271
        %v1326 = vlaneseq
        %v1327 = vshrl.u32 %v1326, 7
        %v1328 = vsub.s32 0, %v1327
        %v1329 = vrot.slane %v1308, %v1328
        %v1330 = vlaneseq
        %v1331 = vshrl.u32 %v1330, 7
        %v1332 = vsub.s32 1, %v1331
        %v1333 = vrot.slane %v1308, %v1332
        %v1368 = vunpack.c.l.b16 %v1275
        %v1369 = vunpack.c.h.b16 %v1275
        %v1370 = vunpack.c.l.b16 %v1276
        %v1371 = vunpack.c.h.b16 %v1276
        %v1372 = vunpack.c.l.b16 %v1277
        %v1373 = vunpack.c.h.b16 %v1277
        %v1374 = vunpack.c.l.b16 %v1278
        %v1375 = vunpack.c.h.b16 %v1278
        %v1376 = vunpack.c.l.b16 %v1279
        %v1377 = vunpack.c.h.b16 %v1279
        %v1378 = vunpack.c.l.b16 %v1280
        %v1379 = vunpack.c.h.b16 %v1280
        %v1380 = vunpack.c.l.b16 %v1281
        %v1381 = vunpack.c.h.b16 %v1281
        %v1382 = vunpack.c.l.b16 %v1282
        %v1383 = vunpack.c.h.b16 %v1282
        %v1384 = vunpack.c.l.b16 %v1283
        %v1385 = vunpack.c.h.b16 %v1283
        %v1386 = vunpack.c.l.b16 %v1284
        %v1387 = vunpack.c.h.b16 %v1284
        %v1388 = vunpack.c.l.b16 %v1285
        %v1389 = vunpack.c.h.b16 %v1285
        %v1390 = vunpack.c.l.b16 %v1286
        %v1391 = vunpack.c.h.b16 %v1286
        %v1392 = vunpack.c.l.b16 %v1287
        %v1393 = vunpack.c.h.b16 %v1287
        %v1394 = vunpack.c.l.b16 %v1288
        %v1395 = vunpack.c.h.b16 %v1288
        %v1396 = vunpack.c.l.b16 %v1289
        %v1397 = vunpack.c.h.b16 %v1289
        %v1398 = vunpack.c.l.b16 %v1290
        %v1399 = vunpack.c.h.b16 %v1290
        %v1400 = vunpack.c.l.b16 %v1291
        %v1401 = vunpack.c.h.b16 %v1291
        %v1402 = vunpack.c.l.b16 %v1292
        %v1403 = vunpack.c.h.b16 %v1292
        %v1404 = vunpack.c.l.b16 %v1293
        %v1405 = vunpack.c.h.b16 %v1293
        %v1406 = vunpack.c.l.b16 %v1294
        %v1407 = vunpack.c.h.b16 %v1294
        %v1408 = vunpack.c.l.b16 %v1295
        %v1409 = vunpack.c.h.b16 %v1295
        %v1410 = vunpack.c.l.b16 %v1296
        %v1411 = vunpack.c.h.b16 %v1296
        %v1412 = vunpack.c.l.b16 %v1297
        %v1413 = vunpack.c.h.b16 %v1297
        %v1414 = vunpack.c.l.b16 %v1298
        %v1415 = vunpack.c.h.b16 %v1298
        %v1416 = vunpack.c.l.b16 %v1299
        %v1417 = vunpack.c.h.b16 %v1299
        %v1418 = vunpack.c.l.b16 %v1300
        %v1419 = vunpack.c.h.b16 %v1300
        %v1420 = vunpack.c.l.b16 %v1301
        %v1421 = vunpack.c.h.b16 %v1301
        %v1422 = vunpack.c.l.b16 %v1302
        %v1423 = vunpack.c.h.b16 %v1302
        %v1424 = vunpack.c.l.b16 %v1303
        %v1425 = vunpack.c.h.b16 %v1303
        %v1426 = vunpack.c.l.b16 %v1304
        %v1427 = vunpack.c.h.b16 %v1304
        %v1428 = vunpack.c.l.b16 %v1305
        %v1429 = vunpack.c.h.b16 %v1305
        %v1430 = vunpack.c.l.b16 %v1306
        %v1431 = vunpack.c.h.b16 %v1306
        %v1432 = vpack.c.b16 %v1370, %v1368
        %v1433 = vpack.c.b16 %v1371, %v1369
        %v1434 = vpack.c.b16 %v1374, %v1372
        %v1435 = vpack.c.b16 %v1375, %v1373
        %v1436 = vpack.c.b16 %v1378, %v1376
        %v1437 = vpack.c.b16 %v1379, %v1377
        %v1438 = vpack.c.b16 %v1382, %v1380
        %v1439 = vpack.c.b16 %v1383, %v1381
        %v1440 = vpack.c.b16 %v1386, %v1384
        %v1441 = vpack.c.b16 %v1387, %v1385
        %v1442 = vpack.c.b16 %v1390, %v1388
        %v1443 = vpack.c.b16 %v1391, %v1389
        %v1444 = vpack.c.b16 %v1394, %v1392
        %v1445 = vpack.c.b16 %v1395, %v1393
        %v1446 = vpack.c.b16 %v1398, %v1396
        %v1447 = vpack.c.b16 %v1399, %v1397
        %v1448 = vpack.c.b16 %v1402, %v1400
        %v1449 = vpack.c.b16 %v1403, %v1401
        %v1450 = vpack.c.b16 %v1406, %v1404
        %v1451 = vpack.c.b16 %v1407, %v1405
        %v1452 = vpack.c.b16 %v1410, %v1408
        %v1453 = vpack.c.b16 %v1411, %v1409
        %v1454 = vpack.c.b16 %v1414, %v1412
        %v1455 = vpack.c.b16 %v1415, %v1413
        %v1456 = vpack.c.b16 %v1418, %v1416
        %v1457 = vpack.c.b16 %v1419, %v1417
        %v1458 = vpack.c.b16 %v1422, %v1420
        %v1459 = vpack.c.b16 %v1423, %v1421
        %v1460 = vpack.c.b16 %v1426, %v1424
        %v1461 = vpack.c.b16 %v1427, %v1425
        %v1462 = vpack.c.b16 %v1430, %v1428
        %v1463 = vpack.c.b16 %v1431, %v1429
        %1496 = vmatprep.subr.bf16.mxu0 %v1433
        %1497 = vmatpush1.bf16.msra.mxu0 %v1432
        %1498 = vmatprep.subr.bf16.mxu0 %v1435
        %1499 = vmatpush1.bf16.msra.mxu0 %v1434
        %1500 = vmatprep.subr.bf16.mxu0 %v1437
        %1501 = vmatpush1.bf16.msra.mxu0 %v1436
        %1502 = vmatprep.subr.bf16.mxu0 %v1439
        %1503 = vmatpush1.bf16.msra.mxu0 %v1438
        %1504 = vmatprep.subr.bf16.mxu0 %v1441
        %1505 = vmatpush1.bf16.msra.mxu0 %v1440
        %1506 = vmatprep.subr.bf16.mxu0 %v1443
        %1507 = vmatpush1.bf16.msra.mxu0 %v1442
        %1508 = vmatprep.subr.bf16.mxu0 %v1445
        %1509 = vmatpush1.bf16.msra.mxu0 %v1444
        %1510 = vmatprep.subr.bf16.mxu0 %v1447
        %1511 = vmatpush1.bf16.msra.mxu0 %v1446
        %1512 = vmatprep.subr.bf16.mxu0 %v1449
        %1513 = vmatpush1.bf16.msra.mxu0 %v1448
        %1514 = vmatprep.subr.bf16.mxu0 %v1451
        %1515 = vmatpush1.bf16.msra.mxu0 %v1450
        %1516 = vmatprep.subr.bf16.mxu0 %v1453
        %1517 = vmatpush1.bf16.msra.mxu0 %v1452
        %1518 = vmatprep.subr.bf16.mxu0 %v1455
        %1519 = vmatpush1.bf16.msra.mxu0 %v1454
        %1520 = vmatprep.subr.bf16.mxu0 %v1457
        %1521 = vmatpush1.bf16.msra.mxu0 %v1456
        %1522 = vmatprep.subr.bf16.mxu0 %v1459
        %1523 = vmatpush1.bf16.msra.mxu0 %v1458
        %1524 = vmatprep.subr.bf16.mxu0 %v1461
        %1525 = vmatpush1.bf16.msra.mxu0 %v1460
        %1526 = vmatprep.subr.bf16.mxu0 %v1463
        %1527 = vmatpush1.bf16.msra.mxu0 %v1462
        %1528 = vmatprep.mubr.bf16.mxu0 %v1310
        %1529 = vmatmul.mubr.bf16.gmra.mrb[0].mxu0 %v1309
        %v1530 = vpop.f32.mrb[0].mxu0
        %v1531 = vadd.f32 %v1329, %v1530
        %v1532 = vpop.f32.mrb[0].mxu0
        %v1533 = vadd.f32 %v1333, %v1532
        %v1534 = vpop.f32.mrb[0].mxu0
        %v1535 = vadd.f32 %v1329, %v1534
        %v1536 = vpop.f32.mrb[0].mxu0
        %v1537 = vadd.f32 %v1333, %v1536
        %1538 = vmatprep.mubr.bf16.mxu0 %v1312
        %1539 = vmatmul.mubr.bf16.gmra.mrb[0].mxu0 %v1311
        %v1540 = vpop.f32.mrb[0].mxu0
        %v1541 = vadd.f32 %v1329, %v1540
        %v1542 = vpop.f32.mrb[0].mxu0
        %v1543 = vadd.f32 %v1333, %v1542
        %v1544 = vpop.f32.mrb[0].mxu0
        %v1545 = vadd.f32 %v1329, %v1544
        %v1546 = vpop.f32.mrb[0].mxu0
        %v1547 = vadd.f32 %v1333, %v1546
        %1548 = vmatprep.mubr.bf16.mxu0 %v1314
        %1549 = vmatmul.mubr.bf16.gmra.mrb[0].mxu0 %v1313
        %v1550 = vpop.f32.mrb[0].mxu0
        %v1551 = vadd.f32 %v1329, %v1550
        %v1552 = vpop.f32.mrb[0].mxu0
        %v1553 = vadd.f32 %v1333, %v1552
        %v1554 = vpop.f32.mrb[0].mxu0
        %v1555 = vadd.f32 %v1329, %v1554
        %v1556 = vpop.f32.mrb[0].mxu0
        %v1557 = vadd.f32 %v1333, %v1556
        %1558 = vmatprep.mubr.bf16.mxu0 %v1316
        %1559 = vmatmul.mubr.bf16.gmra.mrb[0].mxu0 %v1315
        %v1560 = vpop.f32.mrb[0].mxu0
        %v1561 = vadd.f32 %v1329, %v1560
        %v1562 = vpop.f32.mrb[0].mxu0
        %v1563 = vadd.f32 %v1333, %v1562
        %v1564 = vpop.f32.mrb[0].mxu0
        %v1565 = vadd.f32 %v1329, %v1564
        %v1566 = vpop.f32.mrb[0].mxu0
        %v1567 = vadd.f32 %v1333, %v1566
        %1568 = vmatprep.mubr.bf16.mxu0 %v1318
        %1569 = vmatmul.mubr.bf16.gmra.mrb[0].mxu0 %v1317
        %v1570 = vpop.f32.mrb[0].mxu0
        %v1571 = vadd.f32 %v1329, %v1570
        %v1572 = vpop.f32.mrb[0].mxu0
        %v1573 = vadd.f32 %v1333, %v1572
        %v1574 = vpop.f32.mrb[0].mxu0
        %v1575 = vadd.f32 %v1329, %v1574
        %v1576 = vpop.f32.mrb[0].mxu0
        %v1577 = vadd.f32 %v1333, %v1576
        %1578 = vmatprep.mubr.bf16.mxu0 %v1320
        %1579 = vmatmul.mubr.bf16.gmra.mrb[0].mxu0 %v1319
        %v1580 = vpop.f32.mrb[0].mxu0
        %v1581 = vadd.f32 %v1329, %v1580
        %v1582 = vpop.f32.mrb[0].mxu0
        %v1583 = vadd.f32 %v1333, %v1582
        %v1584 = vpop.f32.mrb[0].mxu0
        %v1585 = vadd.f32 %v1329, %v1584
        %v1586 = vpop.f32.mrb[0].mxu0
        %v1587 = vadd.f32 %v1333, %v1586
        %1588 = vmatprep.mubr.bf16.mxu0 %v1322
        %1589 = vmatmul.mubr.bf16.gmra.mrb[0].mxu0 %v1321
        %v1590 = vpop.f32.mrb[0].mxu0
        %v1591 = vadd.f32 %v1329, %v1590
        %v1592 = vpop.f32.mrb[0].mxu0
        %v1593 = vadd.f32 %v1333, %v1592
        %v1594 = vpop.f32.mrb[0].mxu0
        %v1595 = vadd.f32 %v1329, %v1594
        %v1596 = vpop.f32.mrb[0].mxu0
        %v1597 = vadd.f32 %v1333, %v1596
        %1598 = vmatprep.mubr.bf16.mxu0 %v1324
        %1599 = vmatmul.mubr.bf16.gmra.mrb[0].mxu0 %v1323
        %v1600 = vpop.f32.mrb[0].mxu0
        %v1601 = vadd.f32 %v1329, %v1600
        %v1602 = vpop.f32.mrb[0].mxu0
        %v1603 = vadd.f32 %v1333, %v1602
        %v1604 = vpop.f32.mrb[0].mxu0
        %v1605 = vadd.f32 %v1329, %v1604
        %v1606 = vpop.f32.mrb[0].mxu0
        %v1607 = vadd.f32 %v1333, %v1606
        %1608 = vdwg.mxu0
        %vm1609 = vcmp.ge.f32.partialorder %v1531, 0.0
        %vm1610 = vcmp.ge.f32.partialorder %v1533, 0.0
        %vm1611 = vcmp.ge.f32.partialorder %v1535, 0.0
        %vm1612 = vcmp.ge.f32.partialorder %v1537, 0.0
        %vm1613 = vcmp.ge.f32.partialorder %v1541, 0.0
        %vm1614 = vcmp.ge.f32.partialorder %v1543, 0.0
        %vm1615 = vcmp.ge.f32.partialorder %v1545, 0.0
        %vm1616 = vcmp.ge.f32.partialorder %v1547, 0.0
        %vm1617 = vcmp.ge.f32.partialorder %v1551, 0.0
        %vm1618 = vcmp.ge.f32.partialorder %v1553, 0.0
        %vm1619 = vcmp.ge.f32.partialorder %v1555, 0.0
        %vm1620 = vcmp.ge.f32.partialorder %v1557, 0.0
        %vm1621 = vcmp.ge.f32.partialorder %v1561, 0.0
        %vm1622 = vcmp.ge.f32.partialorder %v1563, 0.0
        %vm1623 = vcmp.ge.f32.partialorder %v1565, 0.0
        %vm1624 = vcmp.ge.f32.partialorder %v1567, 0.0
        %vm1625 = vcmp.ge.f32.partialorder %v1571, 0.0
        %vm1626 = vcmp.ge.f32.partialorder %v1573, 0.0
        %vm1627 = vcmp.ge.f32.partialorder %v1575, 0.0
        %vm1628 = vcmp.ge.f32.partialorder %v1577, 0.0
        %vm1629 = vcmp.ge.f32.partialorder %v1581, 0.0
        %vm1630 = vcmp.ge.f32.partialorder %v1583, 0.0
        %vm1631 = vcmp.ge.f32.partialorder %v1585, 0.0
        %vm1632 = vcmp.ge.f32.partialorder %v1587, 0.0
        %vm1633 = vcmp.ge.f32.partialorder %v1591, 0.0
        %vm1634 = vcmp.ge.f32.partialorder %v1593, 0.0
        %vm1635 = vcmp.ge.f32.partialorder %v1595, 0.0
        %vm1636 = vcmp.ge.f32.partialorder %v1597, 0.0
        %vm1637 = vcmp.ge.f32.partialorder %v1601, 0.0
        %vm1638 = vcmp.ge.f32.partialorder %v1603, 0.0
        %vm1639 = vcmp.ge.f32.partialorder %v1605, 0.0
        %vm1640 = vcmp.ge.f32.partialorder %v1607, 0.0
        %v1641 = vmul.f32 %v1531, 0.2
        %v1642 = vmul.f32 %v1533, 0.2
        %v1643 = vmul.f32 %v1535, 0.2
        %v1644 = vmul.f32 %v1537, 0.2
        %v1645 = vmul.f32 %v1541, 0.2
        %v1646 = vmul.f32 %v1543, 0.2
        %v1647 = vmul.f32 %v1545, 0.2
        %v1648 = vmul.f32 %v1547, 0.2
        %v1649 = vmul.f32 %v1551, 0.2
        %v1650 = vmul.f32 %v1553, 0.2
        %v1651 = vmul.f32 %v1555, 0.2
        %v1652 = vmul.f32 %v1557, 0.2
        %v1653 = vmul.f32 %v1561, 0.2
        %v1654 = vmul.f32 %v1563, 0.2
        %v1655 = vmul.f32 %v1565, 0.2
        %v1656 = vmul.f32 %v1567, 0.2
        %v1657 = vmul.f32 %v1571, 0.2
        %v1658 = vmul.f32 %v1573, 0.2
        %v1659 = vmul.f32 %v1575, 0.2
        %v1660 = vmul.f32 %v1577, 0.2
        %v1661 = vmul.f32 %v1581, 0.2
        %v1662 = vmul.f32 %v1583, 0.2
        %v1663 = vmul.f32 %v1585, 0.2
        %v1664 = vmul.f32 %v1587, 0.2
        %v1665 = vmul.f32 %v1591, 0.2
        %v1666 = vmul.f32 %v1593, 0.2
        %v1667 = vmul.f32 %v1595, 0.2
        %v1668 = vmul.f32 %v1597, 0.2
        %v1669 = vmul.f32 %v1601, 0.2
        %v1670 = vmul.f32 %v1603, 0.2
        %v1671 = vmul.f32 %v1605, 0.2
        %v1672 = vmul.f32 %v1607, 0.2
        %v1673 = vsel %vm1609, %v1531, %v1641
        %v1674 = vsel %vm1610, %v1533, %v1642
        %v1675 = vsel %vm1611, %v1535, %v1643
        %v1676 = vsel %vm1612, %v1537, %v1644
        %v1677 = vsel %vm1613, %v1541, %v1645
        %v1678 = vsel %vm1614, %v1543, %v1646
        %v1679 = vsel %vm1615, %v1545, %v1647
        %v1680 = vsel %vm1616, %v1547, %v1648
        %v1681 = vsel %vm1617, %v1551, %v1649
        %v1682 = vsel %vm1618, %v1553, %v1650
        %v1683 = vsel %vm1619, %v1555, %v1651
        %v1684 = vsel %vm1620, %v1557, %v1652
        %v1685 = vsel %vm1621, %v1561, %v1653
        %v1686 = vsel %vm1622, %v1563, %v1654
        %v1687 = vsel %vm1623, %v1565, %v1655
        %v1688 = vsel %vm1624, %v1567, %v1656
        %v1689 = vsel %vm1625, %v1571, %v1657
        %v1690 = vsel %vm1626, %v1573, %v1658
        %v1691 = vsel %vm1627, %v1575, %v1659
        %v1692 = vsel %vm1628, %v1577, %v1660
        %v1693 = vsel %vm1629, %v1581, %v1661
        %v1694 = vsel %vm1630, %v1583, %v1662
        %v1695 = vsel %vm1631, %v1585, %v1663
        %v1696 = vsel %vm1632, %v1587, %v1664
        %v1697 = vsel %vm1633, %v1591, %v1665
        %v1698 = vsel %vm1634, %v1593, %v1666
        %v1699 = vsel %vm1635, %v1595, %v1667
        %v1700 = vsel %vm1636, %v1597, %v1668
        %v1701 = vsel %vm1637, %v1601, %v1669
        %v1702 = vsel %vm1638, %v1603, %v1670
        %v1703 = vsel %vm1639, %v1605, %v1671
        %v1704 = vsel %vm1640, %v1607, %v1672
        %s1705 = scalar_lea.vmem [#allocation5], 768
        %v1706 = vld [vmem:[%s1705] sm:$0xff]
        %v1707 = vld [vmem:[%s1705 + $0x8] sm:$0xff]
        %v1708 = vld [vmem:[%s1705 + $0x10] sm:$0xff]
        %v1709 = vld [vmem:[%s1705 + $0x18] sm:$0xff]
        %v1710 = vld [vmem:[%s1705 + $0x20] sm:$0xff]
        %v1711 = vld [vmem:[%s1705 + $0x28] sm:$0xff]
        %v1712 = vld [vmem:[%s1705 + $0x30] sm:$0xff]
        %v1713 = vld [vmem:[%s1705 + $0x38] sm:$0xff]
        %v1714 = vld [vmem:[%s1705 + $0x40] sm:$0xff]
        %v1715 = vld [vmem:[%s1705 + $0x48] sm:$0xff]
        %v1716 = vld [vmem:[%s1705 + $0x50] sm:$0xff]
        %v1717 = vld [vmem:[%s1705 + $0x58] sm:$0xff]
        %v1718 = vld [vmem:[%s1705 + $0x60] sm:$0xff]
        %v1719 = vld [vmem:[%s1705 + $0x68] sm:$0xff]
        %v1720 = vld [vmem:[%s1705 + $0x70] sm:$0xff]
        %v1721 = vld [vmem:[%s1705 + $0x78] sm:$0xff]
        %v1722 = vld [vmem:[%s1705 + $0x80] sm:$0xff]
        %v1723 = vld [vmem:[%s1705 + $0x88] sm:$0xff]
        %v1724 = vld [vmem:[%s1705 + $0x90] sm:$0xff]
        %v1725 = vld [vmem:[%s1705 + $0x98] sm:$0xff]
        %v1726 = vld [vmem:[%s1705 + $0xa0] sm:$0xff]
        %v1727 = vld [vmem:[%s1705 + $0xa8] sm:$0xff]
        %v1728 = vld [vmem:[%s1705 + $0xb0] sm:$0xff]
        %v1729 = vld [vmem:[%s1705 + $0xb8] sm:$0xff]
        %v1730 = vld [vmem:[%s1705 + $0xc0] sm:$0xff]
        %v1731 = vld [vmem:[%s1705 + $0xc8] sm:$0xff]
        %v1732 = vld [vmem:[%s1705 + $0xd0] sm:$0xff]
        %v1733 = vld [vmem:[%s1705 + $0xd8] sm:$0xff]
        %v1734 = vld [vmem:[%s1705 + $0xe0] sm:$0xff]
        %v1735 = vld [vmem:[%s1705 + $0xe8] sm:$0xff]
        %v1736 = vld [vmem:[%s1705 + $0xf0] sm:$0xff]
        %v1737 = vld [vmem:[%s1705 + $0xf8] sm:$0xff]
        %s1738 = scalar_lea.vmem [#allocation7], 6
        %v1739 = vld [vmem:[%s1738] sm:$0x3]
        %v1740 = vpack.c.bf16 %v1675, %v1673
        %v1741 = vpack.c.bf16 %v1676, %v1674
        %v1742 = vpack.c.bf16 %v1679, %v1677
        %v1743 = vpack.c.bf16 %v1680, %v1678
        %v1744 = vpack.c.bf16 %v1683, %v1681
        %v1745 = vpack.c.bf16 %v1684, %v1682
        %v1746 = vpack.c.bf16 %v1687, %v1685
        %v1747 = vpack.c.bf16 %v1688, %v1686
        %v1748 = vpack.c.bf16 %v1691, %v1689
        %v1749 = vpack.c.bf16 %v1692, %v1690
        %v1750 = vpack.c.bf16 %v1695, %v1693
        %v1751 = vpack.c.bf16 %v1696, %v1694
        %v1752 = vpack.c.bf16 %v1699, %v1697
        %v1753 = vpack.c.bf16 %v1700, %v1698
        %v1754 = vpack.c.bf16 %v1703, %v1701
        %v1755 = vpack.c.bf16 %v1704, %v1702
        %v1757 = vlaneseq
        %v1758 = vshrl.u32 %v1757, 7
        %v1759 = vsub.s32 0, %v1758
        %v1760 = vrot.slane %v1739, %v1759
        %v1761 = vlaneseq
        %v1762 = vshrl.u32 %v1761, 7
        %v1763 = vsub.s32 1, %v1762
        %v1764 = vrot.slane %v1739, %v1763
        %v1799 = vunpack.c.l.b16 %v1706
        %v1800 = vunpack.c.h.b16 %v1706
        %v1801 = vunpack.c.l.b16 %v1707
        %v1802 = vunpack.c.h.b16 %v1707
        %v1803 = vunpack.c.l.b16 %v1708
        %v1804 = vunpack.c.h.b16 %v1708
        %v1805 = vunpack.c.l.b16 %v1709
        %v1806 = vunpack.c.h.b16 %v1709
        %v1807 = vunpack.c.l.b16 %v1710
        %v1808 = vunpack.c.h.b16 %v1710
        %v1809 = vunpack.c.l.b16 %v1711
        %v1810 = vunpack.c.h.b16 %v1711
        %v1811 = vunpack.c.l.b16 %v1712
        %v1812 = vunpack.c.h.b16 %v1712
        %v1813 = vunpack.c.l.b16 %v1713
        %v1814 = vunpack.c.h.b16 %v1713
        %v1815 = vunpack.c.l.b16 %v1714
        %v1816 = vunpack.c.h.b16 %v1714
        %v1817 = vunpack.c.l.b16 %v1715
        %v1818 = vunpack.c.h.b16 %v1715
        %v1819 = vunpack.c.l.b16 %v1716
        %v1820 = vunpack.c.h.b16 %v1716
        %v1821 = vunpack.c.l.b16 %v1717
        %v1822 = vunpack.c.h.b16 %v1717
        %v1823 = vunpack.c.l.b16 %v1718
        %v1824 = vunpack.c.h.b16 %v1718
        %v1825 = vunpack.c.l.b16 %v1719
        %v1826 = vunpack.c.h.b16 %v1719
        %v1827 = vunpack.c.l.b16 %v1720
        %v1828 = vunpack.c.h.b16 %v1720
        %v1829 = vunpack.c.l.b16 %v1721
        %v1830 = vunpack.c.h.b16 %v1721
        %v1831 = vunpack.c.l.b16 %v1722
        %v1832 = vunpack.c.h.b16 %v1722
        %v1833 = vunpack.c.l.b16 %v1723
        %v1834 = vunpack.c.h.b16 %v1723
        %v1835 = vunpack.c.l.b16 %v1724
        %v1836 = vunpack.c.h.b16 %v1724
        %v1837 = vunpack.c.l.b16 %v1725
        %v1838 = vunpack.c.h.b16 %v1725
        %v1839 = vunpack.c.l.b16 %v1726
        %v1840 = vunpack.c.h.b16 %v1726
        %v1841 = vunpack.c.l.b16 %v1727
        %v1842 = vunpack.c.h.b16 %v1727
        %v1843 = vunpack.c.l.b16 %v1728
        %v1844 = vunpack.c.h.b16 %v1728
        %v1845 = vunpack.c.l.b16 %v1729
        %v1846 = vunpack.c.h.b16 %v1729
        %v1847 = vunpack.c.l.b16 %v1730
        %v1848 = vunpack.c.h.b16 %v1730
        %v1849 = vunpack.c.l.b16 %v1731
        %v1850 = vunpack.c.h.b16 %v1731
        %v1851 = vunpack.c.l.b16 %v1732
        %v1852 = vunpack.c.h.b16 %v1732
        %v1853 = vunpack.c.l.b16 %v1733
        %v1854 = vunpack.c.h.b16 %v1733
        %v1855 = vunpack.c.l.b16 %v1734
        %v1856 = vunpack.c.h.b16 %v1734
        %v1857 = vunpack.c.l.b16 %v1735
        %v1858 = vunpack.c.h.b16 %v1735
        %v1859 = vunpack.c.l.b16 %v1736
        %v1860 = vunpack.c.h.b16 %v1736
        %v1861 = vunpack.c.l.b16 %v1737
        %v1862 = vunpack.c.h.b16 %v1737
        %v1863 = vpack.c.b16 %v1801, %v1799
        %v1864 = vpack.c.b16 %v1802, %v1800
        %v1865 = vpack.c.b16 %v1805, %v1803
        %v1866 = vpack.c.b16 %v1806, %v1804
        %v1867 = vpack.c.b16 %v1809, %v1807
        %v1868 = vpack.c.b16 %v1810, %v1808
        %v1869 = vpack.c.b16 %v1813, %v1811
        %v1870 = vpack.c.b16 %v1814, %v1812
        %v1871 = vpack.c.b16 %v1817, %v1815
        %v1872 = vpack.c.b16 %v1818, %v1816
        %v1873 = vpack.c.b16 %v1821, %v1819
        %v1874 = vpack.c.b16 %v1822, %v1820
        %v1875 = vpack.c.b16 %v1825, %v1823
        %v1876 = vpack.c.b16 %v1826, %v1824
        %v1877 = vpack.c.b16 %v1829, %v1827
        %v1878 = vpack.c.b16 %v1830, %v1828
        %v1879 = vpack.c.b16 %v1833, %v1831
        %v1880 = vpack.c.b16 %v1834, %v1832
        %v1881 = vpack.c.b16 %v1837, %v1835
        %v1882 = vpack.c.b16 %v1838, %v1836
        %v1883 = vpack.c.b16 %v1841, %v1839
        %v1884 = vpack.c.b16 %v1842, %v1840
        %v1885 = vpack.c.b16 %v1845, %v1843
        %v1886 = vpack.c.b16 %v1846, %v1844
        %v1887 = vpack.c.b16 %v1849, %v1847
        %v1888 = vpack.c.b16 %v1850, %v1848
        %v1889 = vpack.c.b16 %v1853, %v1851
        %v1890 = vpack.c.b16 %v1854, %v1852
        %v1891 = vpack.c.b16 %v1857, %v1855
        %v1892 = vpack.c.b16 %v1858, %v1856
        %v1893 = vpack.c.b16 %v1861, %v1859
        %v1894 = vpack.c.b16 %v1862, %v1860
        %1927 = vmatprep.subr.bf16.mxu0 %v1864
        %1928 = vmatpush1.bf16.msra.mxu0 %v1863
        %1929 = vmatprep.subr.bf16.mxu0 %v1866
        %1930 = vmatpush1.bf16.msra.mxu0 %v1865
        %1931 = vmatprep.subr.bf16.mxu0 %v1868
        %1932 = vmatpush1.bf16.msra.mxu0 %v1867
        %1933 = vmatprep.subr.bf16.mxu0 %v1870
        %1934 = vmatpush1.bf16.msra.mxu0 %v1869
        %1935 = vmatprep.subr.bf16.mxu0 %v1872
        %1936 = vmatpush1.bf16.msra.mxu0 %v1871
        %1937 = vmatprep.subr.bf16.mxu0 %v1874
        %1938 = vmatpush1.bf16.msra.mxu0 %v1873
        %1939 = vmatprep.subr.bf16.mxu0 %v1876
        %1940 = vmatpush1.bf16.msra.mxu0 %v1875
        %1941 = vmatprep.subr.bf16.mxu0 %v1878
        %1942 = vmatpush1.bf16.msra.mxu0 %v1877
        %1943 = vmatprep.subr.bf16.mxu0 %v1880
        %1944 = vmatpush1.bf16.msra.mxu0 %v1879
        %1945 = vmatprep.subr.bf16.mxu0 %v1882
        %1946 = vmatpush1.bf16.msra.mxu0 %v1881
        %1947 = vmatprep.subr.bf16.mxu0 %v1884
        %1948 = vmatpush1.bf16.msra.mxu0 %v1883
        %1949 = vmatprep.subr.bf16.mxu0 %v1886
        %1950 = vmatpush1.bf16.msra.mxu0 %v1885
        %1951 = vmatprep.subr.bf16.mxu0 %v1888
        %1952 = vmatpush1.bf16.msra.mxu0 %v1887
        %1953 = vmatprep.subr.bf16.mxu0 %v1890
        %1954 = vmatpush1.bf16.msra.mxu0 %v1889
        %1955 = vmatprep.subr.bf16.mxu0 %v1892
        %1956 = vmatpush1.bf16.msra.mxu0 %v1891
        %1957 = vmatprep.subr.bf16.mxu0 %v1894
        %1958 = vmatpush1.bf16.msra.mxu0 %v1893
        %1959 = vmatprep.mubr.bf16.mxu0 %v1741
        %1960 = vmatmul.mubr.bf16.gmra.mrb[0].mxu0 %v1740
        %v1961 = vpop.f32.mrb[0].mxu0
        %v1962 = vadd.f32 %v1760, %v1961
        %v1963 = vpop.f32.mrb[0].mxu0
        %v1964 = vadd.f32 %v1764, %v1963
        %v1965 = vpop.f32.mrb[0].mxu0
        %v1966 = vadd.f32 %v1760, %v1965
        %v1967 = vpop.f32.mrb[0].mxu0
        %v1968 = vadd.f32 %v1764, %v1967
        %1969 = vmatprep.mubr.bf16.mxu0 %v1743
        %1970 = vmatmul.mubr.bf16.gmra.mrb[0].mxu0 %v1742
        %v1971 = vpop.f32.mrb[0].mxu0
        %v1972 = vadd.f32 %v1760, %v1971
        %v1973 = vpop.f32.mrb[0].mxu0
        %v1974 = vadd.f32 %v1764, %v1973
        %v1975 = vpop.f32.mrb[0].mxu0
        %v1976 = vadd.f32 %v1760, %v1975
        %v1977 = vpop.f32.mrb[0].mxu0
        %v1978 = vadd.f32 %v1764, %v1977
        %1979 = vmatprep.mubr.bf16.mxu0 %v1745
        %1980 = vmatmul.mubr.bf16.gmra.mrb[0].mxu0 %v1744
        %v1981 = vpop.f32.mrb[0].mxu0
        %v1982 = vadd.f32 %v1760, %v1981
        %v1983 = vpop.f32.mrb[0].mxu0
        %v1984 = vadd.f32 %v1764, %v1983
        %v1985 = vpop.f32.mrb[0].mxu0
        %v1986 = vadd.f32 %v1760, %v1985
        %v1987 = vpop.f32.mrb[0].mxu0
        %v1988 = vadd.f32 %v1764, %v1987
        %1989 = vmatprep.mubr.bf16.mxu0 %v1747
        %1990 = vmatmul.mubr.bf16.gmra.mrb[0].mxu0 %v1746
        %v1991 = vpop.f32.mrb[0].mxu0
        %v1992 = vadd.f32 %v1760, %v1991
        %v1993 = vpop.f32.mrb[0].mxu0
        %v1994 = vadd.f32 %v1764, %v1993
        %v1995 = vpop.f32.mrb[0].mxu0
        %v1996 = vadd.f32 %v1760, %v1995
        %v1997 = vpop.f32.mrb[0].mxu0
        %v1998 = vadd.f32 %v1764, %v1997
        %1999 = vmatprep.mubr.bf16.mxu0 %v1749
        %2000 = vmatmul.mubr.bf16.gmra.mrb[0].mxu0 %v1748
        %v2001 = vpop.f32.mrb[0].mxu0
        %v2002 = vadd.f32 %v1760, %v2001
        %v2003 = vpop.f32.mrb[0].mxu0
        %v2004 = vadd.f32 %v1764, %v2003
        %v2005 = vpop.f32.mrb[0].mxu0
        %v2006 = vadd.f32 %v1760, %v2005
        %v2007 = vpop.f32.mrb[0].mxu0
        %v2008 = vadd.f32 %v1764, %v2007
        %2009 = vmatprep.mubr.bf16.mxu0 %v1751
        %2010 = vmatmul.mubr.bf16.gmra.mrb[0].mxu0 %v1750
        %v2011 = vpop.f32.mrb[0].mxu0
        %v2012 = vadd.f32 %v1760, %v2011
        %v2013 = vpop.f32.mrb[0].mxu0
        %v2014 = vadd.f32 %v1764, %v2013
        %v2015 = vpop.f32.mrb[0].mxu0
        %v2016 = vadd.f32 %v1760, %v2015
        %v2017 = vpop.f32.mrb[0].mxu0
        %v2018 = vadd.f32 %v1764, %v2017
        %2019 = vmatprep.mubr.bf16.mxu0 %v1753
        %2020 = vmatmul.mubr.bf16.gmra.mrb[0].mxu0 %v1752
        %v2021 = vpop.f32.mrb[0].mxu0
        %v2022 = vadd.f32 %v1760, %v2021
        %v2023 = vpop.f32.mrb[0].mxu0
        %v2024 = vadd.f32 %v1764, %v2023
        %v2025 = vpop.f32.mrb[0].mxu0
        %v2026 = vadd.f32 %v1760, %v2025
        %v2027 = vpop.f32.mrb[0].mxu0
        %v2028 = vadd.f32 %v1764, %v2027
        %2029 = vmatprep.mubr.bf16.mxu0 %v1755
        %2030 = vmatmul.mubr.bf16.gmra.mrb[0].mxu0 %v1754
        %v2031 = vpop.f32.mrb[0].mxu0
        %v2032 = vadd.f32 %v1760, %v2031
        %v2033 = vpop.f32.mrb[0].mxu0
        %v2034 = vadd.f32 %v1764, %v2033
        %v2035 = vpop.f32.mrb[0].mxu0
        %v2036 = vadd.f32 %v1760, %v2035
        %v2037 = vpop.f32.mrb[0].mxu0
        %v2038 = vadd.f32 %v1764, %v2037
        %2039 = vdwg.mxu0
        %vm2040 = vcmp.ge.f32.partialorder %v1962, 0.0
        %vm2041 = vcmp.ge.f32.partialorder %v1964, 0.0
        %vm2042 = vcmp.ge.f32.partialorder %v1966, 0.0
        %vm2043 = vcmp.ge.f32.partialorder %v1968, 0.0
        %vm2044 = vcmp.ge.f32.partialorder %v1972, 0.0
        %vm2045 = vcmp.ge.f32.partialorder %v1974, 0.0
        %vm2046 = vcmp.ge.f32.partialorder %v1976, 0.0
        %vm2047 = vcmp.ge.f32.partialorder %v1978, 0.0
        %vm2048 = vcmp.ge.f32.partialorder %v1982, 0.0
        %vm2049 = vcmp.ge.f32.partialorder %v1984, 0.0
        %vm2050 = vcmp.ge.f32.partialorder %v1986, 0.0
        %vm2051 = vcmp.ge.f32.partialorder %v1988, 0.0
        %vm2052 = vcmp.ge.f32.partialorder %v1992, 0.0
        %vm2053 = vcmp.ge.f32.partialorder %v1994, 0.0
        %vm2054 = vcmp.ge.f32.partialorder %v1996, 0.0
        %vm2055 = vcmp.ge.f32.partialorder %v1998, 0.0
        %vm2056 = vcmp.ge.f32.partialorder %v2002, 0.0
        %vm2057 = vcmp.ge.f32.partialorder %v2004, 0.0
        %vm2058 = vcmp.ge.f32.partialorder %v2006, 0.0
        %vm2059 = vcmp.ge.f32.partialorder %v2008, 0.0
        %vm2060 = vcmp.ge.f32.partialorder %v2012, 0.0
        %vm2061 = vcmp.ge.f32.partialorder %v2014, 0.0
        %vm2062 = vcmp.ge.f32.partialorder %v2016, 0.0
        %vm2063 = vcmp.ge.f32.partialorder %v2018, 0.0
        %vm2064 = vcmp.ge.f32.partialorder %v2022, 0.0
        %vm2065 = vcmp.ge.f32.partialorder %v2024, 0.0
        %vm2066 = vcmp.ge.f32.partialorder %v2026, 0.0
        %vm2067 = vcmp.ge.f32.partialorder %v2028, 0.0
        %vm2068 = vcmp.ge.f32.partialorder %v2032, 0.0
        %vm2069 = vcmp.ge.f32.partialorder %v2034, 0.0
        %vm2070 = vcmp.ge.f32.partialorder %v2036, 0.0
        %vm2071 = vcmp.ge.f32.partialorder %v2038, 0.0
        %v2072 = vmul.f32 %v1962, 0.2
        %v2073 = vmul.f32 %v1964, 0.2
        %v2074 = vmul.f32 %v1966, 0.2
        %v2075 = vmul.f32 %v1968, 0.2
        %v2076 = vmul.f32 %v1972, 0.2
        %v2077 = vmul.f32 %v1974, 0.2
        %v2078 = vmul.f32 %v1976, 0.2
        %v2079 = vmul.f32 %v1978, 0.2
        %v2080 = vmul.f32 %v1982, 0.2
        %v2081 = vmul.f32 %v1984, 0.2
        %v2082 = vmul.f32 %v1986, 0.2
        %v2083 = vmul.f32 %v1988, 0.2
        %v2084 = vmul.f32 %v1992, 0.2
        %v2085 = vmul.f32 %v1994, 0.2
        %v2086 = vmul.f32 %v1996, 0.2
        %v2087 = vmul.f32 %v1998, 0.2
        %v2088 = vmul.f32 %v2002, 0.2
        %v2089 = vmul.f32 %v2004, 0.2
        %v2090 = vmul.f32 %v2006, 0.2
        %v2091 = vmul.f32 %v2008, 0.2
        %v2092 = vmul.f32 %v2012, 0.2
        %v2093 = vmul.f32 %v2014, 0.2
        %v2094 = vmul.f32 %v2016, 0.2
        %v2095 = vmul.f32 %v2018, 0.2
        %v2096 = vmul.f32 %v2022, 0.2
        %v2097 = vmul.f32 %v2024, 0.2
        %v2098 = vmul.f32 %v2026, 0.2
        %v2099 = vmul.f32 %v2028, 0.2
        %v2100 = vmul.f32 %v2032, 0.2
        %v2101 = vmul.f32 %v2034, 0.2
        %v2102 = vmul.f32 %v2036, 0.2
        %v2103 = vmul.f32 %v2038, 0.2
        %v2104 = vsel %vm2040, %v1962, %v2072
        %v2105 = vsel %vm2041, %v1964, %v2073
        %v2106 = vsel %vm2042, %v1966, %v2074
        %v2107 = vsel %vm2043, %v1968, %v2075
        %v2108 = vsel %vm2044, %v1972, %v2076
        %v2109 = vsel %vm2045, %v1974, %v2077
        %v2110 = vsel %vm2046, %v1976, %v2078
        %v2111 = vsel %vm2047, %v1978, %v2079
        %v2112 = vsel %vm2048, %v1982, %v2080
        %v2113 = vsel %vm2049, %v1984, %v2081
        %v2114 = vsel %vm2050, %v1986, %v2082
        %v2115 = vsel %vm2051, %v1988, %v2083
        %v2116 = vsel %vm2052, %v1992, %v2084
        %v2117 = vsel %vm2053, %v1994, %v2085
        %v2118 = vsel %vm2054, %v1996, %v2086
        %v2119 = vsel %vm2055, %v1998, %v2087
        %v2120 = vsel %vm2056, %v2002, %v2088
        %v2121 = vsel %vm2057, %v2004, %v2089
        %v2122 = vsel %vm2058, %v2006, %v2090
        %v2123 = vsel %vm2059, %v2008, %v2091
        %v2124 = vsel %vm2060, %v2012, %v2092
        %v2125 = vsel %vm2061, %v2014, %v2093
        %v2126 = vsel %vm2062, %v2016, %v2094
        %v2127 = vsel %vm2063, %v2018, %v2095
        %v2128 = vsel %vm2064, %v2022, %v2096
        %v2129 = vsel %vm2065, %v2024, %v2097
        %v2130 = vsel %vm2066, %v2026, %v2098
        %v2131 = vsel %vm2067, %v2028, %v2099
        %v2132 = vsel %vm2068, %v2032, %v2100
        %v2133 = vsel %vm2069, %v2034, %v2101
        %v2134 = vsel %vm2070, %v2036, %v2102
        %v2135 = vsel %vm2071, %v2038, %v2103
        %s2136 = scalar_lea.vmem [#allocation5], 1024
        %v2137 = vld [vmem:[%s2136] sm:$0xff]
        %v2138 = vld [vmem:[%s2136 + $0x8] sm:$0xff]
        %v2139 = vld [vmem:[%s2136 + $0x10] sm:$0xff]
        %v2140 = vld [vmem:[%s2136 + $0x18] sm:$0xff]
        %v2141 = vld [vmem:[%s2136 + $0x20] sm:$0xff]
        %v2142 = vld [vmem:[%s2136 + $0x28] sm:$0xff]
        %v2143 = vld [vmem:[%s2136 + $0x30] sm:$0xff]
        %v2144 = vld [vmem:[%s2136 + $0x38] sm:$0xff]
        %v2145 = vld [vmem:[%s2136 + $0x40] sm:$0xff]
        %v2146 = vld [vmem:[%s2136 + $0x48] sm:$0xff]
        %v2147 = vld [vmem:[%s2136 + $0x50] sm:$0xff]
        %v2148 = vld [vmem:[%s2136 + $0x58] sm:$0xff]
        %v2149 = vld [vmem:[%s2136 + $0x60] sm:$0xff]
        %v2150 = vld [vmem:[%s2136 + $0x68] sm:$0xff]
        %v2151 = vld [vmem:[%s2136 + $0x70] sm:$0xff]
        %v2152 = vld [vmem:[%s2136 + $0x78] sm:$0xff]
        %v2153 = vld [vmem:[%s2136 + $0x80] sm:$0xff]
        %v2154 = vld [vmem:[%s2136 + $0x88] sm:$0xff]
        %v2155 = vld [vmem:[%s2136 + $0x90] sm:$0xff]
        %v2156 = vld [vmem:[%s2136 + $0x98] sm:$0xff]
        %v2157 = vld [vmem:[%s2136 + $0xa0] sm:$0xff]
        %v2158 = vld [vmem:[%s2136 + $0xa8] sm:$0xff]
        %v2159 = vld [vmem:[%s2136 + $0xb0] sm:$0xff]
        %v2160 = vld [vmem:[%s2136 + $0xb8] sm:$0xff]
        %v2161 = vld [vmem:[%s2136 + $0xc0] sm:$0xff]
        %v2162 = vld [vmem:[%s2136 + $0xc8] sm:$0xff]
        %v2163 = vld [vmem:[%s2136 + $0xd0] sm:$0xff]
        %v2164 = vld [vmem:[%s2136 + $0xd8] sm:$0xff]
        %v2165 = vld [vmem:[%s2136 + $0xe0] sm:$0xff]
        %v2166 = vld [vmem:[%s2136 + $0xe8] sm:$0xff]
        %v2167 = vld [vmem:[%s2136 + $0xf0] sm:$0xff]
        %v2168 = vld [vmem:[%s2136 + $0xf8] sm:$0xff]
        %s2169 = scalar_lea.vmem [#allocation7], 8
        %v2170 = vld [vmem:[%s2169] sm:$0x3]
        %v2171 = vpack.c.bf16 %v2106, %v2104
        %v2172 = vpack.c.bf16 %v2107, %v2105
        %v2173 = vpack.c.bf16 %v2110, %v2108
        %v2174 = vpack.c.bf16 %v2111, %v2109
        %v2175 = vpack.c.bf16 %v2114, %v2112
        %v2176 = vpack.c.bf16 %v2115, %v2113
        %v2177 = vpack.c.bf16 %v2118, %v2116
        %v2178 = vpack.c.bf16 %v2119, %v2117
        %v2179 = vpack.c.bf16 %v2122, %v2120
        %v2180 = vpack.c.bf16 %v2123, %v2121
        %v2181 = vpack.c.bf16 %v2126, %v2124
        %v2182 = vpack.c.bf16 %v2127, %v2125
        %v2183 = vpack.c.bf16 %v2130, %v2128
        %v2184 = vpack.c.bf16 %v2131, %v2129
        %v2185 = vpack.c.bf16 %v2134, %v2132
        %v2186 = vpack.c.bf16 %v2135, %v2133
        %v2188 = vlaneseq
        %v2189 = vshrl.u32 %v2188, 7
        %v2190 = vsub.s32 0, %v2189
        %v2191 = vrot.slane %v2170, %v2190
        %v2192 = vlaneseq
        %v2193 = vshrl.u32 %v2192, 7
        %v2194 = vsub.s32 1, %v2193
        %v2195 = vrot.slane %v2170, %v2194
        %v2230 = vunpack.c.l.b16 %v2137
        %v2231 = vunpack.c.h.b16 %v2137
        %v2232 = vunpack.c.l.b16 %v2138
        %v2233 = vunpack.c.h.b16 %v2138
        %v2234 = vunpack.c.l.b16 %v2139
        %v2235 = vunpack.c.h.b16 %v2139
        %v2236 = vunpack.c.l.b16 %v2140
        %v2237 = vunpack.c.h.b16 %v2140
        %v2238 = vunpack.c.l.b16 %v2141
        %v2239 = vunpack.c.h.b16 %v2141
        %v2240 = vunpack.c.l.b16 %v2142
        %v2241 = vunpack.c.h.b16 %v2142
        %v2242 = vunpack.c.l.b16 %v2143
        %v2243 = vunpack.c.h.b16 %v2143
        %v2244 = vunpack.c.l.b16 %v2144
        %v2245 = vunpack.c.h.b16 %v2144
        %v2246 = vunpack.c.l.b16 %v2145
        %v2247 = vunpack.c.h.b16 %v2145
        %v2248 = vunpack.c.l.b16 %v2146
        %v2249 = vunpack.c.h.b16 %v2146
        %v2250 = vunpack.c.l.b16 %v2147
        %v2251 = vunpack.c.h.b16 %v2147
        %v2252 = vunpack.c.l.b16 %v2148
        %v2253 = vunpack.c.h.b16 %v2148
        %v2254 = vunpack.c.l.b16 %v2149
        %v2255 = vunpack.c.h.b16 %v2149
        %v2256 = vunpack.c.l.b16 %v2150
        %v2257 = vunpack.c.h.b16 %v2150
        %v2258 = vunpack.c.l.b16 %v2151
        %v2259 = vunpack.c.h.b16 %v2151
        %v2260 = vunpack.c.l.b16 %v2152
        %v2261 = vunpack.c.h.b16 %v2152
        %v2262 = vunpack.c.l.b16 %v2153
        %v2263 = vunpack.c.h.b16 %v2153
        %v2264 = vunpack.c.l.b16 %v2154
        %v2265 = vunpack.c.h.b16 %v2154
        %v2266 = vunpack.c.l.b16 %v2155
        %v2267 = vunpack.c.h.b16 %v2155
        %v2268 = vunpack.c.l.b16 %v2156
        %v2269 = vunpack.c.h.b16 %v2156
        %v2270 = vunpack.c.l.b16 %v2157
        %v2271 = vunpack.c.h.b16 %v2157
        %v2272 = vunpack.c.l.b16 %v2158
        %v2273 = vunpack.c.h.b16 %v2158
        %v2274 = vunpack.c.l.b16 %v2159
        %v2275 = vunpack.c.h.b16 %v2159
        %v2276 = vunpack.c.l.b16 %v2160
        %v2277 = vunpack.c.h.b16 %v2160
        %v2278 = vunpack.c.l.b16 %v2161
        %v2279 = vunpack.c.h.b16 %v2161
        %v2280 = vunpack.c.l.b16 %v2162
        %v2281 = vunpack.c.h.b16 %v2162
        %v2282 = vunpack.c.l.b16 %v2163
        %v2283 = vunpack.c.h.b16 %v2163
        %v2284 = vunpack.c.l.b16 %v2164
        %v2285 = vunpack.c.h.b16 %v2164
        %v2286 = vunpack.c.l.b16 %v2165
        %v2287 = vunpack.c.h.b16 %v2165
        %v2288 = vunpack.c.l.b16 %v2166
        %v2289 = vunpack.c.h.b16 %v2166
        %v2290 = vunpack.c.l.b16 %v2167
        %v2291 = vunpack.c.h.b16 %v2167
        %v2292 = vunpack.c.l.b16 %v2168
        %v2293 = vunpack.c.h.b16 %v2168
        %v2294 = vpack.c.b16 %v2232, %v2230
        %v2295 = vpack.c.b16 %v2233, %v2231
        %v2296 = vpack.c.b16 %v2236, %v2234
        %v2297 = vpack.c.b16 %v2237, %v2235
        %v2298 = vpack.c.b16 %v2240, %v2238
        %v2299 = vpack.c.b16 %v2241, %v2239
        %v2300 = vpack.c.b16 %v2244, %v2242
        %v2301 = vpack.c.b16 %v2245, %v2243
        %v2302 = vpack.c.b16 %v2248, %v2246
        %v2303 = vpack.c.b16 %v2249, %v2247
        %v2304 = vpack.c.b16 %v2252, %v2250
        %v2305 = vpack.c.b16 %v2253, %v2251
        %v2306 = vpack.c.b16 %v2256, %v2254
        %v2307 = vpack.c.b16 %v2257, %v2255
        %v2308 = vpack.c.b16 %v2260, %v2258
        %v2309 = vpack.c.b16 %v2261, %v2259
        %v2310 = vpack.c.b16 %v2264, %v2262
        %v2311 = vpack.c.b16 %v2265, %v2263
        %v2312 = vpack.c.b16 %v2268, %v2266
        %v2313 = vpack.c.b16 %v2269, %v2267
        %v2314 = vpack.c.b16 %v2272, %v2270
        %v2315 = vpack.c.b16 %v2273, %v2271
        %v2316 = vpack.c.b16 %v2276, %v2274
        %v2317 = vpack.c.b16 %v2277, %v2275
        %v2318 = vpack.c.b16 %v2280, %v2278
        %v2319 = vpack.c.b16 %v2281, %v2279
        %v2320 = vpack.c.b16 %v2284, %v2282
        %v2321 = vpack.c.b16 %v2285, %v2283
        %v2322 = vpack.c.b16 %v2288, %v2286
        %v2323 = vpack.c.b16 %v2289, %v2287
        %v2324 = vpack.c.b16 %v2292, %v2290
        %v2325 = vpack.c.b16 %v2293, %v2291
        %2358 = vmatprep.subr.bf16.mxu0 %v2295
        %2359 = vmatpush1.bf16.msra.mxu0 %v2294
        %2360 = vmatprep.subr.bf16.mxu0 %v2297
        %2361 = vmatpush1.bf16.msra.mxu0 %v2296
        %2362 = vmatprep.subr.bf16.mxu0 %v2299
        %2363 = vmatpush1.bf16.msra.mxu0 %v2298
        %2364 = vmatprep.subr.bf16.mxu0 %v2301
        %2365 = vmatpush1.bf16.msra.mxu0 %v2300
        %2366 = vmatprep.subr.bf16.mxu0 %v2303
        %2367 = vmatpush1.bf16.msra.mxu0 %v2302
        %2368 = vmatprep.subr.bf16.mxu0 %v2305
        %2369 = vmatpush1.bf16.msra.mxu0 %v2304
        %2370 = vmatprep.subr.bf16.mxu0 %v2307
        %2371 = vmatpush1.bf16.msra.mxu0 %v2306
        %2372 = vmatprep.subr.bf16.mxu0 %v2309
        %2373 = vmatpush1.bf16.msra.mxu0 %v2308
        %2374 = vmatprep.subr.bf16.mxu0 %v2311
        %2375 = vmatpush1.bf16.msra.mxu0 %v2310
        %2376 = vmatprep.subr.bf16.mxu0 %v2313
        %2377 = vmatpush1.bf16.msra.mxu0 %v2312
        %2378 = vmatprep.subr.bf16.mxu0 %v2315
        %2379 = vmatpush1.bf16.msra.mxu0 %v2314
        %2380 = vmatprep.subr.bf16.mxu0 %v2317
        %2381 = vmatpush1.bf16.msra.mxu0 %v2316
        %2382 = vmatprep.subr.bf16.mxu0 %v2319
        %2383 = vmatpush1.bf16.msra.mxu0 %v2318
        %2384 = vmatprep.subr.bf16.mxu0 %v2321
        %2385 = vmatpush1.bf16.msra.mxu0 %v2320
        %2386 = vmatprep.subr.bf16.mxu0 %v2323
        %2387 = vmatpush1.bf16.msra.mxu0 %v2322
        %2388 = vmatprep.subr.bf16.mxu0 %v2325
        %2389 = vmatpush1.bf16.msra.mxu0 %v2324
        %2390 = vmatprep.mubr.bf16.mxu0 %v2172
        %2391 = vmatmul.mubr.bf16.gmra.mrb[0].mxu0 %v2171
        %v2392 = vpop.f32.mrb[0].mxu0
        %v2393 = vadd.f32 %v2191, %v2392
        %v2394 = vpop.f32.mrb[0].mxu0
        %v2395 = vadd.f32 %v2195, %v2394
        %v2396 = vpop.f32.mrb[0].mxu0
        %v2397 = vadd.f32 %v2191, %v2396
        %v2398 = vpop.f32.mrb[0].mxu0
        %v2399 = vadd.f32 %v2195, %v2398
        %2400 = vmatprep.mubr.bf16.mxu0 %v2174
        %2401 = vmatmul.mubr.bf16.gmra.mrb[0].mxu0 %v2173
        %v2402 = vpop.f32.mrb[0].mxu0
        %v2403 = vadd.f32 %v2191, %v2402
        %v2404 = vpop.f32.mrb[0].mxu0
        %v2405 = vadd.f32 %v2195, %v2404
        %v2406 = vpop.f32.mrb[0].mxu0
        %v2407 = vadd.f32 %v2191, %v2406
        %v2408 = vpop.f32.mrb[0].mxu0
        %v2409 = vadd.f32 %v2195, %v2408
        %2410 = vmatprep.mubr.bf16.mxu0 %v2176
        %2411 = vmatmul.mubr.bf16.gmra.mrb[0].mxu0 %v2175
        %v2412 = vpop.f32.mrb[0].mxu0
        %v2413 = vadd.f32 %v2191, %v2412
        %v2414 = vpop.f32.mrb[0].mxu0
        %v2415 = vadd.f32 %v2195, %v2414
        %v2416 = vpop.f32.mrb[0].mxu0
        %v2417 = vadd.f32 %v2191, %v2416
        %v2418 = vpop.f32.mrb[0].mxu0
        %v2419 = vadd.f32 %v2195, %v2418
        %2420 = vmatprep.mubr.bf16.mxu0 %v2178
        %2421 = vmatmul.mubr.bf16.gmra.mrb[0].mxu0 %v2177
        %v2422 = vpop.f32.mrb[0].mxu0
        %v2423 = vadd.f32 %v2191, %v2422
        %v2424 = vpop.f32.mrb[0].mxu0
        %v2425 = vadd.f32 %v2195, %v2424
        %v2426 = vpop.f32.mrb[0].mxu0
        %v2427 = vadd.f32 %v2191, %v2426
        %v2428 = vpop.f32.mrb[0].mxu0
        %v2429 = vadd.f32 %v2195, %v2428
        %2430 = vmatprep.mubr.bf16.mxu0 %v2180
        %2431 = vmatmul.mubr.bf16.gmra.mrb[0].mxu0 %v2179
        %v2432 = vpop.f32.mrb[0].mxu0
        %v2433 = vadd.f32 %v2191, %v2432
        %v2434 = vpop.f32.mrb[0].mxu0
        %v2435 = vadd.f32 %v2195, %v2434
        %v2436 = vpop.f32.mrb[0].mxu0
        %v2437 = vadd.f32 %v2191, %v2436
        %v2438 = vpop.f32.mrb[0].mxu0
        %v2439 = vadd.f32 %v2195, %v2438
        %2440 = vmatprep.mubr.bf16.mxu0 %v2182
        %2441 = vmatmul.mubr.bf16.gmra.mrb[0].mxu0 %v2181
        %v2442 = vpop.f32.mrb[0].mxu0
        %v2443 = vadd.f32 %v2191, %v2442
        %v2444 = vpop.f32.mrb[0].mxu0
        %v2445 = vadd.f32 %v2195, %v2444
        %v2446 = vpop.f32.mrb[0].mxu0
        %v2447 = vadd.f32 %v2191, %v2446
        %v2448 = vpop.f32.mrb[0].mxu0
        %v2449 = vadd.f32 %v2195, %v2448
        %2450 = vmatprep.mubr.bf16.mxu0 %v2184
        %2451 = vmatmul.mubr.bf16.gmra.mrb[0].mxu0 %v2183
        %v2452 = vpop.f32.mrb[0].mxu0
        %v2453 = vadd.f32 %v2191, %v2452
        %v2454 = vpop.f32.mrb[0].mxu0
        %v2455 = vadd.f32 %v2195, %v2454
        %v2456 = vpop.f32.mrb[0].mxu0
        %v2457 = vadd.f32 %v2191, %v2456
        %v2458 = vpop.f32.mrb[0].mxu0
        %v2459 = vadd.f32 %v2195, %v2458
        %2460 = vmatprep.mubr.bf16.mxu0 %v2186
        %2461 = vmatmul.mubr.bf16.gmra.mrb[0].mxu0 %v2185
        %v2462 = vpop.f32.mrb[0].mxu0
        %v2463 = vadd.f32 %v2191, %v2462
        %v2464 = vpop.f32.mrb[0].mxu0
        %v2465 = vadd.f32 %v2195, %v2464
        %v2466 = vpop.f32.mrb[0].mxu0
        %v2467 = vadd.f32 %v2191, %v2466
        %v2468 = vpop.f32.mrb[0].mxu0
        %v2469 = vadd.f32 %v2195, %v2468
        %2470 = vdwg.mxu0
        %vm2471 = vcmp.ge.f32.partialorder %v2393, 0.0
        %vm2472 = vcmp.ge.f32.partialorder %v2395, 0.0
        %vm2473 = vcmp.ge.f32.partialorder %v2397, 0.0
        %vm2474 = vcmp.ge.f32.partialorder %v2399, 0.0
        %vm2475 = vcmp.ge.f32.partialorder %v2403, 0.0
        %vm2476 = vcmp.ge.f32.partialorder %v2405, 0.0
        %vm2477 = vcmp.ge.f32.partialorder %v2407, 0.0
        %vm2478 = vcmp.ge.f32.partialorder %v2409, 0.0
        %vm2479 = vcmp.ge.f32.partialorder %v2413, 0.0
        %vm2480 = vcmp.ge.f32.partialorder %v2415, 0.0
        %vm2481 = vcmp.ge.f32.partialorder %v2417, 0.0
        %vm2482 = vcmp.ge.f32.partialorder %v2419, 0.0
        %vm2483 = vcmp.ge.f32.partialorder %v2423, 0.0
        %vm2484 = vcmp.ge.f32.partialorder %v2425, 0.0
        %vm2485 = vcmp.ge.f32.partialorder %v2427, 0.0
        %vm2486 = vcmp.ge.f32.partialorder %v2429, 0.0
        %vm2487 = vcmp.ge.f32.partialorder %v2433, 0.0
        %vm2488 = vcmp.ge.f32.partialorder %v2435, 0.0
        %vm2489 = vcmp.ge.f32.partialorder %v2437, 0.0
        %vm2490 = vcmp.ge.f32.partialorder %v2439, 0.0
        %vm2491 = vcmp.ge.f32.partialorder %v2443, 0.0
        %vm2492 = vcmp.ge.f32.partialorder %v2445, 0.0
        %vm2493 = vcmp.ge.f32.partialorder %v2447, 0.0
        %vm2494 = vcmp.ge.f32.partialorder %v2449, 0.0
        %vm2495 = vcmp.ge.f32.partialorder %v2453, 0.0
        %vm2496 = vcmp.ge.f32.partialorder %v2455, 0.0
        %vm2497 = vcmp.ge.f32.partialorder %v2457, 0.0
        %vm2498 = vcmp.ge.f32.partialorder %v2459, 0.0
        %vm2499 = vcmp.ge.f32.partialorder %v2463, 0.0
        %vm2500 = vcmp.ge.f32.partialorder %v2465, 0.0
        %vm2501 = vcmp.ge.f32.partialorder %v2467, 0.0
        %vm2502 = vcmp.ge.f32.partialorder %v2469, 0.0
        %v2503 = vmul.f32 %v2393, 0.2
        %v2504 = vmul.f32 %v2395, 0.2
        %v2505 = vmul.f32 %v2397, 0.2
        %v2506 = vmul.f32 %v2399, 0.2
        %v2507 = vmul.f32 %v2403, 0.2
        %v2508 = vmul.f32 %v2405, 0.2
        %v2509 = vmul.f32 %v2407, 0.2
        %v2510 = vmul.f32 %v2409, 0.2
        %v2511 = vmul.f32 %v2413, 0.2
        %v2512 = vmul.f32 %v2415, 0.2
        %v2513 = vmul.f32 %v2417, 0.2
        %v2514 = vmul.f32 %v2419, 0.2
        %v2515 = vmul.f32 %v2423, 0.2
        %v2516 = vmul.f32 %v2425, 0.2
        %v2517 = vmul.f32 %v2427, 0.2
        %v2518 = vmul.f32 %v2429, 0.2
        %v2519 = vmul.f32 %v2433, 0.2
        %v2520 = vmul.f32 %v2435, 0.2
        %v2521 = vmul.f32 %v2437, 0.2
        %v2522 = vmul.f32 %v2439, 0.2
        %v2523 = vmul.f32 %v2443, 0.2
        %v2524 = vmul.f32 %v2445, 0.2
        %v2525 = vmul.f32 %v2447, 0.2
        %v2526 = vmul.f32 %v2449, 0.2
        %v2527 = vmul.f32 %v2453, 0.2
        %v2528 = vmul.f32 %v2455, 0.2
        %v2529 = vmul.f32 %v2457, 0.2
        %v2530 = vmul.f32 %v2459, 0.2
        %v2531 = vmul.f32 %v2463, 0.2
        %v2532 = vmul.f32 %v2465, 0.2
        %v2533 = vmul.f32 %v2467, 0.2
        %v2534 = vmul.f32 %v2469, 0.2
        %v2535 = vsel %vm2471, %v2393, %v2503
        %v2536 = vsel %vm2472, %v2395, %v2504
        %v2537 = vsel %vm2473, %v2397, %v2505
        %v2538 = vsel %vm2474, %v2399, %v2506
        %v2539 = vsel %vm2475, %v2403, %v2507
        %v2540 = vsel %vm2476, %v2405, %v2508
        %v2541 = vsel %vm2477, %v2407, %v2509
        %v2542 = vsel %vm2478, %v2409, %v2510
        %v2543 = vsel %vm2479, %v2413, %v2511
        %v2544 = vsel %vm2480, %v2415, %v2512
        %v2545 = vsel %vm2481, %v2417, %v2513
        %v2546 = vsel %vm2482, %v2419, %v2514
        %v2547 = vsel %vm2483, %v2423, %v2515
        %v2548 = vsel %vm2484, %v2425, %v2516
        %v2549 = vsel %vm2485, %v2427, %v2517
        %v2550 = vsel %vm2486, %v2429, %v2518
        %v2551 = vsel %vm2487, %v2433, %v2519
        %v2552 = vsel %vm2488, %v2435, %v2520
        %v2553 = vsel %vm2489, %v2437, %v2521
        %v2554 = vsel %vm2490, %v2439, %v2522
        %v2555 = vsel %vm2491, %v2443, %v2523
        %v2556 = vsel %vm2492, %v2445, %v2524
        %v2557 = vsel %vm2493, %v2447, %v2525
        %v2558 = vsel %vm2494, %v2449, %v2526
        %v2559 = vsel %vm2495, %v2453, %v2527
        %v2560 = vsel %vm2496, %v2455, %v2528
        %v2561 = vsel %vm2497, %v2457, %v2529
        %v2562 = vsel %vm2498, %v2459, %v2530
        %v2563 = vsel %vm2499, %v2463, %v2531
        %v2564 = vsel %vm2500, %v2465, %v2532
        %v2565 = vsel %vm2501, %v2467, %v2533
        %v2566 = vsel %vm2502, %v2469, %v2534
        %s2567 = scalar_lea.vmem [#allocation5], 1280
        %v2568 = vld [vmem:[%s2567] sm:$0xff]
        %v2569 = vld [vmem:[%s2567 + $0x8] sm:$0xff]
        %v2570 = vld [vmem:[%s2567 + $0x10] sm:$0xff]
        %v2571 = vld [vmem:[%s2567 + $0x18] sm:$0xff]
        %v2572 = vld [vmem:[%s2567 + $0x20] sm:$0xff]
        %v2573 = vld [vmem:[%s2567 + $0x28] sm:$0xff]
        %v2574 = vld [vmem:[%s2567 + $0x30] sm:$0xff]
        %v2575 = vld [vmem:[%s2567 + $0x38] sm:$0xff]
        %v2576 = vld [vmem:[%s2567 + $0x40] sm:$0xff]
        %v2577 = vld [vmem:[%s2567 + $0x48] sm:$0xff]
        %v2578 = vld [vmem:[%s2567 + $0x50] sm:$0xff]
        %v2579 = vld [vmem:[%s2567 + $0x58] sm:$0xff]
        %v2580 = vld [vmem:[%s2567 + $0x60] sm:$0xff]
        %v2581 = vld [vmem:[%s2567 + $0x68] sm:$0xff]
        %v2582 = vld [vmem:[%s2567 + $0x70] sm:$0xff]
        %v2583 = vld [vmem:[%s2567 + $0x78] sm:$0xff]
        %v2584 = vld [vmem:[%s2567 + $0x80] sm:$0xff]
        %v2585 = vld [vmem:[%s2567 + $0x88] sm:$0xff]
        %v2586 = vld [vmem:[%s2567 + $0x90] sm:$0xff]
        %v2587 = vld [vmem:[%s2567 + $0x98] sm:$0xff]
        %v2588 = vld [vmem:[%s2567 + $0xa0] sm:$0xff]
        %v2589 = vld [vmem:[%s2567 + $0xa8] sm:$0xff]
        %v2590 = vld [vmem:[%s2567 + $0xb0] sm:$0xff]
        %v2591 = vld [vmem:[%s2567 + $0xb8] sm:$0xff]
        %v2592 = vld [vmem:[%s2567 + $0xc0] sm:$0xff]
        %v2593 = vld [vmem:[%s2567 + $0xc8] sm:$0xff]
        %v2594 = vld [vmem:[%s2567 + $0xd0] sm:$0xff]
        %v2595 = vld [vmem:[%s2567 + $0xd8] sm:$0xff]
        %v2596 = vld [vmem:[%s2567 + $0xe0] sm:$0xff]
        %v2597 = vld [vmem:[%s2567 + $0xe8] sm:$0xff]
        %v2598 = vld [vmem:[%s2567 + $0xf0] sm:$0xff]
        %v2599 = vld [vmem:[%s2567 + $0xf8] sm:$0xff]
        %s2600 = scalar_lea.vmem [#allocation7], 10
        %v2601 = vld [vmem:[%s2600] sm:$0x3]
        %v2602 = vpack.c.bf16 %v2537, %v2535
        %v2603 = vpack.c.bf16 %v2538, %v2536
        %v2604 = vpack.c.bf16 %v2541, %v2539
        %v2605 = vpack.c.bf16 %v2542, %v2540
        %v2606 = vpack.c.bf16 %v2545, %v2543
        %v2607 = vpack.c.bf16 %v2546, %v2544
        %v2608 = vpack.c.bf16 %v2549, %v2547
        %v2609 = vpack.c.bf16 %v2550, %v2548
        %v2610 = vpack.c.bf16 %v2553, %v2551
        %v2611 = vpack.c.bf16 %v2554, %v2552
        %v2612 = vpack.c.bf16 %v2557, %v2555
        %v2613 = vpack.c.bf16 %v2558, %v2556
        %v2614 = vpack.c.bf16 %v2561, %v2559
        %v2615 = vpack.c.bf16 %v2562, %v2560
        %v2616 = vpack.c.bf16 %v2565, %v2563
        %v2617 = vpack.c.bf16 %v2566, %v2564
        %v2619 = vlaneseq
        %v2620 = vshrl.u32 %v2619, 7
        %v2621 = vsub.s32 0, %v2620
        %v2622 = vrot.slane %v2601, %v2621
        %v2623 = vlaneseq
        %v2624 = vshrl.u32 %v2623, 7
        %v2625 = vsub.s32 1, %v2624
        %v2626 = vrot.slane %v2601, %v2625
        %v2661 = vunpack.c.l.b16 %v2568
        %v2662 = vunpack.c.h.b16 %v2568
        %v2663 = vunpack.c.l.b16 %v2569
        %v2664 = vunpack.c.h.b16 %v2569
        %v2665 = vunpack.c.l.b16 %v2570
        %v2666 = vunpack.c.h.b16 %v2570
        %v2667 = vunpack.c.l.b16 %v2571
        %v2668 = vunpack.c.h.b16 %v2571
        %v2669 = vunpack.c.l.b16 %v2572
        %v2670 = vunpack.c.h.b16 %v2572
        %v2671 = vunpack.c.l.b16 %v2573
        %v2672 = vunpack.c.h.b16 %v2573
        %v2673 = vunpack.c.l.b16 %v2574
        %v2674 = vunpack.c.h.b16 %v2574
        %v2675 = vunpack.c.l.b16 %v2575
        %v2676 = vunpack.c.h.b16 %v2575
        %v2677 = vunpack.c.l.b16 %v2576
        %v2678 = vunpack.c.h.b16 %v2576
        %v2679 = vunpack.c.l.b16 %v2577
        %v2680 = vunpack.c.h.b16 %v2577
        %v2681 = vunpack.c.l.b16 %v2578
        %v2682 = vunpack.c.h.b16 %v2578
        %v2683 = vunpack.c.l.b16 %v2579
        %v2684 = vunpack.c.h.b16 %v2579
        %v2685 = vunpack.c.l.b16 %v2580
        %v2686 = vunpack.c.h.b16 %v2580
        %v2687 = vunpack.c.l.b16 %v2581
        %v2688 = vunpack.c.h.b16 %v2581
        %v2689 = vunpack.c.l.b16 %v2582
        %v2690 = vunpack.c.h.b16 %v2582
        %v2691 = vunpack.c.l.b16 %v2583
        %v2692 = vunpack.c.h.b16 %v2583
        %v2693 = vunpack.c.l.b16 %v2584
        %v2694 = vunpack.c.h.b16 %v2584
        %v2695 = vunpack.c.l.b16 %v2585
        %v2696 = vunpack.c.h.b16 %v2585
        %v2697 = vunpack.c.l.b16 %v2586
        %v2698 = vunpack.c.h.b16 %v2586
        %v2699 = vunpack.c.l.b16 %v2587
        %v2700 = vunpack.c.h.b16 %v2587
        %v2701 = vunpack.c.l.b16 %v2588
        %v2702 = vunpack.c.h.b16 %v2588
        %v2703 = vunpack.c.l.b16 %v2589
        %v2704 = vunpack.c.h.b16 %v2589
        %v2705 = vunpack.c.l.b16 %v2590
        %v2706 = vunpack.c.h.b16 %v2590
        %v2707 = vunpack.c.l.b16 %v2591
        %v2708 = vunpack.c.h.b16 %v2591
        %v2709 = vunpack.c.l.b16 %v2592
        %v2710 = vunpack.c.h.b16 %v2592
        %v2711 = vunpack.c.l.b16 %v2593
        %v2712 = vunpack.c.h.b16 %v2593
        %v2713 = vunpack.c.l.b16 %v2594
        %v2714 = vunpack.c.h.b16 %v2594
        %v2715 = vunpack.c.l.b16 %v2595
        %v2716 = vunpack.c.h.b16 %v2595
        %v2717 = vunpack.c.l.b16 %v2596
        %v2718 = vunpack.c.h.b16 %v2596
        %v2719 = vunpack.c.l.b16 %v2597
        %v2720 = vunpack.c.h.b16 %v2597
        %v2721 = vunpack.c.l.b16 %v2598
        %v2722 = vunpack.c.h.b16 %v2598
        %v2723 = vunpack.c.l.b16 %v2599
        %v2724 = vunpack.c.h.b16 %v2599
        %v2725 = vpack.c.b16 %v2663, %v2661
        %v2726 = vpack.c.b16 %v2664, %v2662
        %v2727 = vpack.c.b16 %v2667, %v2665
        %v2728 = vpack.c.b16 %v2668, %v2666
        %v2729 = vpack.c.b16 %v2671, %v2669
        %v2730 = vpack.c.b16 %v2672, %v2670
        %v2731 = vpack.c.b16 %v2675, %v2673
        %v2732 = vpack.c.b16 %v2676, %v2674
        %v2733 = vpack.c.b16 %v2679, %v2677
        %v2734 = vpack.c.b16 %v2680, %v2678
        %v2735 = vpack.c.b16 %v2683, %v2681
        %v2736 = vpack.c.b16 %v2684, %v2682
        %v2737 = vpack.c.b16 %v2687, %v2685
        %v2738 = vpack.c.b16 %v2688, %v2686
        %v2739 = vpack.c.b16 %v2691, %v2689
        %v2740 = vpack.c.b16 %v2692, %v2690
        %v2741 = vpack.c.b16 %v2695, %v2693
        %v2742 = vpack.c.b16 %v2696, %v2694
        %v2743 = vpack.c.b16 %v2699, %v2697
        %v2744 = vpack.c.b16 %v2700, %v2698
        %v2745 = vpack.c.b16 %v2703, %v2701
        %v2746 = vpack.c.b16 %v2704, %v2702
        %v2747 = vpack.c.b16 %v2707, %v2705
        %v2748 = vpack.c.b16 %v2708, %v2706
        %v2749 = vpack.c.b16 %v2711, %v2709
        %v2750 = vpack.c.b16 %v2712, %v2710
        %v2751 = vpack.c.b16 %v2715, %v2713
        %v2752 = vpack.c.b16 %v2716, %v2714
        %v2753 = vpack.c.b16 %v2719, %v2717
        %v2754 = vpack.c.b16 %v2720, %v2718
        %v2755 = vpack.c.b16 %v2723, %v2721
        %v2756 = vpack.c.b16 %v2724, %v2722
        %2789 = vmatprep.subr.bf16.mxu0 %v2726
        %2790 = vmatpush1.bf16.msra.mxu0 %v2725
        %2791 = vmatprep.subr.bf16.mxu0 %v2728
        %2792 = vmatpush1.bf16.msra.mxu0 %v2727
        %2793 = vmatprep.subr.bf16.mxu0 %v2730
        %2794 = vmatpush1.bf16.msra.mxu0 %v2729
        %2795 = vmatprep.subr.bf16.mxu0 %v2732
        %2796 = vmatpush1.bf16.msra.mxu0 %v2731
        %2797 = vmatprep.subr.bf16.mxu0 %v2734
        %2798 = vmatpush1.bf16.msra.mxu0 %v2733
        %2799 = vmatprep.subr.bf16.mxu0 %v2736
        %2800 = vmatpush1.bf16.msra.mxu0 %v2735
        %2801 = vmatprep.subr.bf16.mxu0 %v2738
        %2802 = vmatpush1.bf16.msra.mxu0 %v2737
        %2803 = vmatprep.subr.bf16.mxu0 %v2740
        %2804 = vmatpush1.bf16.msra.mxu0 %v2739
        %2805 = vmatprep.subr.bf16.mxu0 %v2742
        %2806 = vmatpush1.bf16.msra.mxu0 %v2741
        %2807 = vmatprep.subr.bf16.mxu0 %v2744
        %2808 = vmatpush1.bf16.msra.mxu0 %v2743
        %2809 = vmatprep.subr.bf16.mxu0 %v2746
        %2810 = vmatpush1.bf16.msra.mxu0 %v2745
        %2811 = vmatprep.subr.bf16.mxu0 %v2748
        %2812 = vmatpush1.bf16.msra.mxu0 %v2747
        %2813 = vmatprep.subr.bf16.mxu0 %v2750
        %2814 = vmatpush1.bf16.msra.mxu0 %v2749
        %2815 = vmatprep.subr.bf16.mxu0 %v2752
        %2816 = vmatpush1.bf16.msra.mxu0 %v2751
        %2817 = vmatprep.subr.bf16.mxu0 %v2754
        %2818 = vmatpush1.bf16.msra.mxu0 %v2753
        %2819 = vmatprep.subr.bf16.mxu0 %v2756
        %2820 = vmatpush1.bf16.msra.mxu0 %v2755
        %2821 = vmatprep.mubr.bf16.mxu0 %v2603
        %2822 = vmatmul.mubr.bf16.gmra.mrb[0].mxu0 %v2602
        %v2823 = vpop.f32.mrb[0].mxu0
        %v2824 = vadd.f32 %v2622, %v2823
        %v2825 = vpop.f32.mrb[0].mxu0
        %v2826 = vadd.f32 %v2626, %v2825
        %v2827 = vpop.f32.mrb[0].mxu0
        %v2828 = vadd.f32 %v2622, %v2827
        %v2829 = vpop.f32.mrb[0].mxu0
        %v2830 = vadd.f32 %v2626, %v2829
        %2831 = vmatprep.mubr.bf16.mxu0 %v2605
        %2832 = vmatmul.mubr.bf16.gmra.mrb[0].mxu0 %v2604
        %v2833 = vpop.f32.mrb[0].mxu0
        %v2834 = vadd.f32 %v2622, %v2833
        %v2835 = vpop.f32.mrb[0].mxu0
        %v2836 = vadd.f32 %v2626, %v2835
        %v2837 = vpop.f32.mrb[0].mxu0
        %v2838 = vadd.f32 %v2622, %v2837
        %v2839 = vpop.f32.mrb[0].mxu0
        %v2840 = vadd.f32 %v2626, %v2839
        %2841 = vmatprep.mubr.bf16.mxu0 %v2607
        %2842 = vmatmul.mubr.bf16.gmra.mrb[0].mxu0 %v2606
        %v2843 = vpop.f32.mrb[0].mxu0
        %v2844 = vadd.f32 %v2622, %v2843
        %v2845 = vpop.f32.mrb[0].mxu0
        %v2846 = vadd.f32 %v2626, %v2845
        %v2847 = vpop.f32.mrb[0].mxu0
        %v2848 = vadd.f32 %v2622, %v2847
        %v2849 = vpop.f32.mrb[0].mxu0
        %v2850 = vadd.f32 %v2626, %v2849
        %2851 = vmatprep.mubr.bf16.mxu0 %v2609
        %2852 = vmatmul.mubr.bf16.gmra.mrb[0].mxu0 %v2608
        %v2853 = vpop.f32.mrb[0].mxu0
        %v2854 = vadd.f32 %v2622, %v2853
        %v2855 = vpop.f32.mrb[0].mxu0
        %v2856 = vadd.f32 %v2626, %v2855
        %v2857 = vpop.f32.mrb[0].mxu0
        %v2858 = vadd.f32 %v2622, %v2857
        %v2859 = vpop.f32.mrb[0].mxu0
        %v2860 = vadd.f32 %v2626, %v2859
        %2861 = vmatprep.mubr.bf16.mxu0 %v2611
        %2862 = vmatmul.mubr.bf16.gmra.mrb[0].mxu0 %v2610
        %v2863 = vpop.f32.mrb[0].mxu0
        %v2864 = vadd.f32 %v2622, %v2863
        %v2865 = vpop.f32.mrb[0].mxu0
        %v2866 = vadd.f32 %v2626, %v2865
        %v2867 = vpop.f32.mrb[0].mxu0
        %v2868 = vadd.f32 %v2622, %v2867
        %v2869 = vpop.f32.mrb[0].mxu0
        %v2870 = vadd.f32 %v2626, %v2869
        %2871 = vmatprep.mubr.bf16.mxu0 %v2613
        %2872 = vmatmul.mubr.bf16.gmra.mrb[0].mxu0 %v2612
        %v2873 = vpop.f32.mrb[0].mxu0
        %v2874 = vadd.f32 %v2622, %v2873
        %v2875 = vpop.f32.mrb[0].mxu0
        %v2876 = vadd.f32 %v2626, %v2875
        %v2877 = vpop.f32.mrb[0].mxu0
        %v2878 = vadd.f32 %v2622, %v2877
        %v2879 = vpop.f32.mrb[0].mxu0
        %v2880 = vadd.f32 %v2626, %v2879
        %2881 = vmatprep.mubr.bf16.mxu0 %v2615
        %2882 = vmatmul.mubr.bf16.gmra.mrb[0].mxu0 %v2614
        %v2883 = vpop.f32.mrb[0].mxu0
        %v2884 = vadd.f32 %v2622, %v2883
        %v2885 = vpop.f32.mrb[0].mxu0
        %v2886 = vadd.f32 %v2626, %v2885
        %v2887 = vpop.f32.mrb[0].mxu0
        %v2888 = vadd.f32 %v2622, %v2887
        %v2889 = vpop.f32.mrb[0].mxu0
        %v2890 = vadd.f32 %v2626, %v2889
        %2891 = vmatprep.mubr.bf16.mxu0 %v2617
        %2892 = vmatmul.mubr.bf16.gmra.mrb[0].mxu0 %v2616
        %v2893 = vpop.f32.mrb[0].mxu0
        %v2894 = vadd.f32 %v2622, %v2893
        %v2895 = vpop.f32.mrb[0].mxu0
        %v2896 = vadd.f32 %v2626, %v2895
        %v2897 = vpop.f32.mrb[0].mxu0
        %v2898 = vadd.f32 %v2622, %v2897
        %v2899 = vpop.f32.mrb[0].mxu0
        %v2900 = vadd.f32 %v2626, %v2899
        %2901 = vdwg.mxu0
        %vm2902 = vcmp.ge.f32.partialorder %v2824, 0.0
        %vm2903 = vcmp.ge.f32.partialorder %v2826, 0.0
        %vm2904 = vcmp.ge.f32.partialorder %v2828, 0.0
        %vm2905 = vcmp.ge.f32.partialorder %v2830, 0.0
        %vm2906 = vcmp.ge.f32.partialorder %v2834, 0.0
        %vm2907 = vcmp.ge.f32.partialorder %v2836, 0.0
        %vm2908 = vcmp.ge.f32.partialorder %v2838, 0.0
        %vm2909 = vcmp.ge.f32.partialorder %v2840, 0.0
        %vm2910 = vcmp.ge.f32.partialorder %v2844, 0.0
        %vm2911 = vcmp.ge.f32.partialorder %v2846, 0.0
        %vm2912 = vcmp.ge.f32.partialorder %v2848, 0.0
        %vm2913 = vcmp.ge.f32.partialorder %v2850, 0.0
        %vm2914 = vcmp.ge.f32.partialorder %v2854, 0.0
        %vm2915 = vcmp.ge.f32.partialorder %v2856, 0.0
        %vm2916 = vcmp.ge.f32.partialorder %v2858, 0.0
        %vm2917 = vcmp.ge.f32.partialorder %v2860, 0.0
        %vm2918 = vcmp.ge.f32.partialorder %v2864, 0.0
        %vm2919 = vcmp.ge.f32.partialorder %v2866, 0.0
        %vm2920 = vcmp.ge.f32.partialorder %v2868, 0.0
        %vm2921 = vcmp.ge.f32.partialorder %v2870, 0.0
        %vm2922 = vcmp.ge.f32.partialorder %v2874, 0.0
        %vm2923 = vcmp.ge.f32.partialorder %v2876, 0.0
        %vm2924 = vcmp.ge.f32.partialorder %v2878, 0.0
        %vm2925 = vcmp.ge.f32.partialorder %v2880, 0.0
        %vm2926 = vcmp.ge.f32.partialorder %v2884, 0.0
        %vm2927 = vcmp.ge.f32.partialorder %v2886, 0.0
        %vm2928 = vcmp.ge.f32.partialorder %v2888, 0.0
        %vm2929 = vcmp.ge.f32.partialorder %v2890, 0.0
        %vm2930 = vcmp.ge.f32.partialorder %v2894, 0.0
        %vm2931 = vcmp.ge.f32.partialorder %v2896, 0.0
        %vm2932 = vcmp.ge.f32.partialorder %v2898, 0.0
        %vm2933 = vcmp.ge.f32.partialorder %v2900, 0.0
        %v2934 = vmul.f32 %v2824, 0.2
        %v2935 = vmul.f32 %v2826, 0.2
        %v2936 = vmul.f32 %v2828, 0.2
        %v2937 = vmul.f32 %v2830, 0.2
        %v2938 = vmul.f32 %v2834, 0.2
        %v2939 = vmul.f32 %v2836, 0.2
        %v2940 = vmul.f32 %v2838, 0.2
        %v2941 = vmul.f32 %v2840, 0.2
        %v2942 = vmul.f32 %v2844, 0.2
        %v2943 = vmul.f32 %v2846, 0.2
        %v2944 = vmul.f32 %v2848, 0.2
        %v2945 = vmul.f32 %v2850, 0.2
        %v2946 = vmul.f32 %v2854, 0.2
        %v2947 = vmul.f32 %v2856, 0.2
        %v2948 = vmul.f32 %v2858, 0.2
        %v2949 = vmul.f32 %v2860, 0.2
        %v2950 = vmul.f32 %v2864, 0.2
        %v2951 = vmul.f32 %v2866, 0.2
        %v2952 = vmul.f32 %v2868, 0.2
        %v2953 = vmul.f32 %v2870, 0.2
        %v2954 = vmul.f32 %v2874, 0.2
        %v2955 = vmul.f32 %v2876, 0.2
        %v2956 = vmul.f32 %v2878, 0.2
        %v2957 = vmul.f32 %v2880, 0.2
        %v2958 = vmul.f32 %v2884, 0.2
        %v2959 = vmul.f32 %v2886, 0.2
        %v2960 = vmul.f32 %v2888, 0.2
        %v2961 = vmul.f32 %v2890, 0.2
        %v2962 = vmul.f32 %v2894, 0.2
        %v2963 = vmul.f32 %v2896, 0.2
        %v2964 = vmul.f32 %v2898, 0.2
        %v2965 = vmul.f32 %v2900, 0.2
        %v2966 = vsel %vm2902, %v2824, %v2934
        %v2967 = vsel %vm2903, %v2826, %v2935
        %v2968 = vsel %vm2904, %v2828, %v2936
        %v2969 = vsel %vm2905, %v2830, %v2937
        %v2970 = vsel %vm2906, %v2834, %v2938
        %v2971 = vsel %vm2907, %v2836, %v2939
        %v2972 = vsel %vm2908, %v2838, %v2940
        %v2973 = vsel %vm2909, %v2840, %v2941
        %v2974 = vsel %vm2910, %v2844, %v2942
        %v2975 = vsel %vm2911, %v2846, %v2943
        %v2976 = vsel %vm2912, %v2848, %v2944
        %v2977 = vsel %vm2913, %v2850, %v2945
        %v2978 = vsel %vm2914, %v2854, %v2946
        %v2979 = vsel %vm2915, %v2856, %v2947
        %v2980 = vsel %vm2916, %v2858, %v2948
        %v2981 = vsel %vm2917, %v2860, %v2949
        %v2982 = vsel %vm2918, %v2864, %v2950
        %v2983 = vsel %vm2919, %v2866, %v2951
        %v2984 = vsel %vm2920, %v2868, %v2952
        %v2985 = vsel %vm2921, %v2870, %v2953
        %v2986 = vsel %vm2922, %v2874, %v2954
        %v2987 = vsel %vm2923, %v2876, %v2955
        %v2988 = vsel %vm2924, %v2878, %v2956
        %v2989 = vsel %vm2925, %v2880, %v2957
        %v2990 = vsel %vm2926, %v2884, %v2958
        %v2991 = vsel %vm2927, %v2886, %v2959
        %v2992 = vsel %vm2928, %v2888, %v2960
        %v2993 = vsel %vm2929, %v2890, %v2961
        %v2994 = vsel %vm2930, %v2894, %v2962
        %v2995 = vsel %vm2931, %v2896, %v2963
        %v2996 = vsel %vm2932, %v2898, %v2964
        %v2997 = vsel %vm2933, %v2900, %v2965
        %s2998 = scalar_lea.vmem [#allocation5], 1536
        %v2999 = vld [vmem:[%s2998] sm:$0xff]
        %v3000 = vld [vmem:[%s2998 + $0x8] sm:$0xff]
        %v3001 = vld [vmem:[%s2998 + $0x10] sm:$0xff]
        %v3002 = vld [vmem:[%s2998 + $0x18] sm:$0xff]
        %v3003 = vld [vmem:[%s2998 + $0x20] sm:$0xff]
        %v3004 = vld [vmem:[%s2998 + $0x28] sm:$0xff]
        %v3005 = vld [vmem:[%s2998 + $0x30] sm:$0xff]
        %v3006 = vld [vmem:[%s2998 + $0x38] sm:$0xff]
        %v3007 = vld [vmem:[%s2998 + $0x40] sm:$0xff]
        %v3008 = vld [vmem:[%s2998 + $0x48] sm:$0xff]
        %v3009 = vld [vmem:[%s2998 + $0x50] sm:$0xff]
        %v3010 = vld [vmem:[%s2998 + $0x58] sm:$0xff]
        %v3011 = vld [vmem:[%s2998 + $0x60] sm:$0xff]
        %v3012 = vld [vmem:[%s2998 + $0x68] sm:$0xff]
        %v3013 = vld [vmem:[%s2998 + $0x70] sm:$0xff]
        %v3014 = vld [vmem:[%s2998 + $0x78] sm:$0xff]
        %v3015 = vld [vmem:[%s2998 + $0x80] sm:$0xff]
        %v3016 = vld [vmem:[%s2998 + $0x88] sm:$0xff]
        %v3017 = vld [vmem:[%s2998 + $0x90] sm:$0xff]
        %v3018 = vld [vmem:[%s2998 + $0x98] sm:$0xff]
        %v3019 = vld [vmem:[%s2998 + $0xa0] sm:$0xff]
        %v3020 = vld [vmem:[%s2998 + $0xa8] sm:$0xff]
        %v3021 = vld [vmem:[%s2998 + $0xb0] sm:$0xff]
        %v3022 = vld [vmem:[%s2998 + $0xb8] sm:$0xff]
        %v3023 = vld [vmem:[%s2998 + $0xc0] sm:$0xff]
        %v3024 = vld [vmem:[%s2998 + $0xc8] sm:$0xff]
        %v3025 = vld [vmem:[%s2998 + $0xd0] sm:$0xff]
        %v3026 = vld [vmem:[%s2998 + $0xd8] sm:$0xff]
        %v3027 = vld [vmem:[%s2998 + $0xe0] sm:$0xff]
        %v3028 = vld [vmem:[%s2998 + $0xe8] sm:$0xff]
        %v3029 = vld [vmem:[%s2998 + $0xf0] sm:$0xff]
        %v3030 = vld [vmem:[%s2998 + $0xf8] sm:$0xff]
        %s3031 = scalar_lea.vmem [#allocation7], 12
        %v3032 = vld [vmem:[%s3031] sm:$0x3]
        %v3033 = vpack.c.bf16 %v2968, %v2966
        %v3034 = vpack.c.bf16 %v2969, %v2967
        %v3035 = vpack.c.bf16 %v2972, %v2970
        %v3036 = vpack.c.bf16 %v2973, %v2971
        %v3037 = vpack.c.bf16 %v2976, %v2974
        %v3038 = vpack.c.bf16 %v2977, %v2975
        %v3039 = vpack.c.bf16 %v2980, %v2978
        %v3040 = vpack.c.bf16 %v2981, %v2979
        %v3041 = vpack.c.bf16 %v2984, %v2982
        %v3042 = vpack.c.bf16 %v2985, %v2983
        %v3043 = vpack.c.bf16 %v2988, %v2986
        %v3044 = vpack.c.bf16 %v2989, %v2987
        %v3045 = vpack.c.bf16 %v2992, %v2990
        %v3046 = vpack.c.bf16 %v2993, %v2991
        %v3047 = vpack.c.bf16 %v2996, %v2994
        %v3048 = vpack.c.bf16 %v2997, %v2995
        %v3050 = vlaneseq
        %v3051 = vshrl.u32 %v3050, 7
        %v3052 = vsub.s32 0, %v3051
        %v3053 = vrot.slane %v3032, %v3052
        %v3054 = vlaneseq
        %v3055 = vshrl.u32 %v3054, 7
        %v3056 = vsub.s32 1, %v3055
        %v3057 = vrot.slane %v3032, %v3056
        %v3092 = vunpack.c.l.b16 %v2999
        %v3093 = vunpack.c.h.b16 %v2999
        %v3094 = vunpack.c.l.b16 %v3000
        %v3095 = vunpack.c.h.b16 %v3000
        %v3096 = vunpack.c.l.b16 %v3001
        %v3097 = vunpack.c.h.b16 %v3001
        %v3098 = vunpack.c.l.b16 %v3002
        %v3099 = vunpack.c.h.b16 %v3002
        %v3100 = vunpack.c.l.b16 %v3003
        %v3101 = vunpack.c.h.b16 %v3003
        %v3102 = vunpack.c.l.b16 %v3004
        %v3103 = vunpack.c.h.b16 %v3004
        %v3104 = vunpack.c.l.b16 %v3005
        %v3105 = vunpack.c.h.b16 %v3005
        %v3106 = vunpack.c.l.b16 %v3006
        %v3107 = vunpack.c.h.b16 %v3006
        %v3108 = vunpack.c.l.b16 %v3007
        %v3109 = vunpack.c.h.b16 %v3007
        %v3110 = vunpack.c.l.b16 %v3008
        %v3111 = vunpack.c.h.b16 %v3008
        %v3112 = vunpack.c.l.b16 %v3009
        %v3113 = vunpack.c.h.b16 %v3009
        %v3114 = vunpack.c.l.b16 %v3010
        %v3115 = vunpack.c.h.b16 %v3010
        %v3116 = vunpack.c.l.b16 %v3011
        %v3117 = vunpack.c.h.b16 %v3011
        %v3118 = vunpack.c.l.b16 %v3012
        %v3119 = vunpack.c.h.b16 %v3012
        %v3120 = vunpack.c.l.b16 %v3013
        %v3121 = vunpack.c.h.b16 %v3013
        %v3122 = vunpack.c.l.b16 %v3014
        %v3123 = vunpack.c.h.b16 %v3014
        %v3124 = vunpack.c.l.b16 %v3015
        %v3125 = vunpack.c.h.b16 %v3015
        %v3126 = vunpack.c.l.b16 %v3016
        %v3127 = vunpack.c.h.b16 %v3016
        %v3128 = vunpack.c.l.b16 %v3017
        %v3129 = vunpack.c.h.b16 %v3017
        %v3130 = vunpack.c.l.b16 %v3018
        %v3131 = vunpack.c.h.b16 %v3018
        %v3132 = vunpack.c.l.b16 %v3019
        %v3133 = vunpack.c.h.b16 %v3019
        %v3134 = vunpack.c.l.b16 %v3020
        %v3135 = vunpack.c.h.b16 %v3020
        %v3136 = vunpack.c.l.b16 %v3021
        %v3137 = vunpack.c.h.b16 %v3021
        %v3138 = vunpack.c.l.b16 %v3022
        %v3139 = vunpack.c.h.b16 %v3022
        %v3140 = vunpack.c.l.b16 %v3023
        %v3141 = vunpack.c.h.b16 %v3023
        %v3142 = vunpack.c.l.b16 %v3024
        %v3143 = vunpack.c.h.b16 %v3024
        %v3144 = vunpack.c.l.b16 %v3025
        %v3145 = vunpack.c.h.b16 %v3025
        %v3146 = vunpack.c.l.b16 %v3026
        %v3147 = vunpack.c.h.b16 %v3026
        %v3148 = vunpack.c.l.b16 %v3027
        %v3149 = vunpack.c.h.b16 %v3027
        %v3150 = vunpack.c.l.b16 %v3028
        %v3151 = vunpack.c.h.b16 %v3028
        %v3152 = vunpack.c.l.b16 %v3029
        %v3153 = vunpack.c.h.b16 %v3029
        %v3154 = vunpack.c.l.b16 %v3030
        %v3155 = vunpack.c.h.b16 %v3030
        %v3156 = vpack.c.b16 %v3094, %v3092
        %v3157 = vpack.c.b16 %v3095, %v3093
        %v3158 = vpack.c.b16 %v3098, %v3096
        %v3159 = vpack.c.b16 %v3099, %v3097
        %v3160 = vpack.c.b16 %v3102, %v3100
        %v3161 = vpack.c.b16 %v3103, %v3101
        %v3162 = vpack.c.b16 %v3106, %v3104
        %v3163 = vpack.c.b16 %v3107, %v3105
        %v3164 = vpack.c.b16 %v3110, %v3108
        %v3165 = vpack.c.b16 %v3111, %v3109
        %v3166 = vpack.c.b16 %v3114, %v3112
        %v3167 = vpack.c.b16 %v3115, %v3113
        %v3168 = vpack.c.b16 %v3118, %v3116
        %v3169 = vpack.c.b16 %v3119, %v3117
        %v3170 = vpack.c.b16 %v3122, %v3120
        %v3171 = vpack.c.b16 %v3123, %v3121
        %v3172 = vpack.c.b16 %v3126, %v3124
        %v3173 = vpack.c.b16 %v3127, %v3125
        %v3174 = vpack.c.b16 %v3130, %v3128
        %v3175 = vpack.c.b16 %v3131, %v3129
        %v3176 = vpack.c.b16 %v3134, %v3132
        %v3177 = vpack.c.b16 %v3135, %v3133
        %v3178 = vpack.c.b16 %v3138, %v3136
        %v3179 = vpack.c.b16 %v3139, %v3137
        %v3180 = vpack.c.b16 %v3142, %v3140
        %v3181 = vpack.c.b16 %v3143, %v3141
        %v3182 = vpack.c.b16 %v3146, %v3144
        %v3183 = vpack.c.b16 %v3147, %v3145
        %v3184 = vpack.c.b16 %v3150, %v3148
        %v3185 = vpack.c.b16 %v3151, %v3149
        %v3186 = vpack.c.b16 %v3154, %v3152
        %v3187 = vpack.c.b16 %v3155, %v3153
        %3220 = vmatprep.subr.bf16.mxu0 %v3157
        %3221 = vmatpush1.bf16.msra.mxu0 %v3156
        %3222 = vmatprep.subr.bf16.mxu0 %v3159
        %3223 = vmatpush1.bf16.msra.mxu0 %v3158
        %3224 = vmatprep.subr.bf16.mxu0 %v3161
        %3225 = vmatpush1.bf16.msra.mxu0 %v3160
        %3226 = vmatprep.subr.bf16.mxu0 %v3163
        %3227 = vmatpush1.bf16.msra.mxu0 %v3162
        %3228 = vmatprep.subr.bf16.mxu0 %v3165
        %3229 = vmatpush1.bf16.msra.mxu0 %v3164
        %3230 = vmatprep.subr.bf16.mxu0 %v3167
        %3231 = vmatpush1.bf16.msra.mxu0 %v3166
        %3232 = vmatprep.subr.bf16.mxu0 %v3169
        %3233 = vmatpush1.bf16.msra.mxu0 %v3168
        %3234 = vmatprep.subr.bf16.mxu0 %v3171
        %3235 = vmatpush1.bf16.msra.mxu0 %v3170
        %3236 = vmatprep.subr.bf16.mxu0 %v3173
        %3237 = vmatpush1.bf16.msra.mxu0 %v3172
        %3238 = vmatprep.subr.bf16.mxu0 %v3175
        %3239 = vmatpush1.bf16.msra.mxu0 %v3174
        %3240 = vmatprep.subr.bf16.mxu0 %v3177
        %3241 = vmatpush1.bf16.msra.mxu0 %v3176
        %3242 = vmatprep.subr.bf16.mxu0 %v3179
        %3243 = vmatpush1.bf16.msra.mxu0 %v3178
        %3244 = vmatprep.subr.bf16.mxu0 %v3181
        %3245 = vmatpush1.bf16.msra.mxu0 %v3180
        %3246 = vmatprep.subr.bf16.mxu0 %v3183
        %3247 = vmatpush1.bf16.msra.mxu0 %v3182
        %3248 = vmatprep.subr.bf16.mxu0 %v3185
        %3249 = vmatpush1.bf16.msra.mxu0 %v3184
        %3250 = vmatprep.subr.bf16.mxu0 %v3187
        %3251 = vmatpush1.bf16.msra.mxu0 %v3186
        %3252 = vmatprep.mubr.bf16.mxu0 %v3034
        %3253 = vmatmul.mubr.bf16.gmra.mrb[0].mxu0 %v3033
        %v3254 = vpop.f32.mrb[0].mxu0
        %v3255 = vadd.f32 %v3053, %v3254
        %v3256 = vpop.f32.mrb[0].mxu0
        %v3257 = vadd.f32 %v3057, %v3256
        %v3258 = vpop.f32.mrb[0].mxu0
        %v3259 = vadd.f32 %v3053, %v3258
        %v3260 = vpop.f32.mrb[0].mxu0
        %v3261 = vadd.f32 %v3057, %v3260
        %3262 = vmatprep.mubr.bf16.mxu0 %v3036
        %3263 = vmatmul.mubr.bf16.gmra.mrb[0].mxu0 %v3035
        %v3264 = vpop.f32.mrb[0].mxu0
        %v3265 = vadd.f32 %v3053, %v3264
        %v3266 = vpop.f32.mrb[0].mxu0
        %v3267 = vadd.f32 %v3057, %v3266
        %v3268 = vpop.f32.mrb[0].mxu0
        %v3269 = vadd.f32 %v3053, %v3268
        %v3270 = vpop.f32.mrb[0].mxu0
        %v3271 = vadd.f32 %v3057, %v3270
        %3272 = vmatprep.mubr.bf16.mxu0 %v3038
        %3273 = vmatmul.mubr.bf16.gmra.mrb[0].mxu0 %v3037
        %v3274 = vpop.f32.mrb[0].mxu0
        %v3275 = vadd.f32 %v3053, %v3274
        %v3276 = vpop.f32.mrb[0].mxu0
        %v3277 = vadd.f32 %v3057, %v3276
        %v3278 = vpop.f32.mrb[0].mxu0
        %v3279 = vadd.f32 %v3053, %v3278
        %v3280 = vpop.f32.mrb[0].mxu0
        %v3281 = vadd.f32 %v3057, %v3280
        %3282 = vmatprep.mubr.bf16.mxu0 %v3040
        %3283 = vmatmul.mubr.bf16.gmra.mrb[0].mxu0 %v3039
        %v3284 = vpop.f32.mrb[0].mxu0
        %v3285 = vadd.f32 %v3053, %v3284
        %v3286 = vpop.f32.mrb[0].mxu0
        %v3287 = vadd.f32 %v3057, %v3286
        %v3288 = vpop.f32.mrb[0].mxu0
        %v3289 = vadd.f32 %v3053, %v3288
        %v3290 = vpop.f32.mrb[0].mxu0
        %v3291 = vadd.f32 %v3057, %v3290
        %3292 = vmatprep.mubr.bf16.mxu0 %v3042
        %3293 = vmatmul.mubr.bf16.gmra.mrb[0].mxu0 %v3041
        %v3294 = vpop.f32.mrb[0].mxu0
        %v3295 = vadd.f32 %v3053, %v3294
        %v3296 = vpop.f32.mrb[0].mxu0
        %v3297 = vadd.f32 %v3057, %v3296
        %v3298 = vpop.f32.mrb[0].mxu0
        %v3299 = vadd.f32 %v3053, %v3298
        %v3300 = vpop.f32.mrb[0].mxu0
        %v3301 = vadd.f32 %v3057, %v3300
        %3302 = vmatprep.mubr.bf16.mxu0 %v3044
        %3303 = vmatmul.mubr.bf16.gmra.mrb[0].mxu0 %v3043
        %v3304 = vpop.f32.mrb[0].mxu0
        %v3305 = vadd.f32 %v3053, %v3304
        %v3306 = vpop.f32.mrb[0].mxu0
        %v3307 = vadd.f32 %v3057, %v3306
        %v3308 = vpop.f32.mrb[0].mxu0
        %v3309 = vadd.f32 %v3053, %v3308
        %v3310 = vpop.f32.mrb[0].mxu0
        %v3311 = vadd.f32 %v3057, %v3310
        %3312 = vmatprep.mubr.bf16.mxu0 %v3046
        %3313 = vmatmul.mubr.bf16.gmra.mrb[0].mxu0 %v3045
        %v3314 = vpop.f32.mrb[0].mxu0
        %v3315 = vadd.f32 %v3053, %v3314
        %v3316 = vpop.f32.mrb[0].mxu0
        %v3317 = vadd.f32 %v3057, %v3316
        %v3318 = vpop.f32.mrb[0].mxu0
        %v3319 = vadd.f32 %v3053, %v3318
        %v3320 = vpop.f32.mrb[0].mxu0
        %v3321 = vadd.f32 %v3057, %v3320
        %3322 = vmatprep.mubr.bf16.mxu0 %v3048
        %3323 = vmatmul.mubr.bf16.gmra.mrb[0].mxu0 %v3047
        %v3324 = vpop.f32.mrb[0].mxu0
        %v3325 = vadd.f32 %v3053, %v3324
        %v3326 = vpop.f32.mrb[0].mxu0
        %v3327 = vadd.f32 %v3057, %v3326
        %v3328 = vpop.f32.mrb[0].mxu0
        %v3329 = vadd.f32 %v3053, %v3328
        %v3330 = vpop.f32.mrb[0].mxu0
        %v3331 = vadd.f32 %v3057, %v3330
        %3332 = vdwg.mxu0
        %vm3333 = vcmp.ge.f32.partialorder %v3255, 0.0
        %vm3334 = vcmp.ge.f32.partialorder %v3257, 0.0
        %vm3335 = vcmp.ge.f32.partialorder %v3259, 0.0
        %vm3336 = vcmp.ge.f32.partialorder %v3261, 0.0
        %vm3337 = vcmp.ge.f32.partialorder %v3265, 0.0
        %vm3338 = vcmp.ge.f32.partialorder %v3267, 0.0
        %vm3339 = vcmp.ge.f32.partialorder %v3269, 0.0
        %vm3340 = vcmp.ge.f32.partialorder %v3271, 0.0
        %vm3341 = vcmp.ge.f32.partialorder %v3275, 0.0
        %vm3342 = vcmp.ge.f32.partialorder %v3277, 0.0
        %vm3343 = vcmp.ge.f32.partialorder %v3279, 0.0
        %vm3344 = vcmp.ge.f32.partialorder %v3281, 0.0
        %vm3345 = vcmp.ge.f32.partialorder %v3285, 0.0
        %vm3346 = vcmp.ge.f32.partialorder %v3287, 0.0
        %vm3347 = vcmp.ge.f32.partialorder %v3289, 0.0
        %vm3348 = vcmp.ge.f32.partialorder %v3291, 0.0
        %vm3349 = vcmp.ge.f32.partialorder %v3295, 0.0
        %vm3350 = vcmp.ge.f32.partialorder %v3297, 0.0
        %vm3351 = vcmp.ge.f32.partialorder %v3299, 0.0
        %vm3352 = vcmp.ge.f32.partialorder %v3301, 0.0
        %vm3353 = vcmp.ge.f32.partialorder %v3305, 0.0
        %vm3354 = vcmp.ge.f32.partialorder %v3307, 0.0
        %vm3355 = vcmp.ge.f32.partialorder %v3309, 0.0
        %vm3356 = vcmp.ge.f32.partialorder %v3311, 0.0
        %vm3357 = vcmp.ge.f32.partialorder %v3315, 0.0
        %vm3358 = vcmp.ge.f32.partialorder %v3317, 0.0
        %vm3359 = vcmp.ge.f32.partialorder %v3319, 0.0
        %vm3360 = vcmp.ge.f32.partialorder %v3321, 0.0
        %vm3361 = vcmp.ge.f32.partialorder %v3325, 0.0
        %vm3362 = vcmp.ge.f32.partialorder %v3327, 0.0
        %vm3363 = vcmp.ge.f32.partialorder %v3329, 0.0
        %vm3364 = vcmp.ge.f32.partialorder %v3331, 0.0
        %v3365 = vmul.f32 %v3255, 0.2
        %v3366 = vmul.f32 %v3257, 0.2
        %v3367 = vmul.f32 %v3259, 0.2
        %v3368 = vmul.f32 %v3261, 0.2
        %v3369 = vmul.f32 %v3265, 0.2
        %v3370 = vmul.f32 %v3267, 0.2
        %v3371 = vmul.f32 %v3269, 0.2
        %v3372 = vmul.f32 %v3271, 0.2
        %v3373 = vmul.f32 %v3275, 0.2
        %v3374 = vmul.f32 %v3277, 0.2
        %v3375 = vmul.f32 %v3279, 0.2
        %v3376 = vmul.f32 %v3281, 0.2
        %v3377 = vmul.f32 %v3285, 0.2
        %v3378 = vmul.f32 %v3287, 0.2
        %v3379 = vmul.f32 %v3289, 0.2
        %v3380 = vmul.f32 %v3291, 0.2
        %v3381 = vmul.f32 %v3295, 0.2
        %v3382 = vmul.f32 %v3297, 0.2
        %v3383 = vmul.f32 %v3299, 0.2
        %v3384 = vmul.f32 %v3301, 0.2
        %v3385 = vmul.f32 %v3305, 0.2
        %v3386 = vmul.f32 %v3307, 0.2
        %v3387 = vmul.f32 %v3309, 0.2
        %v3388 = vmul.f32 %v3311, 0.2
        %v3389 = vmul.f32 %v3315, 0.2
        %v3390 = vmul.f32 %v3317, 0.2
        %v3391 = vmul.f32 %v3319, 0.2
        %v3392 = vmul.f32 %v3321, 0.2
        %v3393 = vmul.f32 %v3325, 0.2
        %v3394 = vmul.f32 %v3327, 0.2
        %v3395 = vmul.f32 %v3329, 0.2
        %v3396 = vmul.f32 %v3331, 0.2
        %v3397 = vsel %vm3333, %v3255, %v3365
        %v3398 = vsel %vm3334, %v3257, %v3366
        %v3399 = vsel %vm3335, %v3259, %v3367
        %v3400 = vsel %vm3336, %v3261, %v3368
        %v3401 = vsel %vm3337, %v3265, %v3369
        %v3402 = vsel %vm3338, %v3267, %v3370
        %v3403 = vsel %vm3339, %v3269, %v3371
        %v3404 = vsel %vm3340, %v3271, %v3372
        %v3405 = vsel %vm3341, %v3275, %v3373
        %v3406 = vsel %vm3342, %v3277, %v3374
        %v3407 = vsel %vm3343, %v3279, %v3375
        %v3408 = vsel %vm3344, %v3281, %v3376
        %v3409 = vsel %vm3345, %v3285, %v3377
        %v3410 = vsel %vm3346, %v3287, %v3378
        %v3411 = vsel %vm3347, %v3289, %v3379
        %v3412 = vsel %vm3348, %v3291, %v3380
        %v3413 = vsel %vm3349, %v3295, %v3381
        %v3414 = vsel %vm3350, %v3297, %v3382
        %v3415 = vsel %vm3351, %v3299, %v3383
        %v3416 = vsel %vm3352, %v3301, %v3384
        %v3417 = vsel %vm3353, %v3305, %v3385
        %v3418 = vsel %vm3354, %v3307, %v3386
        %v3419 = vsel %vm3355, %v3309, %v3387
        %v3420 = vsel %vm3356, %v3311, %v3388
        %v3421 = vsel %vm3357, %v3315, %v3389
        %v3422 = vsel %vm3358, %v3317, %v3390
        %v3423 = vsel %vm3359, %v3319, %v3391
        %v3424 = vsel %vm3360, %v3321, %v3392
        %v3425 = vsel %vm3361, %v3325, %v3393
        %v3426 = vsel %vm3362, %v3327, %v3394
        %v3427 = vsel %vm3363, %v3329, %v3395
        %v3428 = vsel %vm3364, %v3331, %v3396
        %s3429 = scalar_lea.vmem [#allocation5], 1792
        %v3430 = vld [vmem:[%s3429] sm:$0xff]
        %v3431 = vld [vmem:[%s3429 + $0x8] sm:$0xff]
        %v3432 = vld [vmem:[%s3429 + $0x10] sm:$0xff]
        %v3433 = vld [vmem:[%s3429 + $0x18] sm:$0xff]
        %v3434 = vld [vmem:[%s3429 + $0x20] sm:$0xff]
        %v3435 = vld [vmem:[%s3429 + $0x28] sm:$0xff]
        %v3436 = vld [vmem:[%s3429 + $0x30] sm:$0xff]
        %v3437 = vld [vmem:[%s3429 + $0x38] sm:$0xff]
        %v3438 = vld [vmem:[%s3429 + $0x40] sm:$0xff]
        %v3439 = vld [vmem:[%s3429 + $0x48] sm:$0xff]
        %v3440 = vld [vmem:[%s3429 + $0x50] sm:$0xff]
        %v3441 = vld [vmem:[%s3429 + $0x58] sm:$0xff]
        %v3442 = vld [vmem:[%s3429 + $0x60] sm:$0xff]
        %v3443 = vld [vmem:[%s3429 + $0x68] sm:$0xff]
        %v3444 = vld [vmem:[%s3429 + $0x70] sm:$0xff]
        %v3445 = vld [vmem:[%s3429 + $0x78] sm:$0xff]
        %v3446 = vld [vmem:[%s3429 + $0x80] sm:$0xff]
        %v3447 = vld [vmem:[%s3429 + $0x88] sm:$0xff]
        %v3448 = vld [vmem:[%s3429 + $0x90] sm:$0xff]
        %v3449 = vld [vmem:[%s3429 + $0x98] sm:$0xff]
        %v3450 = vld [vmem:[%s3429 + $0xa0] sm:$0xff]
        %v3451 = vld [vmem:[%s3429 + $0xa8] sm:$0xff]
        %v3452 = vld [vmem:[%s3429 + $0xb0] sm:$0xff]
        %v3453 = vld [vmem:[%s3429 + $0xb8] sm:$0xff]
        %v3454 = vld [vmem:[%s3429 + $0xc0] sm:$0xff]
        %v3455 = vld [vmem:[%s3429 + $0xc8] sm:$0xff]
        %v3456 = vld [vmem:[%s3429 + $0xd0] sm:$0xff]
        %v3457 = vld [vmem:[%s3429 + $0xd8] sm:$0xff]
        %v3458 = vld [vmem:[%s3429 + $0xe0] sm:$0xff]
        %v3459 = vld [vmem:[%s3429 + $0xe8] sm:$0xff]
        %v3460 = vld [vmem:[%s3429 + $0xf0] sm:$0xff]
        %v3461 = vld [vmem:[%s3429 + $0xf8] sm:$0xff]
        %s3462 = scalar_lea.vmem [#allocation7], 14
        %v3463 = vld [vmem:[%s3462] sm:$0x3]
        %v3464 = vpack.c.bf16 %v3399, %v3397
        %v3465 = vpack.c.bf16 %v3400, %v3398
        %v3466 = vpack.c.bf16 %v3403, %v3401
        %v3467 = vpack.c.bf16 %v3404, %v3402
        %v3468 = vpack.c.bf16 %v3407, %v3405
        %v3469 = vpack.c.bf16 %v3408, %v3406
        %v3470 = vpack.c.bf16 %v3411, %v3409
        %v3471 = vpack.c.bf16 %v3412, %v3410
        %v3472 = vpack.c.bf16 %v3415, %v3413
        %v3473 = vpack.c.bf16 %v3416, %v3414
        %v3474 = vpack.c.bf16 %v3419, %v3417
        %v3475 = vpack.c.bf16 %v3420, %v3418
        %v3476 = vpack.c.bf16 %v3423, %v3421
        %v3477 = vpack.c.bf16 %v3424, %v3422
        %v3478 = vpack.c.bf16 %v3427, %v3425
        %v3479 = vpack.c.bf16 %v3428, %v3426
        %v3481 = vlaneseq
        %v3482 = vshrl.u32 %v3481, 7
        %v3483 = vsub.s32 0, %v3482
        %v3484 = vrot.slane %v3463, %v3483
        %v3485 = vlaneseq
        %v3486 = vshrl.u32 %v3485, 7
        %v3487 = vsub.s32 1, %v3486
        %v3488 = vrot.slane %v3463, %v3487
        %v3523 = vunpack.c.l.b16 %v3430
        %v3524 = vunpack.c.h.b16 %v3430
        %v3525 = vunpack.c.l.b16 %v3431
        %v3526 = vunpack.c.h.b16 %v3431
        %v3527 = vunpack.c.l.b16 %v3432
        %v3528 = vunpack.c.h.b16 %v3432
        %v3529 = vunpack.c.l.b16 %v3433
        %v3530 = vunpack.c.h.b16 %v3433
        %v3531 = vunpack.c.l.b16 %v3434
        %v3532 = vunpack.c.h.b16 %v3434
        %v3533 = vunpack.c.l.b16 %v3435
        %v3534 = vunpack.c.h.b16 %v3435
        %v3535 = vunpack.c.l.b16 %v3436
        %v3536 = vunpack.c.h.b16 %v3436
        %v3537 = vunpack.c.l.b16 %v3437
        %v3538 = vunpack.c.h.b16 %v3437
        %v3539 = vunpack.c.l.b16 %v3438
        %v3540 = vunpack.c.h.b16 %v3438
        %v3541 = vunpack.c.l.b16 %v3439
        %v3542 = vunpack.c.h.b16 %v3439
        %v3543 = vunpack.c.l.b16 %v3440
        %v3544 = vunpack.c.h.b16 %v3440
        %v3545 = vunpack.c.l.b16 %v3441
        %v3546 = vunpack.c.h.b16 %v3441
        %v3547 = vunpack.c.l.b16 %v3442
        %v3548 = vunpack.c.h.b16 %v3442
        %v3549 = vunpack.c.l.b16 %v3443
        %v3550 = vunpack.c.h.b16 %v3443
        %v3551 = vunpack.c.l.b16 %v3444
        %v3552 = vunpack.c.h.b16 %v3444
        %v3553 = vunpack.c.l.b16 %v3445
        %v3554 = vunpack.c.h.b16 %v3445
        %v3555 = vunpack.c.l.b16 %v3446
        %v3556 = vunpack.c.h.b16 %v3446
        %v3557 = vunpack.c.l.b16 %v3447
        %v3558 = vunpack.c.h.b16 %v3447
        %v3559 = vunpack.c.l.b16 %v3448
        %v3560 = vunpack.c.h.b16 %v3448
        %v3561 = vunpack.c.l.b16 %v3449
        %v3562 = vunpack.c.h.b16 %v3449
        %v3563 = vunpack.c.l.b16 %v3450
        %v3564 = vunpack.c.h.b16 %v3450
        %v3565 = vunpack.c.l.b16 %v3451
        %v3566 = vunpack.c.h.b16 %v3451
        %v3567 = vunpack.c.l.b16 %v3452
        %v3568 = vunpack.c.h.b16 %v3452
        %v3569 = vunpack.c.l.b16 %v3453
        %v3570 = vunpack.c.h.b16 %v3453
        %v3571 = vunpack.c.l.b16 %v3454
        %v3572 = vunpack.c.h.b16 %v3454
        %v3573 = vunpack.c.l.b16 %v3455
        %v3574 = vunpack.c.h.b16 %v3455
        %v3575 = vunpack.c.l.b16 %v3456
        %v3576 = vunpack.c.h.b16 %v3456
        %v3577 = vunpack.c.l.b16 %v3457
        %v3578 = vunpack.c.h.b16 %v3457
        %v3579 = vunpack.c.l.b16 %v3458
        %v3580 = vunpack.c.h.b16 %v3458
        %v3581 = vunpack.c.l.b16 %v3459
        %v3582 = vunpack.c.h.b16 %v3459
        %v3583 = vunpack.c.l.b16 %v3460
        %v3584 = vunpack.c.h.b16 %v3460
        %v3585 = vunpack.c.l.b16 %v3461
        %v3586 = vunpack.c.h.b16 %v3461
        %v3587 = vpack.c.b16 %v3525, %v3523
        %v3588 = vpack.c.b16 %v3526, %v3524
        %v3589 = vpack.c.b16 %v3529, %v3527
        %v3590 = vpack.c.b16 %v3530, %v3528
        %v3591 = vpack.c.b16 %v3533, %v3531
        %v3592 = vpack.c.b16 %v3534, %v3532
        %v3593 = vpack.c.b16 %v3537, %v3535
        %v3594 = vpack.c.b16 %v3538, %v3536
        %v3595 = vpack.c.b16 %v3541, %v3539
        %v3596 = vpack.c.b16 %v3542, %v3540
        %v3597 = vpack.c.b16 %v3545, %v3543
        %v3598 = vpack.c.b16 %v3546, %v3544
        %v3599 = vpack.c.b16 %v3549, %v3547
        %v3600 = vpack.c.b16 %v3550, %v3548
        %v3601 = vpack.c.b16 %v3553, %v3551
        %v3602 = vpack.c.b16 %v3554, %v3552
        %v3603 = vpack.c.b16 %v3557, %v3555
        %v3604 = vpack.c.b16 %v3558, %v3556
        %v3605 = vpack.c.b16 %v3561, %v3559
        %v3606 = vpack.c.b16 %v3562, %v3560
        %v3607 = vpack.c.b16 %v3565, %v3563
        %v3608 = vpack.c.b16 %v3566, %v3564
        %v3609 = vpack.c.b16 %v3569, %v3567
        %v3610 = vpack.c.b16 %v3570, %v3568
        %v3611 = vpack.c.b16 %v3573, %v3571
        %v3612 = vpack.c.b16 %v3574, %v3572
        %v3613 = vpack.c.b16 %v3577, %v3575
        %v3614 = vpack.c.b16 %v3578, %v3576
        %v3615 = vpack.c.b16 %v3581, %v3579
        %v3616 = vpack.c.b16 %v3582, %v3580
        %v3617 = vpack.c.b16 %v3585, %v3583
        %v3618 = vpack.c.b16 %v3586, %v3584
        %3651 = vmatprep.subr.bf16.mxu0 %v3588
        %3652 = vmatpush1.bf16.msra.mxu0 %v3587
        %3653 = vmatprep.subr.bf16.mxu0 %v3590
        %3654 = vmatpush1.bf16.msra.mxu0 %v3589
        %3655 = vmatprep.subr.bf16.mxu0 %v3592
        %3656 = vmatpush1.bf16.msra.mxu0 %v3591
        %3657 = vmatprep.subr.bf16.mxu0 %v3594
        %3658 = vmatpush1.bf16.msra.mxu0 %v3593
        %3659 = vmatprep.subr.bf16.mxu0 %v3596
        %3660 = vmatpush1.bf16.msra.mxu0 %v3595
        %3661 = vmatprep.subr.bf16.mxu0 %v3598
        %3662 = vmatpush1.bf16.msra.mxu0 %v3597
        %3663 = vmatprep.subr.bf16.mxu0 %v3600
        %3664 = vmatpush1.bf16.msra.mxu0 %v3599
        %3665 = vmatprep.subr.bf16.mxu0 %v3602
        %3666 = vmatpush1.bf16.msra.mxu0 %v3601
        %3667 = vmatprep.subr.bf16.mxu0 %v3604
        %3668 = vmatpush1.bf16.msra.mxu0 %v3603
        %3669 = vmatprep.subr.bf16.mxu0 %v3606
        %3670 = vmatpush1.bf16.msra.mxu0 %v3605
        %3671 = vmatprep.subr.bf16.mxu0 %v3608
        %3672 = vmatpush1.bf16.msra.mxu0 %v3607
        %3673 = vmatprep.subr.bf16.mxu0 %v3610
        %3674 = vmatpush1.bf16.msra.mxu0 %v3609
        %3675 = vmatprep.subr.bf16.mxu0 %v3612
        %3676 = vmatpush1.bf16.msra.mxu0 %v3611
        %3677 = vmatprep.subr.bf16.mxu0 %v3614
        %3678 = vmatpush1.bf16.msra.mxu0 %v3613
        %3679 = vmatprep.subr.bf16.mxu0 %v3616
        %3680 = vmatpush1.bf16.msra.mxu0 %v3615
        %3681 = vmatprep.subr.bf16.mxu0 %v3618
        %3682 = vmatpush1.bf16.msra.mxu0 %v3617
        %3683 = vmatprep.mubr.bf16.mxu0 %v3465
        %3684 = vmatmul.mubr.bf16.gmra.mrb[0].mxu0 %v3464
        %v3685 = vpop.f32.mrb[0].mxu0
        %v3686 = vadd.f32 %v3484, %v3685
        %v3687 = vpop.f32.mrb[0].mxu0
        %v3688 = vadd.f32 %v3488, %v3687
        %v3689 = vpop.f32.mrb[0].mxu0
        %v3690 = vadd.f32 %v3484, %v3689
        %v3691 = vpop.f32.mrb[0].mxu0
        %v3692 = vadd.f32 %v3488, %v3691
        %3693 = vmatprep.mubr.bf16.mxu0 %v3467
        %3694 = vmatmul.mubr.bf16.gmra.mrb[0].mxu0 %v3466
        %v3695 = vpop.f32.mrb[0].mxu0
        %v3696 = vadd.f32 %v3484, %v3695
        %v3697 = vpop.f32.mrb[0].mxu0
        %v3698 = vadd.f32 %v3488, %v3697
        %v3699 = vpop.f32.mrb[0].mxu0
        %v3700 = vadd.f32 %v3484, %v3699
        %v3701 = vpop.f32.mrb[0].mxu0
        %v3702 = vadd.f32 %v3488, %v3701
        %3703 = vmatprep.mubr.bf16.mxu0 %v3469
        %3704 = vmatmul.mubr.bf16.gmra.mrb[0].mxu0 %v3468
        %v3705 = vpop.f32.mrb[0].mxu0
        %v3706 = vadd.f32 %v3484, %v3705
        %v3707 = vpop.f32.mrb[0].mxu0
        %v3708 = vadd.f32 %v3488, %v3707
        %v3709 = vpop.f32.mrb[0].mxu0
        %v3710 = vadd.f32 %v3484, %v3709
        %v3711 = vpop.f32.mrb[0].mxu0
        %v3712 = vadd.f32 %v3488, %v3711
        %3713 = vmatprep.mubr.bf16.mxu0 %v3471
        %3714 = vmatmul.mubr.bf16.gmra.mrb[0].mxu0 %v3470
        %v3715 = vpop.f32.mrb[0].mxu0
        %v3716 = vadd.f32 %v3484, %v3715
        %v3717 = vpop.f32.mrb[0].mxu0
        %v3718 = vadd.f32 %v3488, %v3717
        %v3719 = vpop.f32.mrb[0].mxu0
        %v3720 = vadd.f32 %v3484, %v3719
        %v3721 = vpop.f32.mrb[0].mxu0
        %v3722 = vadd.f32 %v3488, %v3721
        %3723 = vmatprep.mubr.bf16.mxu0 %v3473
        %3724 = vmatmul.mubr.bf16.gmra.mrb[0].mxu0 %v3472
        %v3725 = vpop.f32.mrb[0].mxu0
        %v3726 = vadd.f32 %v3484, %v3725
        %v3727 = vpop.f32.mrb[0].mxu0
        %v3728 = vadd.f32 %v3488, %v3727
        %v3729 = vpop.f32.mrb[0].mxu0
        %v3730 = vadd.f32 %v3484, %v3729
        %v3731 = vpop.f32.mrb[0].mxu0
        %v3732 = vadd.f32 %v3488, %v3731
        %3733 = vmatprep.mubr.bf16.mxu0 %v3475
        %3734 = vmatmul.mubr.bf16.gmra.mrb[0].mxu0 %v3474
        %v3735 = vpop.f32.mrb[0].mxu0
        %v3736 = vadd.f32 %v3484, %v3735
        %v3737 = vpop.f32.mrb[0].mxu0
        %v3738 = vadd.f32 %v3488, %v3737
        %v3739 = vpop.f32.mrb[0].mxu0
        %v3740 = vadd.f32 %v3484, %v3739
        %v3741 = vpop.f32.mrb[0].mxu0
        %v3742 = vadd.f32 %v3488, %v3741
        %3743 = vmatprep.mubr.bf16.mxu0 %v3477
        %3744 = vmatmul.mubr.bf16.gmra.mrb[0].mxu0 %v3476
        %v3745 = vpop.f32.mrb[0].mxu0
        %v3746 = vadd.f32 %v3484, %v3745
        %v3747 = vpop.f32.mrb[0].mxu0
        %v3748 = vadd.f32 %v3488, %v3747
        %v3749 = vpop.f32.mrb[0].mxu0
        %v3750 = vadd.f32 %v3484, %v3749
        %v3751 = vpop.f32.mrb[0].mxu0
        %v3752 = vadd.f32 %v3488, %v3751
        %3753 = vmatprep.mubr.bf16.mxu0 %v3479
        %3754 = vmatmul.mubr.bf16.gmra.mrb[0].mxu0 %v3478
        %v3755 = vpop.f32.mrb[0].mxu0
        %v3756 = vadd.f32 %v3484, %v3755
        %v3757 = vpop.f32.mrb[0].mxu0
        %v3758 = vadd.f32 %v3488, %v3757
        %v3759 = vpop.f32.mrb[0].mxu0
        %v3760 = vadd.f32 %v3484, %v3759
        %v3761 = vpop.f32.mrb[0].mxu0
        %v3762 = vadd.f32 %v3488, %v3761
        %3763 = vdwg.mxu0
        %vm3764 = vcmp.ge.f32.partialorder %v3686, 0.0
        %vm3765 = vcmp.ge.f32.partialorder %v3688, 0.0
        %vm3766 = vcmp.ge.f32.partialorder %v3690, 0.0
        %vm3767 = vcmp.ge.f32.partialorder %v3692, 0.0
        %vm3768 = vcmp.ge.f32.partialorder %v3696, 0.0
        %vm3769 = vcmp.ge.f32.partialorder %v3698, 0.0
        %vm3770 = vcmp.ge.f32.partialorder %v3700, 0.0
        %vm3771 = vcmp.ge.f32.partialorder %v3702, 0.0
        %vm3772 = vcmp.ge.f32.partialorder %v3706, 0.0
        %vm3773 = vcmp.ge.f32.partialorder %v3708, 0.0
        %vm3774 = vcmp.ge.f32.partialorder %v3710, 0.0
        %vm3775 = vcmp.ge.f32.partialorder %v3712, 0.0
        %vm3776 = vcmp.ge.f32.partialorder %v3716, 0.0
        %vm3777 = vcmp.ge.f32.partialorder %v3718, 0.0
        %vm3778 = vcmp.ge.f32.partialorder %v3720, 0.0
        %vm3779 = vcmp.ge.f32.partialorder %v3722, 0.0
        %vm3780 = vcmp.ge.f32.partialorder %v3726, 0.0
        %vm3781 = vcmp.ge.f32.partialorder %v3728, 0.0
        %vm3782 = vcmp.ge.f32.partialorder %v3730, 0.0
        %vm3783 = vcmp.ge.f32.partialorder %v3732, 0.0
        %vm3784 = vcmp.ge.f32.partialorder %v3736, 0.0
        %vm3785 = vcmp.ge.f32.partialorder %v3738, 0.0
        %vm3786 = vcmp.ge.f32.partialorder %v3740, 0.0
        %vm3787 = vcmp.ge.f32.partialorder %v3742, 0.0
        %vm3788 = vcmp.ge.f32.partialorder %v3746, 0.0
        %vm3789 = vcmp.ge.f32.partialorder %v3748, 0.0
        %vm3790 = vcmp.ge.f32.partialorder %v3750, 0.0
        %vm3791 = vcmp.ge.f32.partialorder %v3752, 0.0
        %vm3792 = vcmp.ge.f32.partialorder %v3756, 0.0
        %vm3793 = vcmp.ge.f32.partialorder %v3758, 0.0
        %vm3794 = vcmp.ge.f32.partialorder %v3760, 0.0
        %vm3795 = vcmp.ge.f32.partialorder %v3762, 0.0
        %v3796 = vmul.f32 %v3686, 0.2
        %v3797 = vmul.f32 %v3688, 0.2
        %v3798 = vmul.f32 %v3690, 0.2
        %v3799 = vmul.f32 %v3692, 0.2
        %v3800 = vmul.f32 %v3696, 0.2
        %v3801 = vmul.f32 %v3698, 0.2
        %v3802 = vmul.f32 %v3700, 0.2
        %v3803 = vmul.f32 %v3702, 0.2
        %v3804 = vmul.f32 %v3706, 0.2
        %v3805 = vmul.f32 %v3708, 0.2
        %v3806 = vmul.f32 %v3710, 0.2
        %v3807 = vmul.f32 %v3712, 0.2
        %v3808 = vmul.f32 %v3716, 0.2
        %v3809 = vmul.f32 %v3718, 0.2
        %v3810 = vmul.f32 %v3720, 0.2
        %v3811 = vmul.f32 %v3722, 0.2
        %v3812 = vmul.f32 %v3726, 0.2
        %v3813 = vmul.f32 %v3728, 0.2
        %v3814 = vmul.f32 %v3730, 0.2
        %v3815 = vmul.f32 %v3732, 0.2
        %v3816 = vmul.f32 %v3736, 0.2
        %v3817 = vmul.f32 %v3738, 0.2
        %v3818 = vmul.f32 %v3740, 0.2
        %v3819 = vmul.f32 %v3742, 0.2
        %v3820 = vmul.f32 %v3746, 0.2
        %v3821 = vmul.f32 %v3748, 0.2
        %v3822 = vmul.f32 %v3750, 0.2
        %v3823 = vmul.f32 %v3752, 0.2
        %v3824 = vmul.f32 %v3756, 0.2
        %v3825 = vmul.f32 %v3758, 0.2
        %v3826 = vmul.f32 %v3760, 0.2
        %v3827 = vmul.f32 %v3762, 0.2
        %v3828 = vsel %vm3764, %v3686, %v3796
        %v3829 = vsel %vm3765, %v3688, %v3797
        %v3830 = vsel %vm3766, %v3690, %v3798
        %v3831 = vsel %vm3767, %v3692, %v3799
        %v3832 = vsel %vm3768, %v3696, %v3800
        %v3833 = vsel %vm3769, %v3698, %v3801
        %v3834 = vsel %vm3770, %v3700, %v3802
        %v3835 = vsel %vm3771, %v3702, %v3803
        %v3836 = vsel %vm3772, %v3706, %v3804
        %v3837 = vsel %vm3773, %v3708, %v3805
        %v3838 = vsel %vm3774, %v3710, %v3806
        %v3839 = vsel %vm3775, %v3712, %v3807
        %v3840 = vsel %vm3776, %v3716, %v3808
        %v3841 = vsel %vm3777, %v3718, %v3809
        %v3842 = vsel %vm3778, %v3720, %v3810
        %v3843 = vsel %vm3779, %v3722, %v3811
        %v3844 = vsel %vm3780, %v3726, %v3812
        %v3845 = vsel %vm3781, %v3728, %v3813
        %v3846 = vsel %vm3782, %v3730, %v3814
        %v3847 = vsel %vm3783, %v3732, %v3815
        %v3848 = vsel %vm3784, %v3736, %v3816
        %v3849 = vsel %vm3785, %v3738, %v3817
        %v3850 = vsel %vm3786, %v3740, %v3818
        %v3851 = vsel %vm3787, %v3742, %v3819
        %v3852 = vsel %vm3788, %v3746, %v3820
        %v3853 = vsel %vm3789, %v3748, %v3821
        %v3854 = vsel %vm3790, %v3750, %v3822
        %v3855 = vsel %vm3791, %v3752, %v3823
        %v3856 = vsel %vm3792, %v3756, %v3824
        %v3857 = vsel %vm3793, %v3758, %v3825
        %v3858 = vsel %vm3794, %v3760, %v3826
        %v3859 = vsel %vm3795, %v3762, %v3827
        %3860 = vst [vmem:[%s218] sm:$0xff] %v3828
        %3861 = vst [vmem:[%s218 + $0x8] sm:$0xff] %v3829
        %3862 = vst [vmem:[%s218 + $0x10] sm:$0xff] %v3830
        %3863 = vst [vmem:[%s218 + $0x18] sm:$0xff] %v3831
        %3864 = vst [vmem:[%s218 + $0x20] sm:$0xff] %v3832
        %3865 = vst [vmem:[%s218 + $0x28] sm:$0xff] %v3833
        %3866 = vst [vmem:[%s218 + $0x30] sm:$0xff] %v3834
        %3867 = vst [vmem:[%s218 + $0x38] sm:$0xff] %v3835
        %3868 = vst [vmem:[%s218 + $0x40] sm:$0xff] %v3836
        %3869 = vst [vmem:[%s218 + $0x48] sm:$0xff] %v3837
        %3870 = vst [vmem:[%s218 + $0x50] sm:$0xff] %v3838
        %3871 = vst [vmem:[%s218 + $0x58] sm:$0xff] %v3839
        %3872 = vst [vmem:[%s218 + $0x60] sm:$0xff] %v3840
        %3873 = vst [vmem:[%s218 + $0x68] sm:$0xff] %v3841
        %3874 = vst [vmem:[%s218 + $0x70] sm:$0xff] %v3842
        %3875 = vst [vmem:[%s218 + $0x78] sm:$0xff] %v3843
        %3876 = vst [vmem:[%s218 + $0x80] sm:$0xff] %v3844
        %3877 = vst [vmem:[%s218 + $0x88] sm:$0xff] %v3845
        %3878 = vst [vmem:[%s218 + $0x90] sm:$0xff] %v3846
        %3879 = vst [vmem:[%s218 + $0x98] sm:$0xff] %v3847
        %3880 = vst [vmem:[%s218 + $0xa0] sm:$0xff] %v3848
        %3881 = vst [vmem:[%s218 + $0xa8] sm:$0xff] %v3849
        %3882 = vst [vmem:[%s218 + $0xb0] sm:$0xff] %v3850
        %3883 = vst [vmem:[%s218 + $0xb8] sm:$0xff] %v3851
        %3884 = vst [vmem:[%s218 + $0xc0] sm:$0xff] %v3852
        %3885 = vst [vmem:[%s218 + $0xc8] sm:$0xff] %v3853
        %3886 = vst [vmem:[%s218 + $0xd0] sm:$0xff] %v3854
        %3887 = vst [vmem:[%s218 + $0xd8] sm:$0xff] %v3855
        %3888 = vst [vmem:[%s218 + $0xe0] sm:$0xff] %v3856
        %3889 = vst [vmem:[%s218 + $0xe8] sm:$0xff] %v3857
        %3890 = vst [vmem:[%s218 + $0xf0] sm:$0xff] %v3858
        %3891 = vst [vmem:[%s218 + $0xf8] sm:$0xff] %v3859
        %s3892 = sand.u32 %s97, 1
        %s3893 = scalar_lea.sflag [#allocation4], %s3892
        %s3894 = sand.u32 %s97, 1
        %s3895 = smul.addr %s3894, 256
        %s3896 = scalar_lea.vmem [#allocation8], %s3895
        // Predicated region
        $region45: #{tpu_custom_call.1} parent=31 // pred_check
          %p3897 = pneg %p107
        $region46: #{tpu_custom_call.1} parent=31 // pred_check_branch
          %3899 = sbr.rel (%p3897) target = $region48
        $region47: #{tpu_custom_call.1} parent=31 // pred_region
          %s3900 = smul.u32 16, %s21
          %s3902 = ssub.s32 4096, 4096
          %3903 = vsyncadd %s3893, %s3902
          %s3904 = smul.addr %s3900, 2
          %s3905 = smul.addr %s3904, 128
          %s3906 = scalar_lea.hbm %s3, %s3905
          %s3907 = sshll.u32 %s3896, 4
          %s3908 = int_to_ptr.vmem [resolvable:$true] %s3907
          %3913 = dma.vmem_to_hbm [thread:$0]  %s3908, 4096, %s3906, %s3893, 256, 256, 16
        $region48: #{tpu_custom_call.1} parent=31 // pred_fallthru
          _
      $region32: #{tpu_custom_call.1} parent=5 // pred_fallthru
        _
      %p3914 = scmp.le.s32.totalorder 2, %s16
      // Predicated region
      $region49: #{tpu_custom_call.1} parent=5 // pred_check
        %p3915 = pneg %p3914
      $region50: #{tpu_custom_call.1} parent=5 // pred_check_branch
        %3917 = sbr.rel (%p3915) target = $region52
      $region51: #{tpu_custom_call.1} parent=5 // pred_region
        %s3918 = ssub.s32 %s16, 2
        // Predicated region
        $region53: #{tpu_custom_call.1} parent=51 // pred_check
          %p3919 = pneg %p113
        $region54: #{tpu_custom_call.1} parent=51 // pred_check_branch
          %3921 = sbr.rel (%p3919) target = $region56
        $region55: #{tpu_custom_call.1} parent=51 // pred_region
          %s3922 = sand.u32 %s98, 1
          %s3923 = scalar_lea.sflag [#allocation4], %s3922
          %s3924 = sand.u32 %s98, 1
          %s3925 = smul.addr %s3924, 256
          %s3926 = scalar_lea.vmem [#allocation8], %s3925
          %3927 = dma.done %s3923, 4096
        $region56: #{tpu_custom_call.1} parent=51 // pred_fallthru
          _
      $region52: #{tpu_custom_call.1} parent=5 // pred_fallthru
        _
    $region6: #{tpu_custom_call.1} parent=1 // loop_footer
      %s20 = sadd.s32 1, %s16
    $region7: #{tpu_custom_call.1} parent=1 // loop_footer_branch
      %15 = sbr.rel target = $region3
    $region8: #{tpu_custom_call.1} parent=1 // loop_exit
      _
    %3928 = vsyncpa [#allocation3], 1
    %s3929 = scalar_lea.sflag [#allocation3], 1
    %3930 = vsyncpa %s3929, 1
    %3931 = vsyncpa [#allocation6], 1
    %3932 = vsyncpa [#allocation4], 1
    %s3933 = scalar_lea.sflag [#allocation4], 1
    %3934 = vsyncpa %s3933, 1

</llo_original>
